<compile_context>
chip_gen: v6e
topology: v6e:2x2x1
jax: 0.10.0
libtpu: 0.0.40
codegen_flags: <defaults>
</compile_context>

<pallas_src>
import jax
import jax.numpy as jnp
from jax.experimental import pallas as pl
from jax.experimental.pallas import tpu as pltpu

# Layer dims from the PyTorch module.
DIMS = [10, 30, 10, 20, 7, 15, 10]
NUM_LAYERS = len(DIMS) - 1

P = 32           # internal feature padding (multiple of 8 sublanes, fits 30)
P_IO = 16        # input/output feature padding (10 features + bias row)
ONE_IN = P_IO - 1    # row 15 of the input tile is constant 1.0 (bias column)
ONE_HID = P - 1      # row 31 of every hidden activation is constant 1.0
LANE = 128           # batch tiles are multiples of the 128-lane width


def mlp_kernel(xT_ref, w_ref, o_ref):
    """Fused 6x (Linear + ReLU) on one batch tile, batch on the LANE axis.

    xT_ref: [P_IO, tile]  input, feature-major; rows 0..9 data, row 15 = 1.0
    w_ref : [6, P, P]     packed weights with biases folded into the column
                          that multiplies the constant-1 activation row
    o_ref : [P_IO, tile]  padded output (rows >= 10 are zero, stripped later)
    """
    hp = jax.lax.Precision.HIGHEST
    # Layer 0 reads only the 16 input rows: [P, P_IO] @ [P_IO, tile].
    h = jnp.maximum(
        jnp.dot(w_ref[0][:, :P_IO], xT_ref[...],
                precision=hp, preferred_element_type=jnp.float32), 0.0)
    # Layers 1..5 on the 32-row internal padding (static unroll).
    for l in range(1, NUM_LAYERS):
        h = jnp.maximum(
            jnp.dot(w_ref[l], h,
                    precision=hp, preferred_element_type=jnp.float32), 0.0)
    # Lane-dense store of the 16 I/O rows only (halves output HBM traffic).
    o_ref[...] = h[:P_IO, :]


def pack_params(params):
    """Pack + zero-pad all layers into ONE (6, P, P) weight stack, folding the
    biases into the column that multiplies the constant-1 activation row.
    Call ONCE at init; the result is reused by every forward call."""
    w_all = jnp.zeros((NUM_LAYERS, P, P), jnp.float32)
    for l, (w, b) in enumerate(params):
        d_out, d_in = w.shape
        one_in = ONE_IN if l == 0 else ONE_HID      # where the 1.0 row lives
        w_all = w_all.at[l, :d_out, :d_in].set(jnp.asarray(w, jnp.float32))
        w_all = w_all.at[l, :d_out, one_in].set(jnp.asarray(b, jnp.float32))
        w_all = w_all.at[l, ONE_HID, one_in].set(1.0)   # keep the 1.0 row alive
    return w_all


def _round_up(x, m):
    return ((x + m - 1) // m) * m


def _num_tensorcores():
    """Best-effort chip query: 1 TC for the 'e'/lite line (v5e/v6e), else 2.
    Only affects performance (grid shape), never correctness."""
    try:
        kind = jax.devices()[0].device_kind.lower()
    except Exception:
        return 1
    single_tc = ("v5e", "v5 lite", "v5lite", "v6e", "v6 lite", "v6lite")
    return 1 if any(t in kind for t in single_tc) else 2


def _choose_tiling(batch, batch_tile, num_cores):
    """Lane-aligned batch padding + tile size.

    Single-TC chips: as few grid steps as possible (grid is a serial loop, each
    step costs ~0.35 us).  Dual-TC chips: force an EVEN grid so the "parallel"
    axis splits evenly across both TensorCores (e.g. B=300 -> 2 x 256 lanes)."""
    bp = _round_up(batch, LANE)
    cap = max(LANE, (batch_tile // LANE) * LANE)
    grid = max(1, -(-bp // cap))
    if num_cores > 1 and bp > LANE:
        grid = max(2, grid + (grid % 2))
    tile = max(LANE, _round_up(-(-bp // grid), LANE))
    return grid * tile, tile


def dummy_model_forward(x, w_all, *, batch_tile=4096):
    """x: [B, 10] float32. w_all: packed (6, P, P) weights from pack_params().
    Returns [B, 10] float32."""
    B, d_in = x.shape
    assert d_in == DIMS[0]
    d_out = DIMS[-1]

    bp, tile = _choose_tiling(B, batch_tile, _num_tensorcores())
    grid = bp // tile

    # Batch-on-lanes layout: [P_IO, bp]; padded batch lanes stay all-zero
    # (their bias row is 0), so no garbage ever leaves the padding.
    xT = jnp.zeros((P_IO, bp), jnp.float32)
    xT = xT.at[:d_in, :B].set(x.T.astype(jnp.float32))
    xT = xT.at[ONE_IN, :B].set(1.0)

    out_pad = pl.pallas_call(
        mlp_kernel,
        out_shape=jax.ShapeDtypeStruct((P_IO, bp), jnp.float32),
        grid_spec=pltpu.PrefetchScalarGridSpec(
            num_scalar_prefetch=0,
            grid=(grid,),
            in_specs=[
                # Activations: lane-dense batch tiles.
                pl.BlockSpec((P_IO, tile), lambda i: (0, i)),
                # Packed weights: constant block index -> fetched once,
                # resident in VMEM for every grid step (24 KiB).
                pl.BlockSpec((NUM_LAYERS, P, P), lambda i: (0, 0, 0)),
            ],
            out_specs=pl.BlockSpec((P_IO, tile), lambda i: (0, i)),
        ),
        compiler_params=pltpu.CompilerParams(
            dimension_semantics=("parallel",)),
    )(xT, w_all)

    # Strip feature/batch padding and return [B, 10].
    return out_pad[:d_out, :B].T


def init_params(key):
    """Deterministic init, torch layout: W is [out, in], b is [out]."""
    params = []
    for i in range(NUM_LAYERS):
        d_in, d_out = DIMS[i], DIMS[i + 1]
        key, kw, kb = jax.random.split(key, 3)
        bound = 1.0 / (d_in ** 0.5)   # matches nn.Linear's uniform bound
        w = jax.random.uniform(kw, (d_out, d_in), jnp.float32, -bound, bound)
        b = jax.random.uniform(kb, (d_out,), jnp.float32, -bound, bound)
        params.append((w, b))
    return params


def reference_forward(x, params):
    h = x
    for (w, b) in params:
        h = jnp.maximum(
            jnp.dot(h, w.T, precision=jax.lax.Precision.HIGHEST) + b, 0.0)
    return h


if __name__ == "__main__":
    key = jax.random.PRNGKey(0)
    key, kx = jax.random.split(key)

    # Ragged batch on purpose: exercises lane padding and the grid heuristic
    # (grid=1 x 384 lanes on v5e/v6e, grid=2 x 256 lanes on dual-TC chips).
    B = 300
    x = jax.random.normal(kx, (B, DIMS[0]), jnp.float32)
    params = init_params(key)

    # Hot-path fix: pack (and fold biases) ONCE, outside the forward.
    w_all = pack_params(params)
    fwd = jax.jit(dummy_model_forward)

    out = jax.block_until_ready(fwd(x, w_all))
    ref = reference_forward(x, params)

    assert out.shape == (B, DIMS[-1])
    assert jnp.allclose(out, ref, atol=1e-5, rtol=1e-5), \
        float(jnp.max(jnp.abs(out - ref)))

    print("KERNEL_OK")
</pallas_src>

<mosaic_0001>
module attributes {stable_mosaic.version = 11 : i64} {
  func.func @mlp_kernel(%arg0: i32, %arg1: memref<16x256xf32, #tpu.memory_space<vmem>>, %arg2: memref<6x32x32xf32, #tpu.memory_space<vmem>>, %arg3: memref<16x256xf32, #tpu.memory_space<vmem>>) attributes {dimension_semantics = [#tpu.dimension_semantics<parallel>], iteration_bounds = array<i64: 2>, scalar_prefetch = 0 : i64, scratch_operands = 0 : i64, tpu.core_type = #tpu.core_type<tc>, window_params = [{transform_indices = @transform_0, window_bounds = array<i64: 16, 256>}, {pipeline_mode = #tpu.pipeline_mode<synchronous>, transform_indices = @transform_1, window_bounds = array<i64: 6, 32, 32>}, {transform_indices = @transform_2, window_bounds = array<i64: 16, 256>}]} {
    %c0 = arith.constant 0 : index
    %c0_0 = arith.constant 0 : index
    %c0_1 = arith.constant 0 : index
    %0 = vector.load %arg2[%c0, %c0_0, %c0_1] : memref<6x32x32xf32, #tpu.memory_space<vmem>>, vector<1x32x32xf32>
    %1 = vector.shape_cast %0 : vector<1x32x32xf32> to vector<32x32xf32>
    %2 = vector.extract_strided_slice %1 {offsets = [0, 0], sizes = [32, 16], strides = [1, 1]} : vector<32x32xf32> to vector<32x16xf32>
    %c0_2 = arith.constant 0 : index
    %c0_3 = arith.constant 0 : index
    %3 = vector.load %arg1[%c0_2, %c0_3] : memref<16x256xf32, #tpu.memory_space<vmem>>, vector<16x256xf32>
    %cst = arith.constant dense<0.000000e+00> : vector<32x256xf32>
    %4 = tpu.matmul %2, %3, %cst {dimension_numbers = #tpu.dot_dimension_numbers<[1], [0], [0], [1], [0, 0, 1, 1], [], []>, precision = #tpu.contract_precision<fp32>} : vector<32x16xf32>, vector<16x256xf32>, vector<32x256xf32> -> vector<32x256xf32>
    %cst_4 = arith.constant 0.000000e+00 : f32
    %5 = vector.broadcast %cst_4 : f32 to vector<32x256xf32>
    %6 = arith.maximumf %4, %5 : vector<32x256xf32>
    %c1 = arith.constant 1 : index
    %c0_5 = arith.constant 0 : index
    %c0_6 = arith.constant 0 : index
    %7 = vector.load %arg2[%c1, %c0_5, %c0_6] : memref<6x32x32xf32, #tpu.memory_space<vmem>>, vector<1x32x32xf32>
    %8 = vector.shape_cast %7 : vector<1x32x32xf32> to vector<32x32xf32>
    %cst_7 = arith.constant dense<0.000000e+00> : vector<32x256xf32>
    %9 = tpu.matmul %8, %6, %cst_7 {dimension_numbers = #tpu.dot_dimension_numbers<[1], [0], [0], [1], [0, 0, 1, 1], [], []>, precision = #tpu.contract_precision<fp32>} : vector<32x32xf32>, vector<32x256xf32>, vector<32x256xf32> -> vector<32x256xf32>
    %cst_8 = arith.constant 0.000000e+00 : f32
    %10 = vector.broadcast %cst_8 : f32 to vector<32x256xf32>
    %11 = arith.maximumf %9, %10 : vector<32x256xf32>
    %c2 = arith.constant 2 : index
    %c0_9 = arith.constant 0 : index
    %c0_10 = arith.constant 0 : index
    %12 = vector.load %arg2[%c2, %c0_9, %c0_10] : memref<6x32x32xf32, #tpu.memory_space<vmem>>, vector<1x32x32xf32>
    %13 = vector.shape_cast %12 : vector<1x32x32xf32> to vector<32x32xf32>
    %cst_11 = arith.constant dense<0.000000e+00> : vector<32x256xf32>
    %14 = tpu.matmul %13, %11, %cst_11 {dimension_numbers = #tpu.dot_dimension_numbers<[1], [0], [0], [1], [0, 0, 1, 1], [], []>, precision = #tpu.contract_precision<fp32>} : vector<32x32xf32>, vector<32x256xf32>, vector<32x256xf32> -> vector<32x256xf32>
    %cst_12 = arith.constant 0.000000e+00 : f32
    %15 = vector.broadcast %cst_12 : f32 to vector<32x256xf32>
    %16 = arith.maximumf %14, %15 : vector<32x256xf32>
    %c3 = arith.constant 3 : index
    %c0_13 = arith.constant 0 : index
    %c0_14 = arith.constant 0 : index
    %17 = vector.load %arg2[%c3, %c0_13, %c0_14] : memref<6x32x32xf32, #tpu.memory_space<vmem>>, vector<1x32x32xf32>
    %18 = vector.shape_cast %17 : vector<1x32x32xf32> to vector<32x32xf32>
    %cst_15 = arith.constant dense<0.000000e+00> : vector<32x256xf32>
    %19 = tpu.matmul %18, %16, %cst_15 {dimension_numbers = #tpu.dot_dimension_numbers<[1], [0], [0], [1], [0, 0, 1, 1], [], []>, precision = #tpu.contract_precision<fp32>} : vector<32x32xf32>, vector<32x256xf32>, vector<32x256xf32> -> vector<32x256xf32>
    %cst_16 = arith.constant 0.000000e+00 : f32
    %20 = vector.broadcast %cst_16 : f32 to vector<32x256xf32>
    %21 = arith.maximumf %19, %20 : vector<32x256xf32>
    %c4 = arith.constant 4 : index
    %c0_17 = arith.constant 0 : index
    %c0_18 = arith.constant 0 : index
    %22 = vector.load %arg2[%c4, %c0_17, %c0_18] : memref<6x32x32xf32, #tpu.memory_space<vmem>>, vector<1x32x32xf32>
    %23 = vector.shape_cast %22 : vector<1x32x32xf32> to vector<32x32xf32>
    %cst_19 = arith.constant dense<0.000000e+00> : vector<32x256xf32>
    %24 = tpu.matmul %23, %21, %cst_19 {dimension_numbers = #tpu.dot_dimension_numbers<[1], [0], [0], [1], [0, 0, 1, 1], [], []>, precision = #tpu.contract_precision<fp32>} : vector<32x32xf32>, vector<32x256xf32>, vector<32x256xf32> -> vector<32x256xf32>
    %cst_20 = arith.constant 0.000000e+00 : f32
    %25 = vector.broadcast %cst_20 : f32 to vector<32x256xf32>
    %26 = arith.maximumf %24, %25 : vector<32x256xf32>
    %c5 = arith.constant 5 : index
    %c0_21 = arith.constant 0 : index
    %c0_22 = arith.constant 0 : index
    %27 = vector.load %arg2[%c5, %c0_21, %c0_22] : memref<6x32x32xf32, #tpu.memory_space<vmem>>, vector<1x32x32xf32>
    %28 = vector.shape_cast %27 : vector<1x32x32xf32> to vector<32x32xf32>
    %cst_23 = arith.constant dense<0.000000e+00> : vector<32x256xf32>
    %29 = tpu.matmul %28, %26, %cst_23 {dimension_numbers = #tpu.dot_dimension_numbers<[1], [0], [0], [1], [0, 0, 1, 1], [], []>, precision = #tpu.contract_precision<fp32>} : vector<32x32xf32>, vector<32x256xf32>, vector<32x256xf32> -> vector<32x256xf32>
    %cst_24 = arith.constant 0.000000e+00 : f32
    %30 = vector.broadcast %cst_24 : f32 to vector<32x256xf32>
    %31 = arith.maximumf %29, %30 : vector<32x256xf32>
    %32 = vector.extract_strided_slice %31 {offsets = [0, 0], sizes = [16, 256], strides = [1, 1]} : vector<32x256xf32> to vector<16x256xf32>
    %c0_25 = arith.constant 0 : index
    %c0_26 = arith.constant 0 : index
    %33 = vector.load %arg3[%c0_25, %c0_26] : memref<16x256xf32, #tpu.memory_space<vmem>>, vector<16x256xf32>
    tpu.vector_store %arg3[%c0_25, %c0_26], %32 {strides = array<i32>} : memref<16x256xf32, #tpu.memory_space<vmem>>, vector<16x256xf32>,
    return
  }
  func.func @transform_0(%arg0: i32) -> (i32, i32) {
    %c0_i32 = arith.constant 0 : i32
    %c0_i32_0 = arith.constant 0 : i32
    return %c0_i32, %arg0 : i32, i32
  }
  func.func @transform_1(%arg0: i32) -> (i32, i32, i32) {
    %c0_i32 = arith.constant 0 : i32
    %c0_i32_0 = arith.constant 0 : i32
    %c0_i32_1 = arith.constant 0 : i32
    %c0_i32_2 = arith.constant 0 : i32
    return %c0_i32, %c0_i32_0, %c0_i32_1 : i32, i32, i32
  }
  func.func @transform_2(%arg0: i32) -> (i32, i32) {
    %c0_i32 = arith.constant 0 : i32
    %c0_i32_0 = arith.constant 0 : i32
    return %c0_i32, %arg0 : i32, i32
  }
}

</mosaic_0001>

<llo_original>
// kernel: dummy_model_forward.1
$region0: #{dummy_model_forward.1}
  #allocation0 [shape = 'u32[]', space=smem, size = 0x4, offset = 0x4, fixed_abs, tag = 'smem constant byte address 0x4 - core index']
  #allocation1 [shape = 'u32[144,128]{1,0:T(1,128)}', space=vmem, size = 0x12000, scoped, tag = 'internal scratch']
  %s0 = inlined_call_operand.vmem [shape: f32[16,512], index: 0, kind: input, shape index: {}]
  %s1 = inlined_call_operand.hbm [shape: f32[6,32,32], index: 1, kind: input, shape index: {}]
  %s2 = inlined_call_operand.vmem [shape: f32[16,512], index: 2, kind: output, shape index: {}]
  %s3 = sld [smem:[#allocation0]]
  $region87: #{dummy_model_forward.1} parent=0
    _
  %s5 = ssub.s32 1, %s3
  %s6 = scalar_select 0, %s5, %s3
  $region1: #{dummy_model_forward.1} parent=0
    #allocation2 [shape = 'u8[32768]{0}', space=vmem, size = 0x8000, scoped, tag = 'input window, operand 0']
    #allocation3 [shape = 'u8[98304]{0}', space=vmem, size = 0x18000, scoped, tag = 'input window, operand 1, single buffered']
    #allocation4 [shape = 's32[2]{0}', space=sflag, size = 0x8, scoped, tag = 'scoped memory for dummy_model_forward.1']
    #allocation5 [shape = 'u8[32768]{0}', space=vmem, size = 0x8000, scoped, tag = 'output window, operand 0']
    %7 = vsyncpa [#allocation4], 0
    loop: start=0, step=1, limit=4
    $region2: #{dummy_model_forward.1} parent=1 // loop_pre_header
      _
    $region3: #{dummy_model_forward.1} parent=1 // loop_header
      %s9 = sphi 0, %s13
      %p10 = scmp.ge.s32.totalorder %s9, 4
      %s19 = sphi 0, %s21
      %s22 = sphi 0, %s19
      %s23 = sphi 0, %s22
      %s39 = sphi 0, %s23
      %s43 = sphi 0, %s43
      %s45 = sphi 0, %s43
      %s46 = sphi 0, %s45
      %s60 = sphi 0, %s46
      %s66 = sphi 0, %s68
      %s69 = sphi 0, %s66
      %s70 = sphi 0, %s69
      %s86 = sphi 0, %s70
    $region4: #{dummy_model_forward.1} parent=1 // loop_header_branch
      %12 = sbr.rel (%p10) target = $region8
    $region5: #{dummy_model_forward.1} parent=1 // loop_body
      %s14 = ssub.s32 %s9, 1
      %s15 = ssub.s32 %s9, 2
      %s16 = sadd.s32 %s9, 1
      %s17 = ssub.s32 %s9, %s16
      %p18 = scmp.eq.s32.totalorder %s17, 0
      %s20 = sadd.s32 %s19, 1
      %s21 = scalar_select %p18, %s19, %s20
      %p24 = pneg %p18
      %p25 = scmp.eq.s32.totalorder %s9, 1
      %p26 = por %p24, %p25
      %p27 = scmp.ne.s32.totalorder %s19, %s22
      %p28 = scmp.eq.s32.totalorder %s9, 0
      %p29 = por %p27, %p28
      %p30 = scmp.ne.s32.totalorder %s19, %s22
      %p31 = scmp.eq.s32.totalorder %s14, 1
      %p32 = por %p30, %p31
      %p33 = scmp.ne.s32.totalorder %s22, %s23
      %p34 = scmp.eq.s32.totalorder %s14, 0
      %p35 = por %p33, %p34
      %p36 = scmp.ne.s32.totalorder %s22, %s23
      %p37 = scmp.eq.s32.totalorder %s15, 1
      %p38 = por %p36, %p37
      %p40 = scmp.ne.s32.totalorder %s23, %s39
      %p41 = scmp.eq.s32.totalorder %s15, 0
      %p42 = por %p40, %p41
      %s44 = sadd.s32 %s43, 1
      %p47 = scmp.eq.s32.totalorder %s9, 1
      %p48 = scmp.ne.s32.totalorder %s43, %s45
      %p49 = scmp.eq.s32.totalorder %s9, 0
      %p50 = por %p48, %p49
      %p51 = scmp.ne.s32.totalorder %s43, %s45
      %p52 = scmp.eq.s32.totalorder %s14, 1
      %p53 = por %p51, %p52
      %p54 = scmp.ne.s32.totalorder %s45, %s46
      %p55 = scmp.eq.s32.totalorder %s14, 0
      %p56 = por %p54, %p55
      %p57 = scmp.ne.s32.totalorder %s45, %s46
      %p58 = scmp.eq.s32.totalorder %s15, 1
      %p59 = por %p57, %p58
      %p61 = scmp.ne.s32.totalorder %s46, %s60
      %p62 = scmp.eq.s32.totalorder %s15, 0
      %p63 = por %p61, %p62
      %s64 = ssub.s32 %s9, %s16
      %p65 = scmp.eq.s32.totalorder %s64, 0
      %s67 = sadd.s32 %s66, 1
      %s68 = scalar_select %p65, %s66, %s67
      %p71 = pneg %p65
      %p72 = scmp.eq.s32.totalorder %s9, 1
      %p73 = por %p71, %p72
      %p74 = scmp.ne.s32.totalorder %s66, %s69
      %p75 = scmp.eq.s32.totalorder %s9, 0
      %p76 = por %p74, %p75
      %p77 = scmp.ne.s32.totalorder %s66, %s69
      %p78 = scmp.eq.s32.totalorder %s14, 1
      %p79 = por %p77, %p78
      %p80 = scmp.ne.s32.totalorder %s69, %s70
      %p81 = scmp.eq.s32.totalorder %s14, 0
      %p82 = por %p80, %p81
      %p83 = scmp.ne.s32.totalorder %s69, %s70
      %p84 = scmp.eq.s32.totalorder %s15, 1
      %p85 = por %p83, %p84
      %p87 = scmp.ne.s32.totalorder %s70, %s86
      %p88 = scmp.eq.s32.totalorder %s15, 0
      %p89 = por %p87, %p88
      %p90 = scmp.le.s32.totalorder 1, %s9
      %p91 = scmp.lt.s32.totalorder %s9, 3
      %p92 = pnand %p90, %p91
      %p93 = pneg %p92
      // Predicated region
      $region9: #{dummy_model_forward.1} parent=5 // pred_check
        _
      $region10: #{dummy_model_forward.1} parent=5 // pred_check_branch
        %95 = sbr.rel (%p92) target = $region12
      $region11: #{dummy_model_forward.1} parent=5 // pred_region
        %s96 = ssub.s32 %s9, 1
        // Predicated region
        $region13: #{dummy_model_forward.1} parent=11 // pred_check
          %p97 = pneg %p56
        $region14: #{dummy_model_forward.1} parent=11 // pred_check_branch
          %99 = sbr.rel (%p97) target = $region16
        $region15: #{dummy_model_forward.1} parent=11 // pred_region
          %s101 = ssub.s32 3072, 3072
          %102 = vsyncadd [#allocation4], %s101
          %s103 = sshll.u32 [#allocation3], 4
          %s104 = int_to_ptr.vmem [resolvable:$true] %s103
          %109 = dma.hbm_to_vmem [thread:$0]  %s1, 3072, %s104, [#allocation4], 128, 128, 8
        $region16: #{dummy_model_forward.1} parent=11 // pred_fallthru
          _
      $region12: #{dummy_model_forward.1} parent=5 // pred_fallthru
        _
      %p110 = scmp.lt.s32.totalorder %s9, 2
      // Predicated region
      $region17: #{dummy_model_forward.1} parent=5 // pred_check
        %p111 = pneg %p110
      $region18: #{dummy_model_forward.1} parent=5 // pred_check_branch
        %113 = sbr.rel (%p111) target = $region20
      $region19: #{dummy_model_forward.1} parent=5 // pred_region
        // Predicated region
        $region21: #{dummy_model_forward.1} parent=19 // pred_check
          %p114 = pneg %p29
        $region22: #{dummy_model_forward.1} parent=19 // pred_check_branch
          %116 = sbr.rel (%p114) target = $region24
        $region23: #{dummy_model_forward.1} parent=19 // pred_region
          %s117 = sand.u32 %s19, 1
          %s118 = sand.u32 %s19, 1
          %s119 = smul.addr %s118, 32
          %s120 = scalar_lea.vmem [#allocation2], %s119
          %s121 = smul.u32 2, %s9
          %s122 = smul.addr %s121, 8
          %s123 = scalar_lea.vmem %s0, %s122
          // Predicated region
          $region25: #{dummy_model_forward.1} parent=23 // pred_check
            _
          $region26: #{dummy_model_forward.1} parent=23 // pred_check_branch
            %125 = sbr.rel (0) target = $region28
          $region27: #{dummy_model_forward.1} parent=23 // pred_region
            // Predicated region
            $region29: #{dummy_model_forward.1} parent=27 // pred_check
              _
            $region30: #{dummy_model_forward.1} parent=27 // pred_check_branch
              %127 = sbr.rel (0) target = $region32
            $region31: #{dummy_model_forward.1} parent=27 // pred_region
              loop: start=0, step=1, limit=1
              $region33: #{dummy_model_forward.1} parent=31 // loop_pre_header
                _
              $region34: #{dummy_model_forward.1} parent=31 // loop_header
                %s129 = sphi 0, %s133
                %p130 = scmp.ge.s32.totalorder %s129, 1
                %s134 = sphi %s123, %s123
                %s135 = sphi %s120, %s120
              $region35: #{dummy_model_forward.1} parent=31 // loop_header_branch
                %132 = sbr.rel (%p130) target = $region39
              $region36: #{dummy_model_forward.1} parent=31 // loop_body
                %v136 = vld [vmem:[%s134] sm:$0xff]
                %137 = vst [vmem:[%s135] sm:$0xff] %v136
                %v138 = vld [vmem:[%s134 + $0x8] sm:$0xff]
                %139 = vst [vmem:[%s135 + $0x8] sm:$0xff] %v138
                %v140 = vld [vmem:[%s134 + $0x20] sm:$0xff]
                %141 = vst [vmem:[%s135 + $0x10] sm:$0xff] %v140
                %v142 = vld [vmem:[%s134 + $0x28] sm:$0xff]
                %143 = vst [vmem:[%s135 + $0x18] sm:$0xff] %v142
              $region37: #{dummy_model_forward.1} parent=31 // loop_footer
                %s133 = sadd.s32 1, %s129
              $region38: #{dummy_model_forward.1} parent=31 // loop_footer_branch
                %128 = sbr.rel target = $region34
              $region39: #{dummy_model_forward.1} parent=31 // loop_exit
                _
            $region32: #{dummy_model_forward.1} parent=27 // pred_fallthru
              _
            // Predicated region
            $region40: #{dummy_model_forward.1} parent=27 // pred_check
              _
            $region41: #{dummy_model_forward.1} parent=27 // pred_check_branch
              %145 = sbr.rel target = $region43
            $region42: #{dummy_model_forward.1} parent=27 // pred_region
              _
            $region43: #{dummy_model_forward.1} parent=27 // pred_fallthru
              _
          $region28: #{dummy_model_forward.1} parent=23 // pred_fallthru
            _
          %146 = vnop
        $region24: #{dummy_model_forward.1} parent=19 // pred_fallthru
          _
      $region20: #{dummy_model_forward.1} parent=5 // pred_fallthru
        _
      %p147 = scmp.le.s32.totalorder 1, %s9
      %p148 = scmp.lt.s32.totalorder %s9, 3
      %p149 = pnand %p147, %p148
      %p150 = pneg %p149
      // Predicated region
      $region44: #{dummy_model_forward.1} parent=5 // pred_check
        _
      $region45: #{dummy_model_forward.1} parent=5 // pred_check_branch
        %152 = sbr.rel (%p149) target = $region47
      $region46: #{dummy_model_forward.1} parent=5 // pred_region
        %s153 = ssub.s32 %s9, 1
        %s154 = sand.u32 %s22, 1
        %s155 = sand.u32 %s22, 1
        %s156 = smul.addr %s155, 32
        %s157 = scalar_lea.vmem [#allocation2], %s156
        // Predicated region
        $region48: #{dummy_model_forward.1} parent=46 // pred_check
          %p158 = pneg %p35
        $region49: #{dummy_model_forward.1} parent=46 // pred_check_branch
          %160 = sbr.rel (%p158) target = $region51
        $region50: #{dummy_model_forward.1} parent=46 // pred_region
          _
        $region51: #{dummy_model_forward.1} parent=46 // pred_fallthru
          _
        // Predicated region
        $region52: #{dummy_model_forward.1} parent=46 // pred_check
          %p161 = pneg %p56
        $region53: #{dummy_model_forward.1} parent=46 // pred_check_branch
          %163 = sbr.rel (%p161) target = $region55
        $region54: #{dummy_model_forward.1} parent=46 // pred_region
          %164 = dma.done [#allocation4], 3072
        $region55: #{dummy_model_forward.1} parent=46 // pred_fallthru
          _
        %s165 = sand.u32 %s22, 1
        %s166 = sand.u32 %s22, 1
        %s167 = smul.addr %s166, 32
        %s168 = scalar_lea.vmem [#allocation2], %s167
        %p169 = pneg %p35
        %p170 = pneg %p32
        %p171 = pneg %p56
        %p172 = pneg %p53
        %p173 = pneg %p82
        %p174 = pneg %p79
        %s175 = sand.u32 %s69, 1
        %s176 = sand.u32 %s69, 1
        %s177 = smul.addr %s176, 32
        %s178 = scalar_lea.vmem [#allocation5], %s177
        %s179 = smul.u32 2, %s14
        %s180 = smul.u32 2, %s14
        %v181 = vld [vmem:[#allocation3] sm:$0xff]
        %v182 = vld [vmem:[#allocation3 + $0x8] sm:$0xff]
        %v183 = vld [vmem:[#allocation3 + $0x10] sm:$0xff]
        %v184 = vld [vmem:[#allocation3 + $0x18] sm:$0xff]
        %v185 = vld [vmem:[%s157] sm:$0xff]
        %v186 = vld [vmem:[%s157 + $0x8] sm:$0xff]
        %v187 = vld [vmem:[%s157 + $0x10] sm:$0xff]
        %v188 = vld [vmem:[%s157 + $0x18] sm:$0xff]
        %vm189 = vcmask 130048
        %v191 = vsel %vm189, %v181, 0
        %v194 = vsel %vm189, %v182, 0
        %v197 = vsel %vm189, %v183, 0
        %v200 = vsel %vm189, %v184, 0
        %202 = vmatprep.subr.mxu0 0.0
        %203 = vmatpush1.msra.mxu0 0.0
        %204 = vmatprep.subr.mxu0 0.0
        %205 = vmatpush1.msra.mxu0 0.0
        %206 = vmatprep.subr.mxu0 0.0
        %207 = vmatpush1.msra.mxu0 0.0
        %208 = vmatprep.subr.mxu0 0.0
        %209 = vmatpush1.msra.mxu0 0.0
        %210 = vmatprep.subr.mxu0 0.0
        %211 = vmatpush1.msra.mxu0 0.0
        %212 = vmatprep.subr.mxu0 0.0
        %213 = vmatpush1.msra.mxu0 0.0
        %214 = vmatprep.subr.mxu0 0.0
        %215 = vmatpush1.msra.mxu0 0.0
        %216 = vmatprep.subr.mxu0 0.0
        %217 = vmatpush1.msra.mxu0 0.0
        %218 = vmatprep.subr.mxu0 0.0
        %219 = vmatpush1.msra.mxu0 0.0
        %220 = vmatprep.subr.mxu0 0.0
        %221 = vmatpush1.msra.mxu0 0.0
        %222 = vmatprep.subr.mxu0 0.0
        %223 = vmatpush1.msra.mxu0 0.0
        %224 = vmatprep.subr.mxu0 0.0
        %225 = vmatpush1.msra.mxu0 0.0
        %226 = vmatprep.subr.mxu0 0.0
        %227 = vmatpush1.msra.mxu0 0.0
        %228 = vmatprep.subr.mxu0 0.0
        %229 = vmatpush1.msra.mxu0 0.0
        %v230 = vand.u32 %v188, 4294901760
        %231 = vmatprep.subr.mxu0 %v230
        %v232 = vand.u32 %v187, 4294901760
        %233 = vmatpush1.msra.mxu0 %v232
        %v234 = vand.u32 %v186, 4294901760
        %235 = vmatprep.subr.mxu0 %v234
        %v236 = vand.u32 %v185, 4294901760
        %237 = vmatpush1.msra.mxu0 %v236
        %238 = vmatprep.subr.mxu0 0.0
        %239 = vmatpush2.msra.mxu0 0.0
        %240 = vmatprep.subr.mxu0 0.0
        %241 = vmatpush2.msra.mxu0 0.0
        %242 = vmatprep.subr.mxu0 0.0
        %243 = vmatpush2.msra.mxu0 0.0
        %244 = vmatprep.subr.mxu0 0.0
        %245 = vmatpush2.msra.mxu0 0.0
        %246 = vmatprep.subr.mxu0 0.0
        %247 = vmatpush2.msra.mxu0 0.0
        %248 = vmatprep.subr.mxu0 0.0
        %249 = vmatpush2.msra.mxu0 0.0
        %250 = vmatprep.subr.mxu0 0.0
        %251 = vmatpush2.msra.mxu0 0.0
        %252 = vmatprep.subr.mxu0 0.0
        %253 = vmatpush2.msra.mxu0 0.0
        %254 = vmatprep.subr.mxu0 0.0
        %255 = vmatpush2.msra.mxu0 0.0
        %256 = vmatprep.subr.mxu0 0.0
        %257 = vmatpush2.msra.mxu0 0.0
        %258 = vmatprep.subr.mxu0 0.0
        %259 = vmatpush2.msra.mxu0 0.0
        %260 = vmatprep.subr.mxu0 0.0
        %261 = vmatpush2.msra.mxu0 0.0
        %262 = vmatprep.subr.mxu0 0.0
        %263 = vmatpush2.msra.mxu0 0.0
        %264 = vmatprep.subr.mxu0 0.0
        %265 = vmatpush2.msra.mxu0 0.0
        %266 = vmatprep.subr.mxu0 0.0
        %267 = vmatpush2.msra.mxu0 0.0
        %268 = vmatprep.subr.mxu0 0.0
        %269 = vmatpush2.msra.mxu0 0.0
        %270 = vmatprep.mubr.f32.mxu0 0.0
        %v271 = vand.u32 %v191, 4294901760
        %v272 = vsub.f32 %v191, %v271
        %v273 = vand.u32 %v272, 4294901760
        %v274 = vsub.f32 %v272, %v273
        %v275 = vand.u32 %v274, 4294901760
        %276 = vmatmul.mubr.f32.gmra.mxu0 %v275
        %v277 = vpop.f32.mrf.mxu0
        %v278 = vadd.f32 0.0, %v277
        %v279 = vpop.f32.mrf.mxu0
        %v280 = vadd.f32 0.0, %v279
        %281 = vmatprep.mubr.f32.mxu0 0.0
        %v282 = vand.u32 %v194, 4294901760
        %v283 = vsub.f32 %v194, %v282
        %v284 = vand.u32 %v283, 4294901760
        %v285 = vsub.f32 %v283, %v284
        %v286 = vand.u32 %v285, 4294901760
        %287 = vmatmul.mubr.f32.gmra.mxu0 %v286
        %v288 = vpop.f32.mrf.mxu0
        %v289 = vadd.f32 0.0, %v288
        %v290 = vpop.f32.mrf.mxu0
        %v291 = vadd.f32 0.0, %v290
        %292 = vmatprep.mubr.f32.mxu0 0.0
        %v293 = vand.u32 %v197, 4294901760
        %v294 = vsub.f32 %v197, %v293
        %v295 = vand.u32 %v294, 4294901760
        %v296 = vsub.f32 %v294, %v295
        %v297 = vand.u32 %v296, 4294901760
        %298 = vmatmul.mubr.f32.gmra.mxu0 %v297
        %v299 = vpop.f32.mrf.mxu0
        %v300 = vadd.f32 0.0, %v299
        %v301 = vpop.f32.mrf.mxu0
        %v302 = vadd.f32 0.0, %v301
        %303 = vmatprep.mubr.f32.mxu0 0.0
        %v304 = vand.u32 %v200, 4294901760
        %v305 = vsub.f32 %v200, %v304
        %v306 = vand.u32 %v305, 4294901760
        %v307 = vsub.f32 %v305, %v306
        %v308 = vand.u32 %v307, 4294901760
        %309 = vmatmul.mubr.f32.gmra.mxu0 %v308
        %v310 = vpop.f32.mrf.mxu0
        %v311 = vadd.f32 0.0, %v310
        %v312 = vpop.f32.mrf.mxu0
        %v313 = vadd.f32 0.0, %v312
        %314 = vdwg.mxu0
        %315 = vmatprep.subr.mxu0 0.0
        %316 = vmatpush1.msra.mxu0 0.0
        %317 = vmatprep.subr.mxu0 0.0
        %318 = vmatpush1.msra.mxu0 0.0
        %319 = vmatprep.subr.mxu0 0.0
        %320 = vmatpush1.msra.mxu0 0.0
        %321 = vmatprep.subr.mxu0 0.0
        %322 = vmatpush1.msra.mxu0 0.0
        %323 = vmatprep.subr.mxu0 0.0
        %324 = vmatpush1.msra.mxu0 0.0
        %325 = vmatprep.subr.mxu0 0.0
        %326 = vmatpush1.msra.mxu0 0.0
        %327 = vmatprep.subr.mxu0 0.0
        %328 = vmatpush1.msra.mxu0 0.0
        %329 = vmatprep.subr.mxu0 0.0
        %330 = vmatpush1.msra.mxu0 0.0
        %331 = vmatprep.subr.mxu0 0.0
        %332 = vmatpush1.msra.mxu0 0.0
        %333 = vmatprep.subr.mxu0 0.0
        %334 = vmatpush1.msra.mxu0 0.0
        %335 = vmatprep.subr.mxu0 0.0
        %336 = vmatpush1.msra.mxu0 0.0
        %337 = vmatprep.subr.mxu0 0.0
        %338 = vmatpush1.msra.mxu0 0.0
        %339 = vmatprep.subr.mxu0 0.0
        %340 = vmatpush1.msra.mxu0 0.0
        %341 = vmatprep.subr.mxu0 0.0
        %342 = vmatpush1.msra.mxu0 0.0
        %v343 = vand.u32 %v188, 4294901760
        %v344 = vsub.f32 %v188, %v343
        %v345 = vand.u32 %v344, 4294901760
        %v346 = vsub.f32 %v344, %v345
        %v347 = vand.u32 %v346, 4294901760
        %348 = vmatprep.subr.mxu0 %v347
        %v349 = vand.u32 %v187, 4294901760
        %v350 = vsub.f32 %v187, %v349
        %v351 = vand.u32 %v350, 4294901760
        %v352 = vsub.f32 %v350, %v351
        %v353 = vand.u32 %v352, 4294901760
        %354 = vmatpush1.msra.mxu0 %v353
        %v355 = vand.u32 %v186, 4294901760
        %v356 = vsub.f32 %v186, %v355
        %v357 = vand.u32 %v356, 4294901760
        %v358 = vsub.f32 %v356, %v357
        %v359 = vand.u32 %v358, 4294901760
        %360 = vmatprep.subr.mxu0 %v359
        %v361 = vand.u32 %v185, 4294901760
        %v362 = vsub.f32 %v185, %v361
        %v363 = vand.u32 %v362, 4294901760
        %v364 = vsub.f32 %v362, %v363
        %v365 = vand.u32 %v364, 4294901760
        %366 = vmatpush1.msra.mxu0 %v365
        %367 = vmatprep.subr.mxu0 0.0
        %368 = vmatpush2.msra.mxu0 0.0
        %369 = vmatprep.subr.mxu0 0.0
        %370 = vmatpush2.msra.mxu0 0.0
        %371 = vmatprep.subr.mxu0 0.0
        %372 = vmatpush2.msra.mxu0 0.0
        %373 = vmatprep.subr.mxu0 0.0
        %374 = vmatpush2.msra.mxu0 0.0
        %375 = vmatprep.subr.mxu0 0.0
        %376 = vmatpush2.msra.mxu0 0.0
        %377 = vmatprep.subr.mxu0 0.0
        %378 = vmatpush2.msra.mxu0 0.0
        %379 = vmatprep.subr.mxu0 0.0
        %380 = vmatpush2.msra.mxu0 0.0
        %381 = vmatprep.subr.mxu0 0.0
        %382 = vmatpush2.msra.mxu0 0.0
        %383 = vmatprep.subr.mxu0 0.0
        %384 = vmatpush2.msra.mxu0 0.0
        %385 = vmatprep.subr.mxu0 0.0
        %386 = vmatpush2.msra.mxu0 0.0
        %387 = vmatprep.subr.mxu0 0.0
        %388 = vmatpush2.msra.mxu0 0.0
        %389 = vmatprep.subr.mxu0 0.0
        %390 = vmatpush2.msra.mxu0 0.0
        %391 = vmatprep.subr.mxu0 0.0
        %392 = vmatpush2.msra.mxu0 0.0
        %393 = vmatprep.subr.mxu0 0.0
        %394 = vmatpush2.msra.mxu0 0.0
        %395 = vmatprep.subr.mxu0 0.0
        %396 = vmatpush2.msra.mxu0 0.0
        %397 = vmatprep.subr.mxu0 0.0
        %398 = vmatpush2.msra.mxu0 0.0
        %399 = vmatprep.mubr.f32.mxu0 0.0
        %v400 = vand.u32 %v191, 4294901760
        %401 = vmatmul.mubr.f32.gmra.mxu0 %v400
        %v402 = vpop.f32.mrf.mxu0
        %v403 = vadd.f32 %v278, %v402
        %v404 = vpop.f32.mrf.mxu0
        %v405 = vadd.f32 %v280, %v404
        %406 = vmatprep.mubr.f32.mxu0 0.0
        %v407 = vand.u32 %v194, 4294901760
        %408 = vmatmul.mubr.f32.gmra.mxu0 %v407
        %v409 = vpop.f32.mrf.mxu0
        %v410 = vadd.f32 %v289, %v409
        %v411 = vpop.f32.mrf.mxu0
        %v412 = vadd.f32 %v291, %v411
        %413 = vmatprep.mubr.f32.mxu0 0.0
        %v414 = vand.u32 %v197, 4294901760
        %415 = vmatmul.mubr.f32.gmra.mxu0 %v414
        %v416 = vpop.f32.mrf.mxu0
        %v417 = vadd.f32 %v300, %v416
        %v418 = vpop.f32.mrf.mxu0
        %v419 = vadd.f32 %v302, %v418
        %420 = vmatprep.mubr.f32.mxu0 0.0
        %v421 = vand.u32 %v200, 4294901760
        %422 = vmatmul.mubr.f32.gmra.mxu0 %v421
        %v423 = vpop.f32.mrf.mxu0
        %v424 = vadd.f32 %v311, %v423
        %v425 = vpop.f32.mrf.mxu0
        %v426 = vadd.f32 %v313, %v425
        %427 = vdwg.mxu0
        %428 = vmatprep.subr.mxu0 0.0
        %429 = vmatpush1.msra.mxu0 0.0
        %430 = vmatprep.subr.mxu0 0.0
        %431 = vmatpush1.msra.mxu0 0.0
        %432 = vmatprep.subr.mxu0 0.0
        %433 = vmatpush1.msra.mxu0 0.0
        %434 = vmatprep.subr.mxu0 0.0
        %435 = vmatpush1.msra.mxu0 0.0
        %436 = vmatprep.subr.mxu0 0.0
        %437 = vmatpush1.msra.mxu0 0.0
        %438 = vmatprep.subr.mxu0 0.0
        %439 = vmatpush1.msra.mxu0 0.0
        %440 = vmatprep.subr.mxu0 0.0
        %441 = vmatpush1.msra.mxu0 0.0
        %442 = vmatprep.subr.mxu0 0.0
        %443 = vmatpush1.msra.mxu0 0.0
        %444 = vmatprep.subr.mxu0 0.0
        %445 = vmatpush1.msra.mxu0 0.0
        %446 = vmatprep.subr.mxu0 0.0
        %447 = vmatpush1.msra.mxu0 0.0
        %448 = vmatprep.subr.mxu0 0.0
        %449 = vmatpush1.msra.mxu0 0.0
        %450 = vmatprep.subr.mxu0 0.0
        %451 = vmatpush1.msra.mxu0 0.0
        %452 = vmatprep.subr.mxu0 0.0
        %453 = vmatpush1.msra.mxu0 0.0
        %454 = vmatprep.subr.mxu0 0.0
        %455 = vmatpush1.msra.mxu0 0.0
        %v456 = vand.u32 %v188, 4294901760
        %v457 = vsub.f32 %v188, %v456
        %458 = vmatprep.subr.mxu0 %v457
        %v459 = vand.u32 %v187, 4294901760
        %v460 = vsub.f32 %v187, %v459
        %461 = vmatpush1.msra.mxu0 %v460
        %v462 = vand.u32 %v186, 4294901760
        %v463 = vsub.f32 %v186, %v462
        %464 = vmatprep.subr.mxu0 %v463
        %v465 = vand.u32 %v185, 4294901760
        %v466 = vsub.f32 %v185, %v465
        %467 = vmatpush1.msra.mxu0 %v466
        %468 = vmatprep.subr.mxu0 0.0
        %469 = vmatpush2.msra.mxu0 0.0
        %470 = vmatprep.subr.mxu0 0.0
        %471 = vmatpush2.msra.mxu0 0.0
        %472 = vmatprep.subr.mxu0 0.0
        %473 = vmatpush2.msra.mxu0 0.0
        %474 = vmatprep.subr.mxu0 0.0
        %475 = vmatpush2.msra.mxu0 0.0
        %476 = vmatprep.subr.mxu0 0.0
        %477 = vmatpush2.msra.mxu0 0.0
        %478 = vmatprep.subr.mxu0 0.0
        %479 = vmatpush2.msra.mxu0 0.0
        %480 = vmatprep.subr.mxu0 0.0
        %481 = vmatpush2.msra.mxu0 0.0
        %482 = vmatprep.subr.mxu0 0.0
        %483 = vmatpush2.msra.mxu0 0.0
        %484 = vmatprep.subr.mxu0 0.0
        %485 = vmatpush2.msra.mxu0 0.0
        %486 = vmatprep.subr.mxu0 0.0
        %487 = vmatpush2.msra.mxu0 0.0
        %488 = vmatprep.subr.mxu0 0.0
        %489 = vmatpush2.msra.mxu0 0.0
        %490 = vmatprep.subr.mxu0 0.0
        %491 = vmatpush2.msra.mxu0 0.0
        %492 = vmatprep.subr.mxu0 0.0
        %493 = vmatpush2.msra.mxu0 0.0
        %494 = vmatprep.subr.mxu0 0.0
        %495 = vmatpush2.msra.mxu0 0.0
        %496 = vmatprep.subr.mxu0 0.0
        %497 = vmatpush2.msra.mxu0 0.0
        %498 = vmatprep.subr.mxu0 0.0
        %499 = vmatpush2.msra.mxu0 0.0
        %500 = vmatprep.mubr.f32.mxu0 0.0
        %v501 = vand.u32 %v191, 4294901760
        %v502 = vsub.f32 %v191, %v501
        %503 = vmatmul.mubr.f32.gmra.mxu0 %v502
        %v504 = vpop.f32.mrf.mxu0
        %v505 = vadd.f32 %v403, %v504
        %v506 = vpop.f32.mrf.mxu0
        %v507 = vadd.f32 %v405, %v506
        %508 = vmatprep.mubr.f32.mxu0 0.0
        %v509 = vand.u32 %v194, 4294901760
        %v510 = vsub.f32 %v194, %v509
        %511 = vmatmul.mubr.f32.gmra.mxu0 %v510
        %v512 = vpop.f32.mrf.mxu0
        %v513 = vadd.f32 %v410, %v512
        %v514 = vpop.f32.mrf.mxu0
        %v515 = vadd.f32 %v412, %v514
        %516 = vmatprep.mubr.f32.mxu0 0.0
        %v517 = vand.u32 %v197, 4294901760
        %v518 = vsub.f32 %v197, %v517
        %519 = vmatmul.mubr.f32.gmra.mxu0 %v518
        %v520 = vpop.f32.mrf.mxu0
        %v521 = vadd.f32 %v417, %v520
        %v522 = vpop.f32.mrf.mxu0
        %v523 = vadd.f32 %v419, %v522
        %524 = vmatprep.mubr.f32.mxu0 0.0
        %v525 = vand.u32 %v200, 4294901760
        %v526 = vsub.f32 %v200, %v525
        %527 = vmatmul.mubr.f32.gmra.mxu0 %v526
        %v528 = vpop.f32.mrf.mxu0
        %v529 = vadd.f32 %v424, %v528
        %v530 = vpop.f32.mrf.mxu0
        %v531 = vadd.f32 %v426, %v530
        %532 = vdwg.mxu0
        %533 = vmatprep.subr.mxu0 0.0
        %534 = vmatpush1.msra.mxu0 0.0
        %535 = vmatprep.subr.mxu0 0.0
        %536 = vmatpush1.msra.mxu0 0.0
        %537 = vmatprep.subr.mxu0 0.0
        %538 = vmatpush1.msra.mxu0 0.0
        %539 = vmatprep.subr.mxu0 0.0
        %540 = vmatpush1.msra.mxu0 0.0
        %541 = vmatprep.subr.mxu0 0.0
        %542 = vmatpush1.msra.mxu0 0.0
        %543 = vmatprep.subr.mxu0 0.0
        %544 = vmatpush1.msra.mxu0 0.0
        %545 = vmatprep.subr.mxu0 0.0
        %546 = vmatpush1.msra.mxu0 0.0
        %547 = vmatprep.subr.mxu0 0.0
        %548 = vmatpush1.msra.mxu0 0.0
        %549 = vmatprep.subr.mxu0 0.0
        %550 = vmatpush1.msra.mxu0 0.0
        %551 = vmatprep.subr.mxu0 0.0
        %552 = vmatpush1.msra.mxu0 0.0
        %553 = vmatprep.subr.mxu0 0.0
        %554 = vmatpush1.msra.mxu0 0.0
        %555 = vmatprep.subr.mxu0 0.0
        %556 = vmatpush1.msra.mxu0 0.0
        %557 = vmatprep.subr.mxu0 0.0
        %558 = vmatpush1.msra.mxu0 0.0
        %559 = vmatprep.subr.mxu0 0.0
        %560 = vmatpush1.msra.mxu0 0.0
        %v561 = vand.u32 %v188, 4294901760
        %562 = vmatprep.subr.mxu0 %v561
        %v563 = vand.u32 %v187, 4294901760
        %564 = vmatpush1.msra.mxu0 %v563
        %v565 = vand.u32 %v186, 4294901760
        %566 = vmatprep.subr.mxu0 %v565
        %v567 = vand.u32 %v185, 4294901760
        %568 = vmatpush1.msra.mxu0 %v567
        %569 = vmatprep.subr.mxu0 0.0
        %570 = vmatpush2.msra.mxu0 0.0
        %571 = vmatprep.subr.mxu0 0.0
        %572 = vmatpush2.msra.mxu0 0.0
        %573 = vmatprep.subr.mxu0 0.0
        %574 = vmatpush2.msra.mxu0 0.0
        %575 = vmatprep.subr.mxu0 0.0
        %576 = vmatpush2.msra.mxu0 0.0
        %577 = vmatprep.subr.mxu0 0.0
        %578 = vmatpush2.msra.mxu0 0.0
        %579 = vmatprep.subr.mxu0 0.0
        %580 = vmatpush2.msra.mxu0 0.0
        %581 = vmatprep.subr.mxu0 0.0
        %582 = vmatpush2.msra.mxu0 0.0
        %583 = vmatprep.subr.mxu0 0.0
        %584 = vmatpush2.msra.mxu0 0.0
        %585 = vmatprep.subr.mxu0 0.0
        %586 = vmatpush2.msra.mxu0 0.0
        %587 = vmatprep.subr.mxu0 0.0
        %588 = vmatpush2.msra.mxu0 0.0
        %589 = vmatprep.subr.mxu0 0.0
        %590 = vmatpush2.msra.mxu0 0.0
        %591 = vmatprep.subr.mxu0 0.0
        %592 = vmatpush2.msra.mxu0 0.0
        %593 = vmatprep.subr.mxu0 0.0
        %594 = vmatpush2.msra.mxu0 0.0
        %595 = vmatprep.subr.mxu0 0.0
        %596 = vmatpush2.msra.mxu0 0.0
        %597 = vmatprep.subr.mxu0 0.0
        %598 = vmatpush2.msra.mxu0 0.0
        %599 = vmatprep.subr.mxu0 0.0
        %600 = vmatpush2.msra.mxu0 0.0
        %601 = vmatprep.mubr.f32.mxu0 0.0
        %v602 = vand.u32 %v191, 4294901760
        %v603 = vsub.f32 %v191, %v602
        %v604 = vand.u32 %v603, 4294901760
        %605 = vmatmul.mubr.f32.gmra.mxu0 %v604
        %v606 = vpop.f32.mrf.mxu0
        %v607 = vadd.f32 %v505, %v606
        %v608 = vpop.f32.mrf.mxu0
        %v609 = vadd.f32 %v507, %v608
        %610 = vmatprep.mubr.f32.mxu0 0.0
        %v611 = vand.u32 %v194, 4294901760
        %v612 = vsub.f32 %v194, %v611
        %v613 = vand.u32 %v612, 4294901760
        %614 = vmatmul.mubr.f32.gmra.mxu0 %v613
        %v615 = vpop.f32.mrf.mxu0
        %v616 = vadd.f32 %v513, %v615
        %v617 = vpop.f32.mrf.mxu0
        %v618 = vadd.f32 %v515, %v617
        %619 = vmatprep.mubr.f32.mxu0 0.0
        %v620 = vand.u32 %v197, 4294901760
        %v621 = vsub.f32 %v197, %v620
        %v622 = vand.u32 %v621, 4294901760
        %623 = vmatmul.mubr.f32.gmra.mxu0 %v622
        %v624 = vpop.f32.mrf.mxu0
        %v625 = vadd.f32 %v521, %v624
        %v626 = vpop.f32.mrf.mxu0
        %v627 = vadd.f32 %v523, %v626
        %628 = vmatprep.mubr.f32.mxu0 0.0
        %v629 = vand.u32 %v200, 4294901760
        %v630 = vsub.f32 %v200, %v629
        %v631 = vand.u32 %v630, 4294901760
        %632 = vmatmul.mubr.f32.gmra.mxu0 %v631
        %v633 = vpop.f32.mrf.mxu0
        %v634 = vadd.f32 %v529, %v633
        %v635 = vpop.f32.mrf.mxu0
        %v636 = vadd.f32 %v531, %v635
        %637 = vdwg.mxu0
        %638 = vmatprep.subr.mxu0 0.0
        %639 = vmatpush1.msra.mxu0 0.0
        %640 = vmatprep.subr.mxu0 0.0
        %641 = vmatpush1.msra.mxu0 0.0
        %642 = vmatprep.subr.mxu0 0.0
        %643 = vmatpush1.msra.mxu0 0.0
        %644 = vmatprep.subr.mxu0 0.0
        %645 = vmatpush1.msra.mxu0 0.0
        %646 = vmatprep.subr.mxu0 0.0
        %647 = vmatpush1.msra.mxu0 0.0
        %648 = vmatprep.subr.mxu0 0.0
        %649 = vmatpush1.msra.mxu0 0.0
        %650 = vmatprep.subr.mxu0 0.0
        %651 = vmatpush1.msra.mxu0 0.0
        %652 = vmatprep.subr.mxu0 0.0
        %653 = vmatpush1.msra.mxu0 0.0
        %654 = vmatprep.subr.mxu0 0.0
        %655 = vmatpush1.msra.mxu0 0.0
        %656 = vmatprep.subr.mxu0 0.0
        %657 = vmatpush1.msra.mxu0 0.0
        %658 = vmatprep.subr.mxu0 0.0
        %659 = vmatpush1.msra.mxu0 0.0
        %660 = vmatprep.subr.mxu0 0.0
        %661 = vmatpush1.msra.mxu0 0.0
        %662 = vmatprep.subr.mxu0 0.0
        %663 = vmatpush1.msra.mxu0 0.0
        %664 = vmatprep.subr.mxu0 0.0
        %665 = vmatpush1.msra.mxu0 0.0
        %v666 = vand.u32 %v188, 4294901760
        %v667 = vsub.f32 %v188, %v666
        %v668 = vand.u32 %v667, 4294901760
        %669 = vmatprep.subr.mxu0 %v668
        %v670 = vand.u32 %v187, 4294901760
        %v671 = vsub.f32 %v187, %v670
        %v672 = vand.u32 %v671, 4294901760
        %673 = vmatpush1.msra.mxu0 %v672
        %v674 = vand.u32 %v186, 4294901760
        %v675 = vsub.f32 %v186, %v674
        %v676 = vand.u32 %v675, 4294901760
        %677 = vmatprep.subr.mxu0 %v676
        %v678 = vand.u32 %v185, 4294901760
        %v679 = vsub.f32 %v185, %v678
        %v680 = vand.u32 %v679, 4294901760
        %681 = vmatpush1.msra.mxu0 %v680
        %682 = vmatprep.subr.mxu0 0.0
        %683 = vmatpush2.msra.mxu0 0.0
        %684 = vmatprep.subr.mxu0 0.0
        %685 = vmatpush2.msra.mxu0 0.0
        %686 = vmatprep.subr.mxu0 0.0
        %687 = vmatpush2.msra.mxu0 0.0
        %688 = vmatprep.subr.mxu0 0.0
        %689 = vmatpush2.msra.mxu0 0.0
        %690 = vmatprep.subr.mxu0 0.0
        %691 = vmatpush2.msra.mxu0 0.0
        %692 = vmatprep.subr.mxu0 0.0
        %693 = vmatpush2.msra.mxu0 0.0
        %694 = vmatprep.subr.mxu0 0.0
        %695 = vmatpush2.msra.mxu0 0.0
        %696 = vmatprep.subr.mxu0 0.0
        %697 = vmatpush2.msra.mxu0 0.0
        %698 = vmatprep.subr.mxu0 0.0
        %699 = vmatpush2.msra.mxu0 0.0
        %700 = vmatprep.subr.mxu0 0.0
        %701 = vmatpush2.msra.mxu0 0.0
        %702 = vmatprep.subr.mxu0 0.0
        %703 = vmatpush2.msra.mxu0 0.0
        %704 = vmatprep.subr.mxu0 0.0
        %705 = vmatpush2.msra.mxu0 0.0
        %706 = vmatprep.subr.mxu0 0.0
        %707 = vmatpush2.msra.mxu0 0.0
        %708 = vmatprep.subr.mxu0 0.0
        %709 = vmatpush2.msra.mxu0 0.0
        %710 = vmatprep.subr.mxu0 0.0
        %711 = vmatpush2.msra.mxu0 0.0
        %712 = vmatprep.subr.mxu0 0.0
        %713 = vmatpush2.msra.mxu0 0.0
        %714 = vmatprep.mubr.f32.mxu0 0.0
        %v715 = vand.u32 %v191, 4294901760
        %716 = vmatmul.mubr.f32.gmra.mxu0 %v715
        %v717 = vpop.f32.mrf.mxu0
        %v718 = vadd.f32 %v607, %v717
        %v719 = vpop.f32.mrf.mxu0
        %v720 = vadd.f32 %v609, %v719
        %721 = vmatprep.mubr.f32.mxu0 0.0
        %v722 = vand.u32 %v194, 4294901760
        %723 = vmatmul.mubr.f32.gmra.mxu0 %v722
        %v724 = vpop.f32.mrf.mxu0
        %v725 = vadd.f32 %v616, %v724
        %v726 = vpop.f32.mrf.mxu0
        %v727 = vadd.f32 %v618, %v726
        %728 = vmatprep.mubr.f32.mxu0 0.0
        %v729 = vand.u32 %v197, 4294901760
        %730 = vmatmul.mubr.f32.gmra.mxu0 %v729
        %v731 = vpop.f32.mrf.mxu0
        %v732 = vadd.f32 %v625, %v731
        %v733 = vpop.f32.mrf.mxu0
        %v734 = vadd.f32 %v627, %v733
        %735 = vmatprep.mubr.f32.mxu0 0.0
        %v736 = vand.u32 %v200, 4294901760
        %737 = vmatmul.mubr.f32.gmra.mxu0 %v736
        %v738 = vpop.f32.mrf.mxu0
        %v739 = vadd.f32 %v634, %v738
        %v740 = vpop.f32.mrf.mxu0
        %v741 = vadd.f32 %v636, %v740
        %742 = vdwg.mxu0
        %743 = vmatprep.subr.mxu0 0.0
        %744 = vmatpush1.msra.mxu0 0.0
        %745 = vmatprep.subr.mxu0 0.0
        %746 = vmatpush1.msra.mxu0 0.0
        %747 = vmatprep.subr.mxu0 0.0
        %748 = vmatpush1.msra.mxu0 0.0
        %749 = vmatprep.subr.mxu0 0.0
        %750 = vmatpush1.msra.mxu0 0.0
        %751 = vmatprep.subr.mxu0 0.0
        %752 = vmatpush1.msra.mxu0 0.0
        %753 = vmatprep.subr.mxu0 0.0
        %754 = vmatpush1.msra.mxu0 0.0
        %755 = vmatprep.subr.mxu0 0.0
        %756 = vmatpush1.msra.mxu0 0.0
        %757 = vmatprep.subr.mxu0 0.0
        %758 = vmatpush1.msra.mxu0 0.0
        %759 = vmatprep.subr.mxu0 0.0
        %760 = vmatpush1.msra.mxu0 0.0
        %761 = vmatprep.subr.mxu0 0.0
        %762 = vmatpush1.msra.mxu0 0.0
        %763 = vmatprep.subr.mxu0 0.0
        %764 = vmatpush1.msra.mxu0 0.0
        %765 = vmatprep.subr.mxu0 0.0
        %766 = vmatpush1.msra.mxu0 0.0
        %767 = vmatprep.subr.mxu0 0.0
        %768 = vmatpush1.msra.mxu0 0.0
        %769 = vmatprep.subr.mxu0 0.0
        %770 = vmatpush1.msra.mxu0 0.0
        %v771 = vand.u32 %v188, 4294901760
        %772 = vmatprep.subr.mxu0 %v771
        %v773 = vand.u32 %v187, 4294901760
        %774 = vmatpush1.msra.mxu0 %v773
        %v775 = vand.u32 %v186, 4294901760
        %776 = vmatprep.subr.mxu0 %v775
        %v777 = vand.u32 %v185, 4294901760
        %778 = vmatpush1.msra.mxu0 %v777
        %779 = vmatprep.subr.mxu0 0.0
        %780 = vmatpush2.msra.mxu0 0.0
        %781 = vmatprep.subr.mxu0 0.0
        %782 = vmatpush2.msra.mxu0 0.0
        %783 = vmatprep.subr.mxu0 0.0
        %784 = vmatpush2.msra.mxu0 0.0
        %785 = vmatprep.subr.mxu0 0.0
        %786 = vmatpush2.msra.mxu0 0.0
        %787 = vmatprep.subr.mxu0 0.0
        %788 = vmatpush2.msra.mxu0 0.0
        %789 = vmatprep.subr.mxu0 0.0
        %790 = vmatpush2.msra.mxu0 0.0
        %791 = vmatprep.subr.mxu0 0.0
        %792 = vmatpush2.msra.mxu0 0.0
        %793 = vmatprep.subr.mxu0 0.0
        %794 = vmatpush2.msra.mxu0 0.0
        %795 = vmatprep.subr.mxu0 0.0
        %796 = vmatpush2.msra.mxu0 0.0
        %797 = vmatprep.subr.mxu0 0.0
        %798 = vmatpush2.msra.mxu0 0.0
        %799 = vmatprep.subr.mxu0 0.0
        %800 = vmatpush2.msra.mxu0 0.0
        %801 = vmatprep.subr.mxu0 0.0
        %802 = vmatpush2.msra.mxu0 0.0
        %803 = vmatprep.subr.mxu0 0.0
        %804 = vmatpush2.msra.mxu0 0.0
        %805 = vmatprep.subr.mxu0 0.0
        %806 = vmatpush2.msra.mxu0 0.0
        %807 = vmatprep.subr.mxu0 0.0
        %808 = vmatpush2.msra.mxu0 0.0
        %809 = vmatprep.subr.mxu0 0.0
        %810 = vmatpush2.msra.mxu0 0.0
        %811 = vmatprep.mubr.f32.mxu0 0.0
        %v812 = vand.u32 %v191, 4294901760
        %813 = vmatmul.mubr.f32.gmra.mxu0 %v812
        %v814 = vpop.f32.mrf.mxu0
        %v815 = vadd.f32 %v718, %v814
        %v816 = vpop.f32.mrf.mxu0
        %v817 = vadd.f32 %v720, %v816
        %818 = vmatprep.mubr.f32.mxu0 0.0
        %v819 = vand.u32 %v194, 4294901760
        %820 = vmatmul.mubr.f32.gmra.mxu0 %v819
        %v821 = vpop.f32.mrf.mxu0
        %v822 = vadd.f32 %v725, %v821
        %v823 = vpop.f32.mrf.mxu0
        %v824 = vadd.f32 %v727, %v823
        %825 = vmatprep.mubr.f32.mxu0 0.0
        %v826 = vand.u32 %v197, 4294901760
        %827 = vmatmul.mubr.f32.gmra.mxu0 %v826
        %v828 = vpop.f32.mrf.mxu0
        %v829 = vadd.f32 %v732, %v828
        %v830 = vpop.f32.mrf.mxu0
        %v831 = vadd.f32 %v734, %v830
        %832 = vmatprep.mubr.f32.mxu0 0.0
        %v833 = vand.u32 %v200, 4294901760
        %834 = vmatmul.mubr.f32.gmra.mxu0 %v833
        %v835 = vpop.f32.mrf.mxu0
        %v836 = vadd.f32 %v739, %v835
        %v837 = vpop.f32.mrf.mxu0
        %v838 = vadd.f32 %v741, %v837
        %839 = vdwg.mxu0
        %v840 = vmax.f32 %v815, 0.0
        %v841 = vmax.f32 %v817, 0.0
        %v842 = vmax.f32 %v822, 0.0
        %v843 = vmax.f32 %v824, 0.0
        %v844 = vmax.f32 %v829, 0.0
        %v845 = vmax.f32 %v831, 0.0
        %v846 = vmax.f32 %v836, 0.0
        %v847 = vmax.f32 %v838, 0.0
        %s848 = scalar_lea.vmem [#allocation3], 32
        %v849 = vld [vmem:[%s848] sm:$0xff]
        %v850 = vld [vmem:[%s848 + $0x8] sm:$0xff]
        %v851 = vld [vmem:[%s848 + $0x10] sm:$0xff]
        %v852 = vld [vmem:[%s848 + $0x18] sm:$0xff]
        %vm853 = vcmask 261120
        %v855 = vsel %vm853, %v849, 0
        %v858 = vsel %vm853, %v850, 0
        %v861 = vsel %vm853, %v851, 0
        %v864 = vsel %vm853, %v852, 0
        %866 = vmatprep.subr.mxu0 0.0
        %867 = vmatpush1.msra.mxu0 0.0
        %868 = vmatprep.subr.mxu0 0.0
        %869 = vmatpush1.msra.mxu0 0.0
        %870 = vmatprep.subr.mxu0 0.0
        %871 = vmatpush1.msra.mxu0 0.0
        %872 = vmatprep.subr.mxu0 0.0
        %873 = vmatpush1.msra.mxu0 0.0
        %874 = vmatprep.subr.mxu0 0.0
        %875 = vmatpush1.msra.mxu0 0.0
        %876 = vmatprep.subr.mxu0 0.0
        %877 = vmatpush1.msra.mxu0 0.0
        %878 = vmatprep.subr.mxu0 0.0
        %879 = vmatpush1.msra.mxu0 0.0
        %880 = vmatprep.subr.mxu0 0.0
        %881 = vmatpush1.msra.mxu0 0.0
        %882 = vmatprep.subr.mxu0 0.0
        %883 = vmatpush1.msra.mxu0 0.0
        %884 = vmatprep.subr.mxu0 0.0
        %885 = vmatpush1.msra.mxu0 0.0
        %886 = vmatprep.subr.mxu0 0.0
        %887 = vmatpush1.msra.mxu0 0.0
        %888 = vmatprep.subr.mxu0 0.0
        %889 = vmatpush1.msra.mxu0 0.0
        %v890 = vand.u32 %v847, 4294901760
        %891 = vmatprep.subr.mxu0 %v890
        %v892 = vand.u32 %v846, 4294901760
        %893 = vmatpush1.msra.mxu0 %v892
        %v894 = vand.u32 %v845, 4294901760
        %895 = vmatprep.subr.mxu0 %v894
        %v896 = vand.u32 %v844, 4294901760
        %897 = vmatpush1.msra.mxu0 %v896
        %v898 = vand.u32 %v843, 4294901760
        %899 = vmatprep.subr.mxu0 %v898
        %v900 = vand.u32 %v842, 4294901760
        %901 = vmatpush1.msra.mxu0 %v900
        %v902 = vand.u32 %v841, 4294901760
        %903 = vmatprep.subr.mxu0 %v902
        %v904 = vand.u32 %v840, 4294901760
        %905 = vmatpush1.msra.mxu0 %v904
        %906 = vmatprep.subr.mxu0 0.0
        %907 = vmatpush2.msra.mxu0 0.0
        %908 = vmatprep.subr.mxu0 0.0
        %909 = vmatpush2.msra.mxu0 0.0
        %910 = vmatprep.subr.mxu0 0.0
        %911 = vmatpush2.msra.mxu0 0.0
        %912 = vmatprep.subr.mxu0 0.0
        %913 = vmatpush2.msra.mxu0 0.0
        %914 = vmatprep.subr.mxu0 0.0
        %915 = vmatpush2.msra.mxu0 0.0
        %916 = vmatprep.subr.mxu0 0.0
        %917 = vmatpush2.msra.mxu0 0.0
        %918 = vmatprep.subr.mxu0 0.0
        %919 = vmatpush2.msra.mxu0 0.0
        %920 = vmatprep.subr.mxu0 0.0
        %921 = vmatpush2.msra.mxu0 0.0
        %922 = vmatprep.subr.mxu0 0.0
        %923 = vmatpush2.msra.mxu0 0.0
        %924 = vmatprep.subr.mxu0 0.0
        %925 = vmatpush2.msra.mxu0 0.0
        %926 = vmatprep.subr.mxu0 0.0
        %927 = vmatpush2.msra.mxu0 0.0
        %928 = vmatprep.subr.mxu0 0.0
        %929 = vmatpush2.msra.mxu0 0.0
        %930 = vmatprep.subr.mxu0 0.0
        %931 = vmatpush2.msra.mxu0 0.0
        %932 = vmatprep.subr.mxu0 0.0
        %933 = vmatpush2.msra.mxu0 0.0
        %934 = vmatprep.subr.mxu0 0.0
        %935 = vmatpush2.msra.mxu0 0.0
        %936 = vmatprep.subr.mxu0 0.0
        %937 = vmatpush2.msra.mxu0 0.0
        %938 = vmatprep.mubr.f32.mxu0 0.0
        %v939 = vand.u32 %v855, 4294901760
        %v940 = vsub.f32 %v855, %v939
        %v941 = vand.u32 %v940, 4294901760
        %v942 = vsub.f32 %v940, %v941
        %v943 = vand.u32 %v942, 4294901760
        %944 = vmatmul.mubr.f32.gmra.mxu0 %v943
        %v945 = vpop.f32.mrf.mxu0
        %v946 = vadd.f32 0.0, %v945
        %v947 = vpop.f32.mrf.mxu0
        %v948 = vadd.f32 0.0, %v947
        %949 = vmatprep.mubr.f32.mxu0 0.0
        %v950 = vand.u32 %v858, 4294901760
        %v951 = vsub.f32 %v858, %v950
        %v952 = vand.u32 %v951, 4294901760
        %v953 = vsub.f32 %v951, %v952
        %v954 = vand.u32 %v953, 4294901760
        %955 = vmatmul.mubr.f32.gmra.mxu0 %v954
        %v956 = vpop.f32.mrf.mxu0
        %v957 = vadd.f32 0.0, %v956
        %v958 = vpop.f32.mrf.mxu0
        %v959 = vadd.f32 0.0, %v958
        %960 = vmatprep.mubr.f32.mxu0 0.0
        %v961 = vand.u32 %v861, 4294901760
        %v962 = vsub.f32 %v861, %v961
        %v963 = vand.u32 %v962, 4294901760
        %v964 = vsub.f32 %v962, %v963
        %v965 = vand.u32 %v964, 4294901760
        %966 = vmatmul.mubr.f32.gmra.mxu0 %v965
        %v967 = vpop.f32.mrf.mxu0
        %v968 = vadd.f32 0.0, %v967
        %v969 = vpop.f32.mrf.mxu0
        %v970 = vadd.f32 0.0, %v969
        %971 = vmatprep.mubr.f32.mxu0 0.0
        %v972 = vand.u32 %v864, 4294901760
        %v973 = vsub.f32 %v864, %v972
        %v974 = vand.u32 %v973, 4294901760
        %v975 = vsub.f32 %v973, %v974
        %v976 = vand.u32 %v975, 4294901760
        %977 = vmatmul.mubr.f32.gmra.mxu0 %v976
        %v978 = vpop.f32.mrf.mxu0
        %v979 = vadd.f32 0.0, %v978
        %v980 = vpop.f32.mrf.mxu0
        %v981 = vadd.f32 0.0, %v980
        %982 = vdwg.mxu0
        %983 = vmatprep.subr.mxu0 0.0
        %984 = vmatpush1.msra.mxu0 0.0
        %985 = vmatprep.subr.mxu0 0.0
        %986 = vmatpush1.msra.mxu0 0.0
        %987 = vmatprep.subr.mxu0 0.0
        %988 = vmatpush1.msra.mxu0 0.0
        %989 = vmatprep.subr.mxu0 0.0
        %990 = vmatpush1.msra.mxu0 0.0
        %991 = vmatprep.subr.mxu0 0.0
        %992 = vmatpush1.msra.mxu0 0.0
        %993 = vmatprep.subr.mxu0 0.0
        %994 = vmatpush1.msra.mxu0 0.0
        %995 = vmatprep.subr.mxu0 0.0
        %996 = vmatpush1.msra.mxu0 0.0
        %997 = vmatprep.subr.mxu0 0.0
        %998 = vmatpush1.msra.mxu0 0.0
        %999 = vmatprep.subr.mxu0 0.0
        %1000 = vmatpush1.msra.mxu0 0.0
        %1001 = vmatprep.subr.mxu0 0.0
        %1002 = vmatpush1.msra.mxu0 0.0
        %1003 = vmatprep.subr.mxu0 0.0
        %1004 = vmatpush1.msra.mxu0 0.0
        %1005 = vmatprep.subr.mxu0 0.0
        %1006 = vmatpush1.msra.mxu0 0.0
        %v1007 = vand.u32 %v847, 4294901760
        %v1008 = vsub.f32 %v847, %v1007
        %v1009 = vand.u32 %v1008, 4294901760
        %v1010 = vsub.f32 %v1008, %v1009
        %v1011 = vand.u32 %v1010, 4294901760
        %1012 = vmatprep.subr.mxu0 %v1011
        %v1013 = vand.u32 %v846, 4294901760
        %v1014 = vsub.f32 %v846, %v1013
        %v1015 = vand.u32 %v1014, 4294901760
        %v1016 = vsub.f32 %v1014, %v1015
        %v1017 = vand.u32 %v1016, 4294901760
        %1018 = vmatpush1.msra.mxu0 %v1017
        %v1019 = vand.u32 %v845, 4294901760
        %v1020 = vsub.f32 %v845, %v1019
        %v1021 = vand.u32 %v1020, 4294901760
        %v1022 = vsub.f32 %v1020, %v1021
        %v1023 = vand.u32 %v1022, 4294901760
        %1024 = vmatprep.subr.mxu0 %v1023
        %v1025 = vand.u32 %v844, 4294901760
        %v1026 = vsub.f32 %v844, %v1025
        %v1027 = vand.u32 %v1026, 4294901760
        %v1028 = vsub.f32 %v1026, %v1027
        %v1029 = vand.u32 %v1028, 4294901760
        %1030 = vmatpush1.msra.mxu0 %v1029
        %v1031 = vand.u32 %v843, 4294901760
        %v1032 = vsub.f32 %v843, %v1031
        %v1033 = vand.u32 %v1032, 4294901760
        %v1034 = vsub.f32 %v1032, %v1033
        %v1035 = vand.u32 %v1034, 4294901760
        %1036 = vmatprep.subr.mxu0 %v1035
        %v1037 = vand.u32 %v842, 4294901760
        %v1038 = vsub.f32 %v842, %v1037
        %v1039 = vand.u32 %v1038, 4294901760
        %v1040 = vsub.f32 %v1038, %v1039
        %v1041 = vand.u32 %v1040, 4294901760
        %1042 = vmatpush1.msra.mxu0 %v1041
        %v1043 = vand.u32 %v841, 4294901760
        %v1044 = vsub.f32 %v841, %v1043
        %v1045 = vand.u32 %v1044, 4294901760
        %v1046 = vsub.f32 %v1044, %v1045
        %v1047 = vand.u32 %v1046, 4294901760
        %1048 = vmatprep.subr.mxu0 %v1047
        %v1049 = vand.u32 %v840, 4294901760
        %v1050 = vsub.f32 %v840, %v1049
        %v1051 = vand.u32 %v1050, 4294901760
        %v1052 = vsub.f32 %v1050, %v1051
        %v1053 = vand.u32 %v1052, 4294901760
        %1054 = vmatpush1.msra.mxu0 %v1053
        %1055 = vmatprep.subr.mxu0 0.0
        %1056 = vmatpush2.msra.mxu0 0.0
        %1057 = vmatprep.subr.mxu0 0.0
        %1058 = vmatpush2.msra.mxu0 0.0
        %1059 = vmatprep.subr.mxu0 0.0
        %1060 = vmatpush2.msra.mxu0 0.0
        %1061 = vmatprep.subr.mxu0 0.0
        %1062 = vmatpush2.msra.mxu0 0.0
        %1063 = vmatprep.subr.mxu0 0.0
        %1064 = vmatpush2.msra.mxu0 0.0
        %1065 = vmatprep.subr.mxu0 0.0
        %1066 = vmatpush2.msra.mxu0 0.0
        %1067 = vmatprep.subr.mxu0 0.0
        %1068 = vmatpush2.msra.mxu0 0.0
        %1069 = vmatprep.subr.mxu0 0.0
        %1070 = vmatpush2.msra.mxu0 0.0
        %1071 = vmatprep.subr.mxu0 0.0
        %1072 = vmatpush2.msra.mxu0 0.0
        %1073 = vmatprep.subr.mxu0 0.0
        %1074 = vmatpush2.msra.mxu0 0.0
        %1075 = vmatprep.subr.mxu0 0.0
        %1076 = vmatpush2.msra.mxu0 0.0
        %1077 = vmatprep.subr.mxu0 0.0
        %1078 = vmatpush2.msra.mxu0 0.0
        %1079 = vmatprep.subr.mxu0 0.0
        %1080 = vmatpush2.msra.mxu0 0.0
        %1081 = vmatprep.subr.mxu0 0.0
        %1082 = vmatpush2.msra.mxu0 0.0
        %1083 = vmatprep.subr.mxu0 0.0
        %1084 = vmatpush2.msra.mxu0 0.0
        %1085 = vmatprep.subr.mxu0 0.0
        %1086 = vmatpush2.msra.mxu0 0.0
        %1087 = vmatprep.mubr.f32.mxu0 0.0
        %v1088 = vand.u32 %v855, 4294901760
        %1089 = vmatmul.mubr.f32.gmra.mxu0 %v1088
        %v1090 = vpop.f32.mrf.mxu0
        %v1091 = vadd.f32 %v946, %v1090
        %v1092 = vpop.f32.mrf.mxu0
        %v1093 = vadd.f32 %v948, %v1092
        %1094 = vmatprep.mubr.f32.mxu0 0.0
        %v1095 = vand.u32 %v858, 4294901760
        %1096 = vmatmul.mubr.f32.gmra.mxu0 %v1095
        %v1097 = vpop.f32.mrf.mxu0
        %v1098 = vadd.f32 %v957, %v1097
        %v1099 = vpop.f32.mrf.mxu0
        %v1100 = vadd.f32 %v959, %v1099
        %1101 = vmatprep.mubr.f32.mxu0 0.0
        %v1102 = vand.u32 %v861, 4294901760
        %1103 = vmatmul.mubr.f32.gmra.mxu0 %v1102
        %v1104 = vpop.f32.mrf.mxu0
        %v1105 = vadd.f32 %v968, %v1104
        %v1106 = vpop.f32.mrf.mxu0
        %v1107 = vadd.f32 %v970, %v1106
        %1108 = vmatprep.mubr.f32.mxu0 0.0
        %v1109 = vand.u32 %v864, 4294901760
        %1110 = vmatmul.mubr.f32.gmra.mxu0 %v1109
        %v1111 = vpop.f32.mrf.mxu0
        %v1112 = vadd.f32 %v979, %v1111
        %v1113 = vpop.f32.mrf.mxu0
        %v1114 = vadd.f32 %v981, %v1113
        %1115 = vdwg.mxu0
        %1116 = vmatprep.subr.mxu0 0.0
        %1117 = vmatpush1.msra.mxu0 0.0
        %1118 = vmatprep.subr.mxu0 0.0
        %1119 = vmatpush1.msra.mxu0 0.0
        %1120 = vmatprep.subr.mxu0 0.0
        %1121 = vmatpush1.msra.mxu0 0.0
        %1122 = vmatprep.subr.mxu0 0.0
        %1123 = vmatpush1.msra.mxu0 0.0
        %1124 = vmatprep.subr.mxu0 0.0
        %1125 = vmatpush1.msra.mxu0 0.0
        %1126 = vmatprep.subr.mxu0 0.0
        %1127 = vmatpush1.msra.mxu0 0.0
        %1128 = vmatprep.subr.mxu0 0.0
        %1129 = vmatpush1.msra.mxu0 0.0
        %1130 = vmatprep.subr.mxu0 0.0
        %1131 = vmatpush1.msra.mxu0 0.0
        %1132 = vmatprep.subr.mxu0 0.0
        %1133 = vmatpush1.msra.mxu0 0.0
        %1134 = vmatprep.subr.mxu0 0.0
        %1135 = vmatpush1.msra.mxu0 0.0
        %1136 = vmatprep.subr.mxu0 0.0
        %1137 = vmatpush1.msra.mxu0 0.0
        %1138 = vmatprep.subr.mxu0 0.0
        %1139 = vmatpush1.msra.mxu0 0.0
        %v1140 = vand.u32 %v847, 4294901760
        %v1141 = vsub.f32 %v847, %v1140
        %1142 = vmatprep.subr.mxu0 %v1141
        %v1143 = vand.u32 %v846, 4294901760
        %v1144 = vsub.f32 %v846, %v1143
        %1145 = vmatpush1.msra.mxu0 %v1144
        %v1146 = vand.u32 %v845, 4294901760
        %v1147 = vsub.f32 %v845, %v1146
        %1148 = vmatprep.subr.mxu0 %v1147
        %v1149 = vand.u32 %v844, 4294901760
        %v1150 = vsub.f32 %v844, %v1149
        %1151 = vmatpush1.msra.mxu0 %v1150
        %v1152 = vand.u32 %v843, 4294901760
        %v1153 = vsub.f32 %v843, %v1152
        %1154 = vmatprep.subr.mxu0 %v1153
        %v1155 = vand.u32 %v842, 4294901760
        %v1156 = vsub.f32 %v842, %v1155
        %1157 = vmatpush1.msra.mxu0 %v1156
        %v1158 = vand.u32 %v841, 4294901760
        %v1159 = vsub.f32 %v841, %v1158
        %1160 = vmatprep.subr.mxu0 %v1159
        %v1161 = vand.u32 %v840, 4294901760
        %v1162 = vsub.f32 %v840, %v1161
        %1163 = vmatpush1.msra.mxu0 %v1162
        %1164 = vmatprep.subr.mxu0 0.0
        %1165 = vmatpush2.msra.mxu0 0.0
        %1166 = vmatprep.subr.mxu0 0.0
        %1167 = vmatpush2.msra.mxu0 0.0
        %1168 = vmatprep.subr.mxu0 0.0
        %1169 = vmatpush2.msra.mxu0 0.0
        %1170 = vmatprep.subr.mxu0 0.0
        %1171 = vmatpush2.msra.mxu0 0.0
        %1172 = vmatprep.subr.mxu0 0.0
        %1173 = vmatpush2.msra.mxu0 0.0
        %1174 = vmatprep.subr.mxu0 0.0
        %1175 = vmatpush2.msra.mxu0 0.0
        %1176 = vmatprep.subr.mxu0 0.0
        %1177 = vmatpush2.msra.mxu0 0.0
        %1178 = vmatprep.subr.mxu0 0.0
        %1179 = vmatpush2.msra.mxu0 0.0
        %1180 = vmatprep.subr.mxu0 0.0
        %1181 = vmatpush2.msra.mxu0 0.0
        %1182 = vmatprep.subr.mxu0 0.0
        %1183 = vmatpush2.msra.mxu0 0.0
        %1184 = vmatprep.subr.mxu0 0.0
        %1185 = vmatpush2.msra.mxu0 0.0
        %1186 = vmatprep.subr.mxu0 0.0
        %1187 = vmatpush2.msra.mxu0 0.0
        %1188 = vmatprep.subr.mxu0 0.0
        %1189 = vmatpush2.msra.mxu0 0.0
        %1190 = vmatprep.subr.mxu0 0.0
        %1191 = vmatpush2.msra.mxu0 0.0
        %1192 = vmatprep.subr.mxu0 0.0
        %1193 = vmatpush2.msra.mxu0 0.0
        %1194 = vmatprep.subr.mxu0 0.0
        %1195 = vmatpush2.msra.mxu0 0.0
        %1196 = vmatprep.mubr.f32.mxu0 0.0
        %v1197 = vand.u32 %v855, 4294901760
        %v1198 = vsub.f32 %v855, %v1197
        %1199 = vmatmul.mubr.f32.gmra.mxu0 %v1198
        %v1200 = vpop.f32.mrf.mxu0
        %v1201 = vadd.f32 %v1091, %v1200
        %v1202 = vpop.f32.mrf.mxu0
        %v1203 = vadd.f32 %v1093, %v1202
        %1204 = vmatprep.mubr.f32.mxu0 0.0
        %v1205 = vand.u32 %v858, 4294901760
        %v1206 = vsub.f32 %v858, %v1205
        %1207 = vmatmul.mubr.f32.gmra.mxu0 %v1206
        %v1208 = vpop.f32.mrf.mxu0
        %v1209 = vadd.f32 %v1098, %v1208
        %v1210 = vpop.f32.mrf.mxu0
        %v1211 = vadd.f32 %v1100, %v1210
        %1212 = vmatprep.mubr.f32.mxu0 0.0
        %v1213 = vand.u32 %v861, 4294901760
        %v1214 = vsub.f32 %v861, %v1213
        %1215 = vmatmul.mubr.f32.gmra.mxu0 %v1214
        %v1216 = vpop.f32.mrf.mxu0
        %v1217 = vadd.f32 %v1105, %v1216
        %v1218 = vpop.f32.mrf.mxu0
        %v1219 = vadd.f32 %v1107, %v1218
        %1220 = vmatprep.mubr.f32.mxu0 0.0
        %v1221 = vand.u32 %v864, 4294901760
        %v1222 = vsub.f32 %v864, %v1221
        %1223 = vmatmul.mubr.f32.gmra.mxu0 %v1222
        %v1224 = vpop.f32.mrf.mxu0
        %v1225 = vadd.f32 %v1112, %v1224
        %v1226 = vpop.f32.mrf.mxu0
        %v1227 = vadd.f32 %v1114, %v1226
        %1228 = vdwg.mxu0
        %1229 = vmatprep.subr.mxu0 0.0
        %1230 = vmatpush1.msra.mxu0 0.0
        %1231 = vmatprep.subr.mxu0 0.0
        %1232 = vmatpush1.msra.mxu0 0.0
        %1233 = vmatprep.subr.mxu0 0.0
        %1234 = vmatpush1.msra.mxu0 0.0
        %1235 = vmatprep.subr.mxu0 0.0
        %1236 = vmatpush1.msra.mxu0 0.0
        %1237 = vmatprep.subr.mxu0 0.0
        %1238 = vmatpush1.msra.mxu0 0.0
        %1239 = vmatprep.subr.mxu0 0.0
        %1240 = vmatpush1.msra.mxu0 0.0
        %1241 = vmatprep.subr.mxu0 0.0
        %1242 = vmatpush1.msra.mxu0 0.0
        %1243 = vmatprep.subr.mxu0 0.0
        %1244 = vmatpush1.msra.mxu0 0.0
        %1245 = vmatprep.subr.mxu0 0.0
        %1246 = vmatpush1.msra.mxu0 0.0
        %1247 = vmatprep.subr.mxu0 0.0
        %1248 = vmatpush1.msra.mxu0 0.0
        %1249 = vmatprep.subr.mxu0 0.0
        %1250 = vmatpush1.msra.mxu0 0.0
        %1251 = vmatprep.subr.mxu0 0.0
        %1252 = vmatpush1.msra.mxu0 0.0
        %v1253 = vand.u32 %v847, 4294901760
        %1254 = vmatprep.subr.mxu0 %v1253
        %v1255 = vand.u32 %v846, 4294901760
        %1256 = vmatpush1.msra.mxu0 %v1255
        %v1257 = vand.u32 %v845, 4294901760
        %1258 = vmatprep.subr.mxu0 %v1257
        %v1259 = vand.u32 %v844, 4294901760
        %1260 = vmatpush1.msra.mxu0 %v1259
        %v1261 = vand.u32 %v843, 4294901760
        %1262 = vmatprep.subr.mxu0 %v1261
        %v1263 = vand.u32 %v842, 4294901760
        %1264 = vmatpush1.msra.mxu0 %v1263
        %v1265 = vand.u32 %v841, 4294901760
        %1266 = vmatprep.subr.mxu0 %v1265
        %v1267 = vand.u32 %v840, 4294901760
        %1268 = vmatpush1.msra.mxu0 %v1267
        %1269 = vmatprep.subr.mxu0 0.0
        %1270 = vmatpush2.msra.mxu0 0.0
        %1271 = vmatprep.subr.mxu0 0.0
        %1272 = vmatpush2.msra.mxu0 0.0
        %1273 = vmatprep.subr.mxu0 0.0
        %1274 = vmatpush2.msra.mxu0 0.0
        %1275 = vmatprep.subr.mxu0 0.0
        %1276 = vmatpush2.msra.mxu0 0.0
        %1277 = vmatprep.subr.mxu0 0.0
        %1278 = vmatpush2.msra.mxu0 0.0
        %1279 = vmatprep.subr.mxu0 0.0
        %1280 = vmatpush2.msra.mxu0 0.0
        %1281 = vmatprep.subr.mxu0 0.0
        %1282 = vmatpush2.msra.mxu0 0.0
        %1283 = vmatprep.subr.mxu0 0.0
        %1284 = vmatpush2.msra.mxu0 0.0
        %1285 = vmatprep.subr.mxu0 0.0
        %1286 = vmatpush2.msra.mxu0 0.0
        %1287 = vmatprep.subr.mxu0 0.0
        %1288 = vmatpush2.msra.mxu0 0.0
        %1289 = vmatprep.subr.mxu0 0.0
        %1290 = vmatpush2.msra.mxu0 0.0
        %1291 = vmatprep.subr.mxu0 0.0
        %1292 = vmatpush2.msra.mxu0 0.0
        %1293 = vmatprep.subr.mxu0 0.0
        %1294 = vmatpush2.msra.mxu0 0.0
        %1295 = vmatprep.subr.mxu0 0.0
        %1296 = vmatpush2.msra.mxu0 0.0
        %1297 = vmatprep.subr.mxu0 0.0
        %1298 = vmatpush2.msra.mxu0 0.0
        %1299 = vmatprep.subr.mxu0 0.0
        %1300 = vmatpush2.msra.mxu0 0.0
        %1301 = vmatprep.mubr.f32.mxu0 0.0
        %v1302 = vand.u32 %v855, 4294901760
        %v1303 = vsub.f32 %v855, %v1302
        %v1304 = vand.u32 %v1303, 4294901760
        %1305 = vmatmul.mubr.f32.gmra.mxu0 %v1304
        %v1306 = vpop.f32.mrf.mxu0
        %v1307 = vadd.f32 %v1201, %v1306
        %v1308 = vpop.f32.mrf.mxu0
        %v1309 = vadd.f32 %v1203, %v1308
        %1310 = vmatprep.mubr.f32.mxu0 0.0
        %v1311 = vand.u32 %v858, 4294901760
        %v1312 = vsub.f32 %v858, %v1311
        %v1313 = vand.u32 %v1312, 4294901760
        %1314 = vmatmul.mubr.f32.gmra.mxu0 %v1313
        %v1315 = vpop.f32.mrf.mxu0
        %v1316 = vadd.f32 %v1209, %v1315
        %v1317 = vpop.f32.mrf.mxu0
        %v1318 = vadd.f32 %v1211, %v1317
        %1319 = vmatprep.mubr.f32.mxu0 0.0
        %v1320 = vand.u32 %v861, 4294901760
        %v1321 = vsub.f32 %v861, %v1320
        %v1322 = vand.u32 %v1321, 4294901760
        %1323 = vmatmul.mubr.f32.gmra.mxu0 %v1322
        %v1324 = vpop.f32.mrf.mxu0
        %v1325 = vadd.f32 %v1217, %v1324
        %v1326 = vpop.f32.mrf.mxu0
        %v1327 = vadd.f32 %v1219, %v1326
        %1328 = vmatprep.mubr.f32.mxu0 0.0
        %v1329 = vand.u32 %v864, 4294901760
        %v1330 = vsub.f32 %v864, %v1329
        %v1331 = vand.u32 %v1330, 4294901760
        %1332 = vmatmul.mubr.f32.gmra.mxu0 %v1331
        %v1333 = vpop.f32.mrf.mxu0
        %v1334 = vadd.f32 %v1225, %v1333
        %v1335 = vpop.f32.mrf.mxu0
        %v1336 = vadd.f32 %v1227, %v1335
        %1337 = vdwg.mxu0
        %1338 = vmatprep.subr.mxu0 0.0
        %1339 = vmatpush1.msra.mxu0 0.0
        %1340 = vmatprep.subr.mxu0 0.0
        %1341 = vmatpush1.msra.mxu0 0.0
        %1342 = vmatprep.subr.mxu0 0.0
        %1343 = vmatpush1.msra.mxu0 0.0
        %1344 = vmatprep.subr.mxu0 0.0
        %1345 = vmatpush1.msra.mxu0 0.0
        %1346 = vmatprep.subr.mxu0 0.0
        %1347 = vmatpush1.msra.mxu0 0.0
        %1348 = vmatprep.subr.mxu0 0.0
        %1349 = vmatpush1.msra.mxu0 0.0
        %1350 = vmatprep.subr.mxu0 0.0
        %1351 = vmatpush1.msra.mxu0 0.0
        %1352 = vmatprep.subr.mxu0 0.0
        %1353 = vmatpush1.msra.mxu0 0.0
        %1354 = vmatprep.subr.mxu0 0.0
        %1355 = vmatpush1.msra.mxu0 0.0
        %1356 = vmatprep.subr.mxu0 0.0
        %1357 = vmatpush1.msra.mxu0 0.0
        %1358 = vmatprep.subr.mxu0 0.0
        %1359 = vmatpush1.msra.mxu0 0.0
        %1360 = vmatprep.subr.mxu0 0.0
        %1361 = vmatpush1.msra.mxu0 0.0
        %v1362 = vand.u32 %v847, 4294901760
        %v1363 = vsub.f32 %v847, %v1362
        %v1364 = vand.u32 %v1363, 4294901760
        %1365 = vmatprep.subr.mxu0 %v1364
        %v1366 = vand.u32 %v846, 4294901760
        %v1367 = vsub.f32 %v846, %v1366
        %v1368 = vand.u32 %v1367, 4294901760
        %1369 = vmatpush1.msra.mxu0 %v1368
        %v1370 = vand.u32 %v845, 4294901760
        %v1371 = vsub.f32 %v845, %v1370
        %v1372 = vand.u32 %v1371, 4294901760
        %1373 = vmatprep.subr.mxu0 %v1372
        %v1374 = vand.u32 %v844, 4294901760
        %v1375 = vsub.f32 %v844, %v1374
        %v1376 = vand.u32 %v1375, 4294901760
        %1377 = vmatpush1.msra.mxu0 %v1376
        %v1378 = vand.u32 %v843, 4294901760
        %v1379 = vsub.f32 %v843, %v1378
        %v1380 = vand.u32 %v1379, 4294901760
        %1381 = vmatprep.subr.mxu0 %v1380
        %v1382 = vand.u32 %v842, 4294901760
        %v1383 = vsub.f32 %v842, %v1382
        %v1384 = vand.u32 %v1383, 4294901760
        %1385 = vmatpush1.msra.mxu0 %v1384
        %v1386 = vand.u32 %v841, 4294901760
        %v1387 = vsub.f32 %v841, %v1386
        %v1388 = vand.u32 %v1387, 4294901760
        %1389 = vmatprep.subr.mxu0 %v1388
        %v1390 = vand.u32 %v840, 4294901760
        %v1391 = vsub.f32 %v840, %v1390
        %v1392 = vand.u32 %v1391, 4294901760
        %1393 = vmatpush1.msra.mxu0 %v1392
        %1394 = vmatprep.subr.mxu0 0.0
        %1395 = vmatpush2.msra.mxu0 0.0
        %1396 = vmatprep.subr.mxu0 0.0
        %1397 = vmatpush2.msra.mxu0 0.0
        %1398 = vmatprep.subr.mxu0 0.0
        %1399 = vmatpush2.msra.mxu0 0.0
        %1400 = vmatprep.subr.mxu0 0.0
        %1401 = vmatpush2.msra.mxu0 0.0
        %1402 = vmatprep.subr.mxu0 0.0
        %1403 = vmatpush2.msra.mxu0 0.0
        %1404 = vmatprep.subr.mxu0 0.0
        %1405 = vmatpush2.msra.mxu0 0.0
        %1406 = vmatprep.subr.mxu0 0.0
        %1407 = vmatpush2.msra.mxu0 0.0
        %1408 = vmatprep.subr.mxu0 0.0
        %1409 = vmatpush2.msra.mxu0 0.0
        %1410 = vmatprep.subr.mxu0 0.0
        %1411 = vmatpush2.msra.mxu0 0.0
        %1412 = vmatprep.subr.mxu0 0.0
        %1413 = vmatpush2.msra.mxu0 0.0
        %1414 = vmatprep.subr.mxu0 0.0
        %1415 = vmatpush2.msra.mxu0 0.0
        %1416 = vmatprep.subr.mxu0 0.0
        %1417 = vmatpush2.msra.mxu0 0.0
        %1418 = vmatprep.subr.mxu0 0.0
        %1419 = vmatpush2.msra.mxu0 0.0
        %1420 = vmatprep.subr.mxu0 0.0
        %1421 = vmatpush2.msra.mxu0 0.0
        %1422 = vmatprep.subr.mxu0 0.0
        %1423 = vmatpush2.msra.mxu0 0.0
        %1424 = vmatprep.subr.mxu0 0.0
        %1425 = vmatpush2.msra.mxu0 0.0
        %1426 = vmatprep.mubr.f32.mxu0 0.0
        %v1427 = vand.u32 %v855, 4294901760
        %1428 = vmatmul.mubr.f32.gmra.mxu0 %v1427
        %v1429 = vpop.f32.mrf.mxu0
        %v1430 = vadd.f32 %v1307, %v1429
        %v1431 = vpop.f32.mrf.mxu0
        %v1432 = vadd.f32 %v1309, %v1431
        %1433 = vmatprep.mubr.f32.mxu0 0.0
        %v1434 = vand.u32 %v858, 4294901760
        %1435 = vmatmul.mubr.f32.gmra.mxu0 %v1434
        %v1436 = vpop.f32.mrf.mxu0
        %v1437 = vadd.f32 %v1316, %v1436
        %v1438 = vpop.f32.mrf.mxu0
        %v1439 = vadd.f32 %v1318, %v1438
        %1440 = vmatprep.mubr.f32.mxu0 0.0
        %v1441 = vand.u32 %v861, 4294901760
        %1442 = vmatmul.mubr.f32.gmra.mxu0 %v1441
        %v1443 = vpop.f32.mrf.mxu0
        %v1444 = vadd.f32 %v1325, %v1443
        %v1445 = vpop.f32.mrf.mxu0
        %v1446 = vadd.f32 %v1327, %v1445
        %1447 = vmatprep.mubr.f32.mxu0 0.0
        %v1448 = vand.u32 %v864, 4294901760
        %1449 = vmatmul.mubr.f32.gmra.mxu0 %v1448
        %v1450 = vpop.f32.mrf.mxu0
        %v1451 = vadd.f32 %v1334, %v1450
        %v1452 = vpop.f32.mrf.mxu0
        %v1453 = vadd.f32 %v1336, %v1452
        %1454 = vdwg.mxu0
        %1455 = vmatprep.subr.mxu0 0.0
        %1456 = vmatpush1.msra.mxu0 0.0
        %1457 = vmatprep.subr.mxu0 0.0
        %1458 = vmatpush1.msra.mxu0 0.0
        %1459 = vmatprep.subr.mxu0 0.0
        %1460 = vmatpush1.msra.mxu0 0.0
        %1461 = vmatprep.subr.mxu0 0.0
        %1462 = vmatpush1.msra.mxu0 0.0
        %1463 = vmatprep.subr.mxu0 0.0
        %1464 = vmatpush1.msra.mxu0 0.0
        %1465 = vmatprep.subr.mxu0 0.0
        %1466 = vmatpush1.msra.mxu0 0.0
        %1467 = vmatprep.subr.mxu0 0.0
        %1468 = vmatpush1.msra.mxu0 0.0
        %1469 = vmatprep.subr.mxu0 0.0
        %1470 = vmatpush1.msra.mxu0 0.0
        %1471 = vmatprep.subr.mxu0 0.0
        %1472 = vmatpush1.msra.mxu0 0.0
        %1473 = vmatprep.subr.mxu0 0.0
        %1474 = vmatpush1.msra.mxu0 0.0
        %1475 = vmatprep.subr.mxu0 0.0
        %1476 = vmatpush1.msra.mxu0 0.0
        %1477 = vmatprep.subr.mxu0 0.0
        %1478 = vmatpush1.msra.mxu0 0.0
        %v1479 = vand.u32 %v847, 4294901760
        %1480 = vmatprep.subr.mxu0 %v1479
        %v1481 = vand.u32 %v846, 4294901760
        %1482 = vmatpush1.msra.mxu0 %v1481
        %v1483 = vand.u32 %v845, 4294901760
        %1484 = vmatprep.subr.mxu0 %v1483
        %v1485 = vand.u32 %v844, 4294901760
        %1486 = vmatpush1.msra.mxu0 %v1485
        %v1487 = vand.u32 %v843, 4294901760
        %1488 = vmatprep.subr.mxu0 %v1487
        %v1489 = vand.u32 %v842, 4294901760
        %1490 = vmatpush1.msra.mxu0 %v1489
        %v1491 = vand.u32 %v841, 4294901760
        %1492 = vmatprep.subr.mxu0 %v1491
        %v1493 = vand.u32 %v840, 4294901760
        %1494 = vmatpush1.msra.mxu0 %v1493
        %1495 = vmatprep.subr.mxu0 0.0
        %1496 = vmatpush2.msra.mxu0 0.0
        %1497 = vmatprep.subr.mxu0 0.0
        %1498 = vmatpush2.msra.mxu0 0.0
        %1499 = vmatprep.subr.mxu0 0.0
        %1500 = vmatpush2.msra.mxu0 0.0
        %1501 = vmatprep.subr.mxu0 0.0
        %1502 = vmatpush2.msra.mxu0 0.0
        %1503 = vmatprep.subr.mxu0 0.0
        %1504 = vmatpush2.msra.mxu0 0.0
        %1505 = vmatprep.subr.mxu0 0.0
        %1506 = vmatpush2.msra.mxu0 0.0
        %1507 = vmatprep.subr.mxu0 0.0
        %1508 = vmatpush2.msra.mxu0 0.0
        %1509 = vmatprep.subr.mxu0 0.0
        %1510 = vmatpush2.msra.mxu0 0.0
        %1511 = vmatprep.subr.mxu0 0.0
        %1512 = vmatpush2.msra.mxu0 0.0
        %1513 = vmatprep.subr.mxu0 0.0
        %1514 = vmatpush2.msra.mxu0 0.0
        %1515 = vmatprep.subr.mxu0 0.0
        %1516 = vmatpush2.msra.mxu0 0.0
        %1517 = vmatprep.subr.mxu0 0.0
        %1518 = vmatpush2.msra.mxu0 0.0
        %1519 = vmatprep.subr.mxu0 0.0
        %1520 = vmatpush2.msra.mxu0 0.0
        %1521 = vmatprep.subr.mxu0 0.0
        %1522 = vmatpush2.msra.mxu0 0.0
        %1523 = vmatprep.subr.mxu0 0.0
        %1524 = vmatpush2.msra.mxu0 0.0
        %1525 = vmatprep.subr.mxu0 0.0
        %1526 = vmatpush2.msra.mxu0 0.0
        %1527 = vmatprep.mubr.f32.mxu0 0.0
        %v1528 = vand.u32 %v855, 4294901760
        %1529 = vmatmul.mubr.f32.gmra.mxu0 %v1528
        %v1530 = vpop.f32.mrf.mxu0
        %v1531 = vadd.f32 %v1430, %v1530
        %v1532 = vpop.f32.mrf.mxu0
        %v1533 = vadd.f32 %v1432, %v1532
        %1534 = vmatprep.mubr.f32.mxu0 0.0
        %v1535 = vand.u32 %v858, 4294901760
        %1536 = vmatmul.mubr.f32.gmra.mxu0 %v1535
        %v1537 = vpop.f32.mrf.mxu0
        %v1538 = vadd.f32 %v1437, %v1537
        %v1539 = vpop.f32.mrf.mxu0
        %v1540 = vadd.f32 %v1439, %v1539
        %1541 = vmatprep.mubr.f32.mxu0 0.0
        %v1542 = vand.u32 %v861, 4294901760
        %1543 = vmatmul.mubr.f32.gmra.mxu0 %v1542
        %v1544 = vpop.f32.mrf.mxu0
        %v1545 = vadd.f32 %v1444, %v1544
        %v1546 = vpop.f32.mrf.mxu0
        %v1547 = vadd.f32 %v1446, %v1546
        %1548 = vmatprep.mubr.f32.mxu0 0.0
        %v1549 = vand.u32 %v864, 4294901760
        %1550 = vmatmul.mubr.f32.gmra.mxu0 %v1549
        %v1551 = vpop.f32.mrf.mxu0
        %v1552 = vadd.f32 %v1451, %v1551
        %v1553 = vpop.f32.mrf.mxu0
        %v1554 = vadd.f32 %v1453, %v1553
        %1555 = vdwg.mxu0
        %v1556 = vmax.f32 %v1531, 0.0
        %v1557 = vmax.f32 %v1533, 0.0
        %v1558 = vmax.f32 %v1538, 0.0
        %v1559 = vmax.f32 %v1540, 0.0
        %v1560 = vmax.f32 %v1545, 0.0
        %v1561 = vmax.f32 %v1547, 0.0
        %v1562 = vmax.f32 %v1552, 0.0
        %v1563 = vmax.f32 %v1554, 0.0
        %s1564 = scalar_lea.vmem [#allocation3], 64
        %v1565 = vld [vmem:[%s1564] sm:$0xff]
        %v1566 = vld [vmem:[%s1564 + $0x8] sm:$0xff]
        %v1567 = vld [vmem:[%s1564 + $0x10] sm:$0xff]
        %v1568 = vld [vmem:[%s1564 + $0x18] sm:$0xff]
        %v1570 = vsel %vm853, %v1565, 0
        %v1573 = vsel %vm853, %v1566, 0
        %v1576 = vsel %vm853, %v1567, 0
        %v1579 = vsel %vm853, %v1568, 0
        %1581 = vmatprep.subr.mxu0 0.0
        %1582 = vmatpush1.msra.mxu0 0.0
        %1583 = vmatprep.subr.mxu0 0.0
        %1584 = vmatpush1.msra.mxu0 0.0
        %1585 = vmatprep.subr.mxu0 0.0
        %1586 = vmatpush1.msra.mxu0 0.0
        %1587 = vmatprep.subr.mxu0 0.0
        %1588 = vmatpush1.msra.mxu0 0.0
        %1589 = vmatprep.subr.mxu0 0.0
        %1590 = vmatpush1.msra.mxu0 0.0
        %1591 = vmatprep.subr.mxu0 0.0
        %1592 = vmatpush1.msra.mxu0 0.0
        %1593 = vmatprep.subr.mxu0 0.0
        %1594 = vmatpush1.msra.mxu0 0.0
        %1595 = vmatprep.subr.mxu0 0.0
        %1596 = vmatpush1.msra.mxu0 0.0
        %1597 = vmatprep.subr.mxu0 0.0
        %1598 = vmatpush1.msra.mxu0 0.0
        %1599 = vmatprep.subr.mxu0 0.0
        %1600 = vmatpush1.msra.mxu0 0.0
        %1601 = vmatprep.subr.mxu0 0.0
        %1602 = vmatpush1.msra.mxu0 0.0
        %1603 = vmatprep.subr.mxu0 0.0
        %1604 = vmatpush1.msra.mxu0 0.0
        %v1605 = vand.u32 %v1563, 4294901760
        %1606 = vmatprep.subr.mxu0 %v1605
        %v1607 = vand.u32 %v1562, 4294901760
        %1608 = vmatpush1.msra.mxu0 %v1607
        %v1609 = vand.u32 %v1561, 4294901760
        %1610 = vmatprep.subr.mxu0 %v1609
        %v1611 = vand.u32 %v1560, 4294901760
        %1612 = vmatpush1.msra.mxu0 %v1611
        %v1613 = vand.u32 %v1559, 4294901760
        %1614 = vmatprep.subr.mxu0 %v1613
        %v1615 = vand.u32 %v1558, 4294901760
        %1616 = vmatpush1.msra.mxu0 %v1615
        %v1617 = vand.u32 %v1557, 4294901760
        %1618 = vmatprep.subr.mxu0 %v1617
        %v1619 = vand.u32 %v1556, 4294901760
        %1620 = vmatpush1.msra.mxu0 %v1619
        %1621 = vmatprep.subr.mxu0 0.0
        %1622 = vmatpush2.msra.mxu0 0.0
        %1623 = vmatprep.subr.mxu0 0.0
        %1624 = vmatpush2.msra.mxu0 0.0
        %1625 = vmatprep.subr.mxu0 0.0
        %1626 = vmatpush2.msra.mxu0 0.0
        %1627 = vmatprep.subr.mxu0 0.0
        %1628 = vmatpush2.msra.mxu0 0.0
        %1629 = vmatprep.subr.mxu0 0.0
        %1630 = vmatpush2.msra.mxu0 0.0
        %1631 = vmatprep.subr.mxu0 0.0
        %1632 = vmatpush2.msra.mxu0 0.0
        %1633 = vmatprep.subr.mxu0 0.0
        %1634 = vmatpush2.msra.mxu0 0.0
        %1635 = vmatprep.subr.mxu0 0.0
        %1636 = vmatpush2.msra.mxu0 0.0
        %1637 = vmatprep.subr.mxu0 0.0
        %1638 = vmatpush2.msra.mxu0 0.0
        %1639 = vmatprep.subr.mxu0 0.0
        %1640 = vmatpush2.msra.mxu0 0.0
        %1641 = vmatprep.subr.mxu0 0.0
        %1642 = vmatpush2.msra.mxu0 0.0
        %1643 = vmatprep.subr.mxu0 0.0
        %1644 = vmatpush2.msra.mxu0 0.0
        %1645 = vmatprep.subr.mxu0 0.0
        %1646 = vmatpush2.msra.mxu0 0.0
        %1647 = vmatprep.subr.mxu0 0.0
        %1648 = vmatpush2.msra.mxu0 0.0
        %1649 = vmatprep.subr.mxu0 0.0
        %1650 = vmatpush2.msra.mxu0 0.0
        %1651 = vmatprep.subr.mxu0 0.0
        %1652 = vmatpush2.msra.mxu0 0.0
        %1653 = vmatprep.mubr.f32.mxu0 0.0
        %v1654 = vand.u32 %v1570, 4294901760
        %v1655 = vsub.f32 %v1570, %v1654
        %v1656 = vand.u32 %v1655, 4294901760
        %v1657 = vsub.f32 %v1655, %v1656
        %v1658 = vand.u32 %v1657, 4294901760
        %1659 = vmatmul.mubr.f32.gmra.mxu0 %v1658
        %v1660 = vpop.f32.mrf.mxu0
        %v1661 = vadd.f32 0.0, %v1660
        %v1662 = vpop.f32.mrf.mxu0
        %v1663 = vadd.f32 0.0, %v1662
        %1664 = vmatprep.mubr.f32.mxu0 0.0
        %v1665 = vand.u32 %v1573, 4294901760
        %v1666 = vsub.f32 %v1573, %v1665
        %v1667 = vand.u32 %v1666, 4294901760
        %v1668 = vsub.f32 %v1666, %v1667
        %v1669 = vand.u32 %v1668, 4294901760
        %1670 = vmatmul.mubr.f32.gmra.mxu0 %v1669
        %v1671 = vpop.f32.mrf.mxu0
        %v1672 = vadd.f32 0.0, %v1671
        %v1673 = vpop.f32.mrf.mxu0
        %v1674 = vadd.f32 0.0, %v1673
        %1675 = vmatprep.mubr.f32.mxu0 0.0
        %v1676 = vand.u32 %v1576, 4294901760
        %v1677 = vsub.f32 %v1576, %v1676
        %v1678 = vand.u32 %v1677, 4294901760
        %v1679 = vsub.f32 %v1677, %v1678
        %v1680 = vand.u32 %v1679, 4294901760
        %1681 = vmatmul.mubr.f32.gmra.mxu0 %v1680
        %v1682 = vpop.f32.mrf.mxu0
        %v1683 = vadd.f32 0.0, %v1682
        %v1684 = vpop.f32.mrf.mxu0
        %v1685 = vadd.f32 0.0, %v1684
        %1686 = vmatprep.mubr.f32.mxu0 0.0
        %v1687 = vand.u32 %v1579, 4294901760
        %v1688 = vsub.f32 %v1579, %v1687
        %v1689 = vand.u32 %v1688, 4294901760
        %v1690 = vsub.f32 %v1688, %v1689
        %v1691 = vand.u32 %v1690, 4294901760
        %1692 = vmatmul.mubr.f32.gmra.mxu0 %v1691
        %v1693 = vpop.f32.mrf.mxu0
        %v1694 = vadd.f32 0.0, %v1693
        %v1695 = vpop.f32.mrf.mxu0
        %v1696 = vadd.f32 0.0, %v1695
        %1697 = vdwg.mxu0
        %1698 = vmatprep.subr.mxu0 0.0
        %1699 = vmatpush1.msra.mxu0 0.0
        %1700 = vmatprep.subr.mxu0 0.0
        %1701 = vmatpush1.msra.mxu0 0.0
        %1702 = vmatprep.subr.mxu0 0.0
        %1703 = vmatpush1.msra.mxu0 0.0
        %1704 = vmatprep.subr.mxu0 0.0
        %1705 = vmatpush1.msra.mxu0 0.0
        %1706 = vmatprep.subr.mxu0 0.0
        %1707 = vmatpush1.msra.mxu0 0.0
        %1708 = vmatprep.subr.mxu0 0.0
        %1709 = vmatpush1.msra.mxu0 0.0
        %1710 = vmatprep.subr.mxu0 0.0
        %1711 = vmatpush1.msra.mxu0 0.0
        %1712 = vmatprep.subr.mxu0 0.0
        %1713 = vmatpush1.msra.mxu0 0.0
        %1714 = vmatprep.subr.mxu0 0.0
        %1715 = vmatpush1.msra.mxu0 0.0
        %1716 = vmatprep.subr.mxu0 0.0
        %1717 = vmatpush1.msra.mxu0 0.0
        %1718 = vmatprep.subr.mxu0 0.0
        %1719 = vmatpush1.msra.mxu0 0.0
        %1720 = vmatprep.subr.mxu0 0.0
        %1721 = vmatpush1.msra.mxu0 0.0
        %v1722 = vand.u32 %v1563, 4294901760
        %v1723 = vsub.f32 %v1563, %v1722
        %v1724 = vand.u32 %v1723, 4294901760
        %v1725 = vsub.f32 %v1723, %v1724
        %v1726 = vand.u32 %v1725, 4294901760
        %1727 = vmatprep.subr.mxu0 %v1726
        %v1728 = vand.u32 %v1562, 4294901760
        %v1729 = vsub.f32 %v1562, %v1728
        %v1730 = vand.u32 %v1729, 4294901760
        %v1731 = vsub.f32 %v1729, %v1730
        %v1732 = vand.u32 %v1731, 4294901760
        %1733 = vmatpush1.msra.mxu0 %v1732
        %v1734 = vand.u32 %v1561, 4294901760
        %v1735 = vsub.f32 %v1561, %v1734
        %v1736 = vand.u32 %v1735, 4294901760
        %v1737 = vsub.f32 %v1735, %v1736
        %v1738 = vand.u32 %v1737, 4294901760
        %1739 = vmatprep.subr.mxu0 %v1738
        %v1740 = vand.u32 %v1560, 4294901760
        %v1741 = vsub.f32 %v1560, %v1740
        %v1742 = vand.u32 %v1741, 4294901760
        %v1743 = vsub.f32 %v1741, %v1742
        %v1744 = vand.u32 %v1743, 4294901760
        %1745 = vmatpush1.msra.mxu0 %v1744
        %v1746 = vand.u32 %v1559, 4294901760
        %v1747 = vsub.f32 %v1559, %v1746
        %v1748 = vand.u32 %v1747, 4294901760
        %v1749 = vsub.f32 %v1747, %v1748
        %v1750 = vand.u32 %v1749, 4294901760
        %1751 = vmatprep.subr.mxu0 %v1750
        %v1752 = vand.u32 %v1558, 4294901760
        %v1753 = vsub.f32 %v1558, %v1752
        %v1754 = vand.u32 %v1753, 4294901760
        %v1755 = vsub.f32 %v1753, %v1754
        %v1756 = vand.u32 %v1755, 4294901760
        %1757 = vmatpush1.msra.mxu0 %v1756
        %v1758 = vand.u32 %v1557, 4294901760
        %v1759 = vsub.f32 %v1557, %v1758
        %v1760 = vand.u32 %v1759, 4294901760
        %v1761 = vsub.f32 %v1759, %v1760
        %v1762 = vand.u32 %v1761, 4294901760
        %1763 = vmatprep.subr.mxu0 %v1762
        %v1764 = vand.u32 %v1556, 4294901760
        %v1765 = vsub.f32 %v1556, %v1764
        %v1766 = vand.u32 %v1765, 4294901760
        %v1767 = vsub.f32 %v1765, %v1766
        %v1768 = vand.u32 %v1767, 4294901760
        %1769 = vmatpush1.msra.mxu0 %v1768
        %1770 = vmatprep.subr.mxu0 0.0
        %1771 = vmatpush2.msra.mxu0 0.0
        %1772 = vmatprep.subr.mxu0 0.0
        %1773 = vmatpush2.msra.mxu0 0.0
        %1774 = vmatprep.subr.mxu0 0.0
        %1775 = vmatpush2.msra.mxu0 0.0
        %1776 = vmatprep.subr.mxu0 0.0
        %1777 = vmatpush2.msra.mxu0 0.0
        %1778 = vmatprep.subr.mxu0 0.0
        %1779 = vmatpush2.msra.mxu0 0.0
        %1780 = vmatprep.subr.mxu0 0.0
        %1781 = vmatpush2.msra.mxu0 0.0
        %1782 = vmatprep.subr.mxu0 0.0
        %1783 = vmatpush2.msra.mxu0 0.0
        %1784 = vmatprep.subr.mxu0 0.0
        %1785 = vmatpush2.msra.mxu0 0.0
        %1786 = vmatprep.subr.mxu0 0.0
        %1787 = vmatpush2.msra.mxu0 0.0
        %1788 = vmatprep.subr.mxu0 0.0
        %1789 = vmatpush2.msra.mxu0 0.0
        %1790 = vmatprep.subr.mxu0 0.0
        %1791 = vmatpush2.msra.mxu0 0.0
        %1792 = vmatprep.subr.mxu0 0.0
        %1793 = vmatpush2.msra.mxu0 0.0
        %1794 = vmatprep.subr.mxu0 0.0
        %1795 = vmatpush2.msra.mxu0 0.0
        %1796 = vmatprep.subr.mxu0 0.0
        %1797 = vmatpush2.msra.mxu0 0.0
        %1798 = vmatprep.subr.mxu0 0.0
        %1799 = vmatpush2.msra.mxu0 0.0
        %1800 = vmatprep.subr.mxu0 0.0
        %1801 = vmatpush2.msra.mxu0 0.0
        %1802 = vmatprep.mubr.f32.mxu0 0.0
        %v1803 = vand.u32 %v1570, 4294901760
        %1804 = vmatmul.mubr.f32.gmra.mxu0 %v1803
        %v1805 = vpop.f32.mrf.mxu0
        %v1806 = vadd.f32 %v1661, %v1805
        %v1807 = vpop.f32.mrf.mxu0
        %v1808 = vadd.f32 %v1663, %v1807
        %1809 = vmatprep.mubr.f32.mxu0 0.0
        %v1810 = vand.u32 %v1573, 4294901760
        %1811 = vmatmul.mubr.f32.gmra.mxu0 %v1810
        %v1812 = vpop.f32.mrf.mxu0
        %v1813 = vadd.f32 %v1672, %v1812
        %v1814 = vpop.f32.mrf.mxu0
        %v1815 = vadd.f32 %v1674, %v1814
        %1816 = vmatprep.mubr.f32.mxu0 0.0
        %v1817 = vand.u32 %v1576, 4294901760
        %1818 = vmatmul.mubr.f32.gmra.mxu0 %v1817
        %v1819 = vpop.f32.mrf.mxu0
        %v1820 = vadd.f32 %v1683, %v1819
        %v1821 = vpop.f32.mrf.mxu0
        %v1822 = vadd.f32 %v1685, %v1821
        %1823 = vmatprep.mubr.f32.mxu0 0.0
        %v1824 = vand.u32 %v1579, 4294901760
        %1825 = vmatmul.mubr.f32.gmra.mxu0 %v1824
        %v1826 = vpop.f32.mrf.mxu0
        %v1827 = vadd.f32 %v1694, %v1826
        %v1828 = vpop.f32.mrf.mxu0
        %v1829 = vadd.f32 %v1696, %v1828
        %1830 = vdwg.mxu0
        %1831 = vmatprep.subr.mxu0 0.0
        %1832 = vmatpush1.msra.mxu0 0.0
        %1833 = vmatprep.subr.mxu0 0.0
        %1834 = vmatpush1.msra.mxu0 0.0
        %1835 = vmatprep.subr.mxu0 0.0
        %1836 = vmatpush1.msra.mxu0 0.0
        %1837 = vmatprep.subr.mxu0 0.0
        %1838 = vmatpush1.msra.mxu0 0.0
        %1839 = vmatprep.subr.mxu0 0.0
        %1840 = vmatpush1.msra.mxu0 0.0
        %1841 = vmatprep.subr.mxu0 0.0
        %1842 = vmatpush1.msra.mxu0 0.0
        %1843 = vmatprep.subr.mxu0 0.0
        %1844 = vmatpush1.msra.mxu0 0.0
        %1845 = vmatprep.subr.mxu0 0.0
        %1846 = vmatpush1.msra.mxu0 0.0
        %1847 = vmatprep.subr.mxu0 0.0
        %1848 = vmatpush1.msra.mxu0 0.0
        %1849 = vmatprep.subr.mxu0 0.0
        %1850 = vmatpush1.msra.mxu0 0.0
        %1851 = vmatprep.subr.mxu0 0.0
        %1852 = vmatpush1.msra.mxu0 0.0
        %1853 = vmatprep.subr.mxu0 0.0
        %1854 = vmatpush1.msra.mxu0 0.0
        %v1855 = vand.u32 %v1563, 4294901760
        %v1856 = vsub.f32 %v1563, %v1855
        %1857 = vmatprep.subr.mxu0 %v1856
        %v1858 = vand.u32 %v1562, 4294901760
        %v1859 = vsub.f32 %v1562, %v1858
        %1860 = vmatpush1.msra.mxu0 %v1859
        %v1861 = vand.u32 %v1561, 4294901760
        %v1862 = vsub.f32 %v1561, %v1861
        %1863 = vmatprep.subr.mxu0 %v1862
        %v1864 = vand.u32 %v1560, 4294901760
        %v1865 = vsub.f32 %v1560, %v1864
        %1866 = vmatpush1.msra.mxu0 %v1865
        %v1867 = vand.u32 %v1559, 4294901760
        %v1868 = vsub.f32 %v1559, %v1867
        %1869 = vmatprep.subr.mxu0 %v1868
        %v1870 = vand.u32 %v1558, 4294901760
        %v1871 = vsub.f32 %v1558, %v1870
        %1872 = vmatpush1.msra.mxu0 %v1871
        %v1873 = vand.u32 %v1557, 4294901760
        %v1874 = vsub.f32 %v1557, %v1873
        %1875 = vmatprep.subr.mxu0 %v1874
        %v1876 = vand.u32 %v1556, 4294901760
        %v1877 = vsub.f32 %v1556, %v1876
        %1878 = vmatpush1.msra.mxu0 %v1877
        %1879 = vmatprep.subr.mxu0 0.0
        %1880 = vmatpush2.msra.mxu0 0.0
        %1881 = vmatprep.subr.mxu0 0.0
        %1882 = vmatpush2.msra.mxu0 0.0
        %1883 = vmatprep.subr.mxu0 0.0
        %1884 = vmatpush2.msra.mxu0 0.0
        %1885 = vmatprep.subr.mxu0 0.0
        %1886 = vmatpush2.msra.mxu0 0.0
        %1887 = vmatprep.subr.mxu0 0.0
        %1888 = vmatpush2.msra.mxu0 0.0
        %1889 = vmatprep.subr.mxu0 0.0
        %1890 = vmatpush2.msra.mxu0 0.0
        %1891 = vmatprep.subr.mxu0 0.0
        %1892 = vmatpush2.msra.mxu0 0.0
        %1893 = vmatprep.subr.mxu0 0.0
        %1894 = vmatpush2.msra.mxu0 0.0
        %1895 = vmatprep.subr.mxu0 0.0
        %1896 = vmatpush2.msra.mxu0 0.0
        %1897 = vmatprep.subr.mxu0 0.0
        %1898 = vmatpush2.msra.mxu0 0.0
        %1899 = vmatprep.subr.mxu0 0.0
        %1900 = vmatpush2.msra.mxu0 0.0
        %1901 = vmatprep.subr.mxu0 0.0
        %1902 = vmatpush2.msra.mxu0 0.0
        %1903 = vmatprep.subr.mxu0 0.0
        %1904 = vmatpush2.msra.mxu0 0.0
        %1905 = vmatprep.subr.mxu0 0.0
        %1906 = vmatpush2.msra.mxu0 0.0
        %1907 = vmatprep.subr.mxu0 0.0
        %1908 = vmatpush2.msra.mxu0 0.0
        %1909 = vmatprep.subr.mxu0 0.0
        %1910 = vmatpush2.msra.mxu0 0.0
        %1911 = vmatprep.mubr.f32.mxu0 0.0
        %v1912 = vand.u32 %v1570, 4294901760
        %v1913 = vsub.f32 %v1570, %v1912
        %1914 = vmatmul.mubr.f32.gmra.mxu0 %v1913
        %v1915 = vpop.f32.mrf.mxu0
        %v1916 = vadd.f32 %v1806, %v1915
        %v1917 = vpop.f32.mrf.mxu0
        %v1918 = vadd.f32 %v1808, %v1917
        %1919 = vmatprep.mubr.f32.mxu0 0.0
        %v1920 = vand.u32 %v1573, 4294901760
        %v1921 = vsub.f32 %v1573, %v1920
        %1922 = vmatmul.mubr.f32.gmra.mxu0 %v1921
        %v1923 = vpop.f32.mrf.mxu0
        %v1924 = vadd.f32 %v1813, %v1923
        %v1925 = vpop.f32.mrf.mxu0
        %v1926 = vadd.f32 %v1815, %v1925
        %1927 = vmatprep.mubr.f32.mxu0 0.0
        %v1928 = vand.u32 %v1576, 4294901760
        %v1929 = vsub.f32 %v1576, %v1928
        %1930 = vmatmul.mubr.f32.gmra.mxu0 %v1929
        %v1931 = vpop.f32.mrf.mxu0
        %v1932 = vadd.f32 %v1820, %v1931
        %v1933 = vpop.f32.mrf.mxu0
        %v1934 = vadd.f32 %v1822, %v1933
        %1935 = vmatprep.mubr.f32.mxu0 0.0
        %v1936 = vand.u32 %v1579, 4294901760
        %v1937 = vsub.f32 %v1579, %v1936
        %1938 = vmatmul.mubr.f32.gmra.mxu0 %v1937
        %v1939 = vpop.f32.mrf.mxu0
        %v1940 = vadd.f32 %v1827, %v1939
        %v1941 = vpop.f32.mrf.mxu0
        %v1942 = vadd.f32 %v1829, %v1941
        %1943 = vdwg.mxu0
        %1944 = vmatprep.subr.mxu0 0.0
        %1945 = vmatpush1.msra.mxu0 0.0
        %1946 = vmatprep.subr.mxu0 0.0
        %1947 = vmatpush1.msra.mxu0 0.0
        %1948 = vmatprep.subr.mxu0 0.0
        %1949 = vmatpush1.msra.mxu0 0.0
        %1950 = vmatprep.subr.mxu0 0.0
        %1951 = vmatpush1.msra.mxu0 0.0
        %1952 = vmatprep.subr.mxu0 0.0
        %1953 = vmatpush1.msra.mxu0 0.0
        %1954 = vmatprep.subr.mxu0 0.0
        %1955 = vmatpush1.msra.mxu0 0.0
        %1956 = vmatprep.subr.mxu0 0.0
        %1957 = vmatpush1.msra.mxu0 0.0
        %1958 = vmatprep.subr.mxu0 0.0
        %1959 = vmatpush1.msra.mxu0 0.0
        %1960 = vmatprep.subr.mxu0 0.0
        %1961 = vmatpush1.msra.mxu0 0.0
        %1962 = vmatprep.subr.mxu0 0.0
        %1963 = vmatpush1.msra.mxu0 0.0
        %1964 = vmatprep.subr.mxu0 0.0
        %1965 = vmatpush1.msra.mxu0 0.0
        %1966 = vmatprep.subr.mxu0 0.0
        %1967 = vmatpush1.msra.mxu0 0.0
        %v1968 = vand.u32 %v1563, 4294901760
        %1969 = vmatprep.subr.mxu0 %v1968
        %v1970 = vand.u32 %v1562, 4294901760
        %1971 = vmatpush1.msra.mxu0 %v1970
        %v1972 = vand.u32 %v1561, 4294901760
        %1973 = vmatprep.subr.mxu0 %v1972
        %v1974 = vand.u32 %v1560, 4294901760
        %1975 = vmatpush1.msra.mxu0 %v1974
        %v1976 = vand.u32 %v1559, 4294901760
        %1977 = vmatprep.subr.mxu0 %v1976
        %v1978 = vand.u32 %v1558, 4294901760
        %1979 = vmatpush1.msra.mxu0 %v1978
        %v1980 = vand.u32 %v1557, 4294901760
        %1981 = vmatprep.subr.mxu0 %v1980
        %v1982 = vand.u32 %v1556, 4294901760
        %1983 = vmatpush1.msra.mxu0 %v1982
        %1984 = vmatprep.subr.mxu0 0.0
        %1985 = vmatpush2.msra.mxu0 0.0
        %1986 = vmatprep.subr.mxu0 0.0
        %1987 = vmatpush2.msra.mxu0 0.0
        %1988 = vmatprep.subr.mxu0 0.0
        %1989 = vmatpush2.msra.mxu0 0.0
        %1990 = vmatprep.subr.mxu0 0.0
        %1991 = vmatpush2.msra.mxu0 0.0
        %1992 = vmatprep.subr.mxu0 0.0
        %1993 = vmatpush2.msra.mxu0 0.0
        %1994 = vmatprep.subr.mxu0 0.0
        %1995 = vmatpush2.msra.mxu0 0.0
        %1996 = vmatprep.subr.mxu0 0.0
        %1997 = vmatpush2.msra.mxu0 0.0
        %1998 = vmatprep.subr.mxu0 0.0
        %1999 = vmatpush2.msra.mxu0 0.0
        %2000 = vmatprep.subr.mxu0 0.0
        %2001 = vmatpush2.msra.mxu0 0.0
        %2002 = vmatprep.subr.mxu0 0.0
        %2003 = vmatpush2.msra.mxu0 0.0
        %2004 = vmatprep.subr.mxu0 0.0
        %2005 = vmatpush2.msra.mxu0 0.0
        %2006 = vmatprep.subr.mxu0 0.0
        %2007 = vmatpush2.msra.mxu0 0.0
        %2008 = vmatprep.subr.mxu0 0.0
        %2009 = vmatpush2.msra.mxu0 0.0
        %2010 = vmatprep.subr.mxu0 0.0
        %2011 = vmatpush2.msra.mxu0 0.0
        %2012 = vmatprep.subr.mxu0 0.0
        %2013 = vmatpush2.msra.mxu0 0.0
        %2014 = vmatprep.subr.mxu0 0.0
        %2015 = vmatpush2.msra.mxu0 0.0
        %2016 = vmatprep.mubr.f32.mxu0 0.0
        %v2017 = vand.u32 %v1570, 4294901760
        %v2018 = vsub.f32 %v1570, %v2017
        %v2019 = vand.u32 %v2018, 4294901760
        %2020 = vmatmul.mubr.f32.gmra.mxu0 %v2019
        %v2021 = vpop.f32.mrf.mxu0
        %v2022 = vadd.f32 %v1916, %v2021
        %v2023 = vpop.f32.mrf.mxu0
        %v2024 = vadd.f32 %v1918, %v2023
        %2025 = vmatprep.mubr.f32.mxu0 0.0
        %v2026 = vand.u32 %v1573, 4294901760
        %v2027 = vsub.f32 %v1573, %v2026
        %v2028 = vand.u32 %v2027, 4294901760
        %2029 = vmatmul.mubr.f32.gmra.mxu0 %v2028
        %v2030 = vpop.f32.mrf.mxu0
        %v2031 = vadd.f32 %v1924, %v2030
        %v2032 = vpop.f32.mrf.mxu0
        %v2033 = vadd.f32 %v1926, %v2032
        %2034 = vmatprep.mubr.f32.mxu0 0.0
        %v2035 = vand.u32 %v1576, 4294901760
        %v2036 = vsub.f32 %v1576, %v2035
        %v2037 = vand.u32 %v2036, 4294901760
        %2038 = vmatmul.mubr.f32.gmra.mxu0 %v2037
        %v2039 = vpop.f32.mrf.mxu0
        %v2040 = vadd.f32 %v1932, %v2039
        %v2041 = vpop.f32.mrf.mxu0
        %v2042 = vadd.f32 %v1934, %v2041
        %2043 = vmatprep.mubr.f32.mxu0 0.0
        %v2044 = vand.u32 %v1579, 4294901760
        %v2045 = vsub.f32 %v1579, %v2044
        %v2046 = vand.u32 %v2045, 4294901760
        %2047 = vmatmul.mubr.f32.gmra.mxu0 %v2046
        %v2048 = vpop.f32.mrf.mxu0
        %v2049 = vadd.f32 %v1940, %v2048
        %v2050 = vpop.f32.mrf.mxu0
        %v2051 = vadd.f32 %v1942, %v2050
        %2052 = vdwg.mxu0
        %2053 = vmatprep.subr.mxu0 0.0
        %2054 = vmatpush1.msra.mxu0 0.0
        %2055 = vmatprep.subr.mxu0 0.0
        %2056 = vmatpush1.msra.mxu0 0.0
        %2057 = vmatprep.subr.mxu0 0.0
        %2058 = vmatpush1.msra.mxu0 0.0
        %2059 = vmatprep.subr.mxu0 0.0
        %2060 = vmatpush1.msra.mxu0 0.0
        %2061 = vmatprep.subr.mxu0 0.0
        %2062 = vmatpush1.msra.mxu0 0.0
        %2063 = vmatprep.subr.mxu0 0.0
        %2064 = vmatpush1.msra.mxu0 0.0
        %2065 = vmatprep.subr.mxu0 0.0
        %2066 = vmatpush1.msra.mxu0 0.0
        %2067 = vmatprep.subr.mxu0 0.0
        %2068 = vmatpush1.msra.mxu0 0.0
        %2069 = vmatprep.subr.mxu0 0.0
        %2070 = vmatpush1.msra.mxu0 0.0
        %2071 = vmatprep.subr.mxu0 0.0
        %2072 = vmatpush1.msra.mxu0 0.0
        %2073 = vmatprep.subr.mxu0 0.0
        %2074 = vmatpush1.msra.mxu0 0.0
        %2075 = vmatprep.subr.mxu0 0.0
        %2076 = vmatpush1.msra.mxu0 0.0
        %v2077 = vand.u32 %v1563, 4294901760
        %v2078 = vsub.f32 %v1563, %v2077
        %v2079 = vand.u32 %v2078, 4294901760
        %2080 = vmatprep.subr.mxu0 %v2079
        %v2081 = vand.u32 %v1562, 4294901760
        %v2082 = vsub.f32 %v1562, %v2081
        %v2083 = vand.u32 %v2082, 4294901760
        %2084 = vmatpush1.msra.mxu0 %v2083
        %v2085 = vand.u32 %v1561, 4294901760
        %v2086 = vsub.f32 %v1561, %v2085
        %v2087 = vand.u32 %v2086, 4294901760
        %2088 = vmatprep.subr.mxu0 %v2087
        %v2089 = vand.u32 %v1560, 4294901760
        %v2090 = vsub.f32 %v1560, %v2089
        %v2091 = vand.u32 %v2090, 4294901760
        %2092 = vmatpush1.msra.mxu0 %v2091
        %v2093 = vand.u32 %v1559, 4294901760
        %v2094 = vsub.f32 %v1559, %v2093
        %v2095 = vand.u32 %v2094, 4294901760
        %2096 = vmatprep.subr.mxu0 %v2095
        %v2097 = vand.u32 %v1558, 4294901760
        %v2098 = vsub.f32 %v1558, %v2097
        %v2099 = vand.u32 %v2098, 4294901760
        %2100 = vmatpush1.msra.mxu0 %v2099
        %v2101 = vand.u32 %v1557, 4294901760
        %v2102 = vsub.f32 %v1557, %v2101
        %v2103 = vand.u32 %v2102, 4294901760
        %2104 = vmatprep.subr.mxu0 %v2103
        %v2105 = vand.u32 %v1556, 4294901760
        %v2106 = vsub.f32 %v1556, %v2105
        %v2107 = vand.u32 %v2106, 4294901760
        %2108 = vmatpush1.msra.mxu0 %v2107
        %2109 = vmatprep.subr.mxu0 0.0
        %2110 = vmatpush2.msra.mxu0 0.0
        %2111 = vmatprep.subr.mxu0 0.0
        %2112 = vmatpush2.msra.mxu0 0.0
        %2113 = vmatprep.subr.mxu0 0.0
        %2114 = vmatpush2.msra.mxu0 0.0
        %2115 = vmatprep.subr.mxu0 0.0
        %2116 = vmatpush2.msra.mxu0 0.0
        %2117 = vmatprep.subr.mxu0 0.0
        %2118 = vmatpush2.msra.mxu0 0.0
        %2119 = vmatprep.subr.mxu0 0.0
        %2120 = vmatpush2.msra.mxu0 0.0
        %2121 = vmatprep.subr.mxu0 0.0
        %2122 = vmatpush2.msra.mxu0 0.0
        %2123 = vmatprep.subr.mxu0 0.0
        %2124 = vmatpush2.msra.mxu0 0.0
        %2125 = vmatprep.subr.mxu0 0.0
        %2126 = vmatpush2.msra.mxu0 0.0
        %2127 = vmatprep.subr.mxu0 0.0
        %2128 = vmatpush2.msra.mxu0 0.0
        %2129 = vmatprep.subr.mxu0 0.0
        %2130 = vmatpush2.msra.mxu0 0.0
        %2131 = vmatprep.subr.mxu0 0.0
        %2132 = vmatpush2.msra.mxu0 0.0
        %2133 = vmatprep.subr.mxu0 0.0
        %2134 = vmatpush2.msra.mxu0 0.0
        %2135 = vmatprep.subr.mxu0 0.0
        %2136 = vmatpush2.msra.mxu0 0.0
        %2137 = vmatprep.subr.mxu0 0.0
        %2138 = vmatpush2.msra.mxu0 0.0
        %2139 = vmatprep.subr.mxu0 0.0
        %2140 = vmatpush2.msra.mxu0 0.0
        %2141 = vmatprep.mubr.f32.mxu0 0.0
        %v2142 = vand.u32 %v1570, 4294901760
        %2143 = vmatmul.mubr.f32.gmra.mxu0 %v2142
        %v2144 = vpop.f32.mrf.mxu0
        %v2145 = vadd.f32 %v2022, %v2144
        %v2146 = vpop.f32.mrf.mxu0
        %v2147 = vadd.f32 %v2024, %v2146
        %2148 = vmatprep.mubr.f32.mxu0 0.0
        %v2149 = vand.u32 %v1573, 4294901760
        %2150 = vmatmul.mubr.f32.gmra.mxu0 %v2149
        %v2151 = vpop.f32.mrf.mxu0
        %v2152 = vadd.f32 %v2031, %v2151
        %v2153 = vpop.f32.mrf.mxu0
        %v2154 = vadd.f32 %v2033, %v2153
        %2155 = vmatprep.mubr.f32.mxu0 0.0
        %v2156 = vand.u32 %v1576, 4294901760
        %2157 = vmatmul.mubr.f32.gmra.mxu0 %v2156
        %v2158 = vpop.f32.mrf.mxu0
        %v2159 = vadd.f32 %v2040, %v2158
        %v2160 = vpop.f32.mrf.mxu0
        %v2161 = vadd.f32 %v2042, %v2160
        %2162 = vmatprep.mubr.f32.mxu0 0.0
        %v2163 = vand.u32 %v1579, 4294901760
        %2164 = vmatmul.mubr.f32.gmra.mxu0 %v2163
        %v2165 = vpop.f32.mrf.mxu0
        %v2166 = vadd.f32 %v2049, %v2165
        %v2167 = vpop.f32.mrf.mxu0
        %v2168 = vadd.f32 %v2051, %v2167
        %2169 = vdwg.mxu0
        %2170 = vmatprep.subr.mxu0 0.0
        %2171 = vmatpush1.msra.mxu0 0.0
        %2172 = vmatprep.subr.mxu0 0.0
        %2173 = vmatpush1.msra.mxu0 0.0
        %2174 = vmatprep.subr.mxu0 0.0
        %2175 = vmatpush1.msra.mxu0 0.0
        %2176 = vmatprep.subr.mxu0 0.0
        %2177 = vmatpush1.msra.mxu0 0.0
        %2178 = vmatprep.subr.mxu0 0.0
        %2179 = vmatpush1.msra.mxu0 0.0
        %2180 = vmatprep.subr.mxu0 0.0
        %2181 = vmatpush1.msra.mxu0 0.0
        %2182 = vmatprep.subr.mxu0 0.0
        %2183 = vmatpush1.msra.mxu0 0.0
        %2184 = vmatprep.subr.mxu0 0.0
        %2185 = vmatpush1.msra.mxu0 0.0
        %2186 = vmatprep.subr.mxu0 0.0
        %2187 = vmatpush1.msra.mxu0 0.0
        %2188 = vmatprep.subr.mxu0 0.0
        %2189 = vmatpush1.msra.mxu0 0.0
        %2190 = vmatprep.subr.mxu0 0.0
        %2191 = vmatpush1.msra.mxu0 0.0
        %2192 = vmatprep.subr.mxu0 0.0
        %2193 = vmatpush1.msra.mxu0 0.0
        %v2194 = vand.u32 %v1563, 4294901760
        %2195 = vmatprep.subr.mxu0 %v2194
        %v2196 = vand.u32 %v1562, 4294901760
        %2197 = vmatpush1.msra.mxu0 %v2196
        %v2198 = vand.u32 %v1561, 4294901760
        %2199 = vmatprep.subr.mxu0 %v2198
        %v2200 = vand.u32 %v1560, 4294901760
        %2201 = vmatpush1.msra.mxu0 %v2200
        %v2202 = vand.u32 %v1559, 4294901760
        %2203 = vmatprep.subr.mxu0 %v2202
        %v2204 = vand.u32 %v1558, 4294901760
        %2205 = vmatpush1.msra.mxu0 %v2204
        %v2206 = vand.u32 %v1557, 4294901760
        %2207 = vmatprep.subr.mxu0 %v2206
        %v2208 = vand.u32 %v1556, 4294901760
        %2209 = vmatpush1.msra.mxu0 %v2208
        %2210 = vmatprep.subr.mxu0 0.0
        %2211 = vmatpush2.msra.mxu0 0.0
        %2212 = vmatprep.subr.mxu0 0.0
        %2213 = vmatpush2.msra.mxu0 0.0
        %2214 = vmatprep.subr.mxu0 0.0
        %2215 = vmatpush2.msra.mxu0 0.0
        %2216 = vmatprep.subr.mxu0 0.0
        %2217 = vmatpush2.msra.mxu0 0.0
        %2218 = vmatprep.subr.mxu0 0.0
        %2219 = vmatpush2.msra.mxu0 0.0
        %2220 = vmatprep.subr.mxu0 0.0
        %2221 = vmatpush2.msra.mxu0 0.0
        %2222 = vmatprep.subr.mxu0 0.0
        %2223 = vmatpush2.msra.mxu0 0.0
        %2224 = vmatprep.subr.mxu0 0.0
        %2225 = vmatpush2.msra.mxu0 0.0
        %2226 = vmatprep.subr.mxu0 0.0
        %2227 = vmatpush2.msra.mxu0 0.0
        %2228 = vmatprep.subr.mxu0 0.0
        %2229 = vmatpush2.msra.mxu0 0.0
        %2230 = vmatprep.subr.mxu0 0.0
        %2231 = vmatpush2.msra.mxu0 0.0
        %2232 = vmatprep.subr.mxu0 0.0
        %2233 = vmatpush2.msra.mxu0 0.0
        %2234 = vmatprep.subr.mxu0 0.0
        %2235 = vmatpush2.msra.mxu0 0.0
        %2236 = vmatprep.subr.mxu0 0.0
        %2237 = vmatpush2.msra.mxu0 0.0
        %2238 = vmatprep.subr.mxu0 0.0
        %2239 = vmatpush2.msra.mxu0 0.0
        %2240 = vmatprep.subr.mxu0 0.0
        %2241 = vmatpush2.msra.mxu0 0.0
        %2242 = vmatprep.mubr.f32.mxu0 0.0
        %v2243 = vand.u32 %v1570, 4294901760
        %2244 = vmatmul.mubr.f32.gmra.mxu0 %v2243
        %v2245 = vpop.f32.mrf.mxu0
        %v2246 = vadd.f32 %v2145, %v2245
        %v2247 = vpop.f32.mrf.mxu0
        %v2248 = vadd.f32 %v2147, %v2247
        %2249 = vmatprep.mubr.f32.mxu0 0.0
        %v2250 = vand.u32 %v1573, 4294901760
        %2251 = vmatmul.mubr.f32.gmra.mxu0 %v2250
        %v2252 = vpop.f32.mrf.mxu0
        %v2253 = vadd.f32 %v2152, %v2252
        %v2254 = vpop.f32.mrf.mxu0
        %v2255 = vadd.f32 %v2154, %v2254
        %2256 = vmatprep.mubr.f32.mxu0 0.0
        %v2257 = vand.u32 %v1576, 4294901760
        %2258 = vmatmul.mubr.f32.gmra.mxu0 %v2257
        %v2259 = vpop.f32.mrf.mxu0
        %v2260 = vadd.f32 %v2159, %v2259
        %v2261 = vpop.f32.mrf.mxu0
        %v2262 = vadd.f32 %v2161, %v2261
        %2263 = vmatprep.mubr.f32.mxu0 0.0
        %v2264 = vand.u32 %v1579, 4294901760
        %2265 = vmatmul.mubr.f32.gmra.mxu0 %v2264
        %v2266 = vpop.f32.mrf.mxu0
        %v2267 = vadd.f32 %v2166, %v2266
        %v2268 = vpop.f32.mrf.mxu0
        %v2269 = vadd.f32 %v2168, %v2268
        %2270 = vdwg.mxu0
        %v2271 = vmax.f32 %v2246, 0.0
        %v2272 = vmax.f32 %v2248, 0.0
        %v2273 = vmax.f32 %v2253, 0.0
        %v2274 = vmax.f32 %v2255, 0.0
        %v2275 = vmax.f32 %v2260, 0.0
        %v2276 = vmax.f32 %v2262, 0.0
        %v2277 = vmax.f32 %v2267, 0.0
        %v2278 = vmax.f32 %v2269, 0.0
        %s2279 = scalar_lea.vmem [#allocation3], 96
        %v2280 = vld [vmem:[%s2279] sm:$0xff]
        %v2281 = vld [vmem:[%s2279 + $0x8] sm:$0xff]
        %v2282 = vld [vmem:[%s2279 + $0x10] sm:$0xff]
        %v2283 = vld [vmem:[%s2279 + $0x18] sm:$0xff]
        %v2285 = vsel %vm853, %v2280, 0
        %v2288 = vsel %vm853, %v2281, 0
        %v2291 = vsel %vm853, %v2282, 0
        %v2294 = vsel %vm853, %v2283, 0
        %2296 = vmatprep.subr.mxu0 0.0
        %2297 = vmatpush1.msra.mxu0 0.0
        %2298 = vmatprep.subr.mxu0 0.0
        %2299 = vmatpush1.msra.mxu0 0.0
        %2300 = vmatprep.subr.mxu0 0.0
        %2301 = vmatpush1.msra.mxu0 0.0
        %2302 = vmatprep.subr.mxu0 0.0
        %2303 = vmatpush1.msra.mxu0 0.0
        %2304 = vmatprep.subr.mxu0 0.0
        %2305 = vmatpush1.msra.mxu0 0.0
        %2306 = vmatprep.subr.mxu0 0.0
        %2307 = vmatpush1.msra.mxu0 0.0
        %2308 = vmatprep.subr.mxu0 0.0
        %2309 = vmatpush1.msra.mxu0 0.0
        %2310 = vmatprep.subr.mxu0 0.0
        %2311 = vmatpush1.msra.mxu0 0.0
        %2312 = vmatprep.subr.mxu0 0.0
        %2313 = vmatpush1.msra.mxu0 0.0
        %2314 = vmatprep.subr.mxu0 0.0
        %2315 = vmatpush1.msra.mxu0 0.0
        %2316 = vmatprep.subr.mxu0 0.0
        %2317 = vmatpush1.msra.mxu0 0.0
        %2318 = vmatprep.subr.mxu0 0.0
        %2319 = vmatpush1.msra.mxu0 0.0
        %v2320 = vand.u32 %v2278, 4294901760
        %2321 = vmatprep.subr.mxu0 %v2320
        %v2322 = vand.u32 %v2277, 4294901760
        %2323 = vmatpush1.msra.mxu0 %v2322
        %v2324 = vand.u32 %v2276, 4294901760
        %2325 = vmatprep.subr.mxu0 %v2324
        %v2326 = vand.u32 %v2275, 4294901760
        %2327 = vmatpush1.msra.mxu0 %v2326
        %v2328 = vand.u32 %v2274, 4294901760
        %2329 = vmatprep.subr.mxu0 %v2328
        %v2330 = vand.u32 %v2273, 4294901760
        %2331 = vmatpush1.msra.mxu0 %v2330
        %v2332 = vand.u32 %v2272, 4294901760
        %2333 = vmatprep.subr.mxu0 %v2332
        %v2334 = vand.u32 %v2271, 4294901760
        %2335 = vmatpush1.msra.mxu0 %v2334
        %2336 = vmatprep.subr.mxu0 0.0
        %2337 = vmatpush2.msra.mxu0 0.0
        %2338 = vmatprep.subr.mxu0 0.0
        %2339 = vmatpush2.msra.mxu0 0.0
        %2340 = vmatprep.subr.mxu0 0.0
        %2341 = vmatpush2.msra.mxu0 0.0
        %2342 = vmatprep.subr.mxu0 0.0
        %2343 = vmatpush2.msra.mxu0 0.0
        %2344 = vmatprep.subr.mxu0 0.0
        %2345 = vmatpush2.msra.mxu0 0.0
        %2346 = vmatprep.subr.mxu0 0.0
        %2347 = vmatpush2.msra.mxu0 0.0
        %2348 = vmatprep.subr.mxu0 0.0
        %2349 = vmatpush2.msra.mxu0 0.0
        %2350 = vmatprep.subr.mxu0 0.0
        %2351 = vmatpush2.msra.mxu0 0.0
        %2352 = vmatprep.subr.mxu0 0.0
        %2353 = vmatpush2.msra.mxu0 0.0
        %2354 = vmatprep.subr.mxu0 0.0
        %2355 = vmatpush2.msra.mxu0 0.0
        %2356 = vmatprep.subr.mxu0 0.0
        %2357 = vmatpush2.msra.mxu0 0.0
        %2358 = vmatprep.subr.mxu0 0.0
        %2359 = vmatpush2.msra.mxu0 0.0
        %2360 = vmatprep.subr.mxu0 0.0
        %2361 = vmatpush2.msra.mxu0 0.0
        %2362 = vmatprep.subr.mxu0 0.0
        %2363 = vmatpush2.msra.mxu0 0.0
        %2364 = vmatprep.subr.mxu0 0.0
        %2365 = vmatpush2.msra.mxu0 0.0
        %2366 = vmatprep.subr.mxu0 0.0
        %2367 = vmatpush2.msra.mxu0 0.0
        %2368 = vmatprep.mubr.f32.mxu0 0.0
        %v2369 = vand.u32 %v2285, 4294901760
        %v2370 = vsub.f32 %v2285, %v2369
        %v2371 = vand.u32 %v2370, 4294901760
        %v2372 = vsub.f32 %v2370, %v2371
        %v2373 = vand.u32 %v2372, 4294901760
        %2374 = vmatmul.mubr.f32.gmra.mxu0 %v2373
        %v2375 = vpop.f32.mrf.mxu0
        %v2376 = vadd.f32 0.0, %v2375
        %v2377 = vpop.f32.mrf.mxu0
        %v2378 = vadd.f32 0.0, %v2377
        %2379 = vmatprep.mubr.f32.mxu0 0.0
        %v2380 = vand.u32 %v2288, 4294901760
        %v2381 = vsub.f32 %v2288, %v2380
        %v2382 = vand.u32 %v2381, 4294901760
        %v2383 = vsub.f32 %v2381, %v2382
        %v2384 = vand.u32 %v2383, 4294901760
        %2385 = vmatmul.mubr.f32.gmra.mxu0 %v2384
        %v2386 = vpop.f32.mrf.mxu0
        %v2387 = vadd.f32 0.0, %v2386
        %v2388 = vpop.f32.mrf.mxu0
        %v2389 = vadd.f32 0.0, %v2388
        %2390 = vmatprep.mubr.f32.mxu0 0.0
        %v2391 = vand.u32 %v2291, 4294901760
        %v2392 = vsub.f32 %v2291, %v2391
        %v2393 = vand.u32 %v2392, 4294901760
        %v2394 = vsub.f32 %v2392, %v2393
        %v2395 = vand.u32 %v2394, 4294901760
        %2396 = vmatmul.mubr.f32.gmra.mxu0 %v2395
        %v2397 = vpop.f32.mrf.mxu0
        %v2398 = vadd.f32 0.0, %v2397
        %v2399 = vpop.f32.mrf.mxu0
        %v2400 = vadd.f32 0.0, %v2399
        %2401 = vmatprep.mubr.f32.mxu0 0.0
        %v2402 = vand.u32 %v2294, 4294901760
        %v2403 = vsub.f32 %v2294, %v2402
        %v2404 = vand.u32 %v2403, 4294901760
        %v2405 = vsub.f32 %v2403, %v2404
        %v2406 = vand.u32 %v2405, 4294901760
        %2407 = vmatmul.mubr.f32.gmra.mxu0 %v2406
        %v2408 = vpop.f32.mrf.mxu0
        %v2409 = vadd.f32 0.0, %v2408
        %v2410 = vpop.f32.mrf.mxu0
        %v2411 = vadd.f32 0.0, %v2410
        %2412 = vdwg.mxu0
        %2413 = vmatprep.subr.mxu0 0.0
        %2414 = vmatpush1.msra.mxu0 0.0
        %2415 = vmatprep.subr.mxu0 0.0
        %2416 = vmatpush1.msra.mxu0 0.0
        %2417 = vmatprep.subr.mxu0 0.0
        %2418 = vmatpush1.msra.mxu0 0.0
        %2419 = vmatprep.subr.mxu0 0.0
        %2420 = vmatpush1.msra.mxu0 0.0
        %2421 = vmatprep.subr.mxu0 0.0
        %2422 = vmatpush1.msra.mxu0 0.0
        %2423 = vmatprep.subr.mxu0 0.0
        %2424 = vmatpush1.msra.mxu0 0.0
        %2425 = vmatprep.subr.mxu0 0.0
        %2426 = vmatpush1.msra.mxu0 0.0
        %2427 = vmatprep.subr.mxu0 0.0
        %2428 = vmatpush1.msra.mxu0 0.0
        %2429 = vmatprep.subr.mxu0 0.0
        %2430 = vmatpush1.msra.mxu0 0.0
        %2431 = vmatprep.subr.mxu0 0.0
        %2432 = vmatpush1.msra.mxu0 0.0
        %2433 = vmatprep.subr.mxu0 0.0
        %2434 = vmatpush1.msra.mxu0 0.0
        %2435 = vmatprep.subr.mxu0 0.0
        %2436 = vmatpush1.msra.mxu0 0.0
        %v2437 = vand.u32 %v2278, 4294901760
        %v2438 = vsub.f32 %v2278, %v2437
        %v2439 = vand.u32 %v2438, 4294901760
        %v2440 = vsub.f32 %v2438, %v2439
        %v2441 = vand.u32 %v2440, 4294901760
        %2442 = vmatprep.subr.mxu0 %v2441
        %v2443 = vand.u32 %v2277, 4294901760
        %v2444 = vsub.f32 %v2277, %v2443
        %v2445 = vand.u32 %v2444, 4294901760
        %v2446 = vsub.f32 %v2444, %v2445
        %v2447 = vand.u32 %v2446, 4294901760
        %2448 = vmatpush1.msra.mxu0 %v2447
        %v2449 = vand.u32 %v2276, 4294901760
        %v2450 = vsub.f32 %v2276, %v2449
        %v2451 = vand.u32 %v2450, 4294901760
        %v2452 = vsub.f32 %v2450, %v2451
        %v2453 = vand.u32 %v2452, 4294901760
        %2454 = vmatprep.subr.mxu0 %v2453
        %v2455 = vand.u32 %v2275, 4294901760
        %v2456 = vsub.f32 %v2275, %v2455
        %v2457 = vand.u32 %v2456, 4294901760
        %v2458 = vsub.f32 %v2456, %v2457
        %v2459 = vand.u32 %v2458, 4294901760
        %2460 = vmatpush1.msra.mxu0 %v2459
        %v2461 = vand.u32 %v2274, 4294901760
        %v2462 = vsub.f32 %v2274, %v2461
        %v2463 = vand.u32 %v2462, 4294901760
        %v2464 = vsub.f32 %v2462, %v2463
        %v2465 = vand.u32 %v2464, 4294901760
        %2466 = vmatprep.subr.mxu0 %v2465
        %v2467 = vand.u32 %v2273, 4294901760
        %v2468 = vsub.f32 %v2273, %v2467
        %v2469 = vand.u32 %v2468, 4294901760
        %v2470 = vsub.f32 %v2468, %v2469
        %v2471 = vand.u32 %v2470, 4294901760
        %2472 = vmatpush1.msra.mxu0 %v2471
        %v2473 = vand.u32 %v2272, 4294901760
        %v2474 = vsub.f32 %v2272, %v2473
        %v2475 = vand.u32 %v2474, 4294901760
        %v2476 = vsub.f32 %v2474, %v2475
        %v2477 = vand.u32 %v2476, 4294901760
        %2478 = vmatprep.subr.mxu0 %v2477
        %v2479 = vand.u32 %v2271, 4294901760
        %v2480 = vsub.f32 %v2271, %v2479
        %v2481 = vand.u32 %v2480, 4294901760
        %v2482 = vsub.f32 %v2480, %v2481
        %v2483 = vand.u32 %v2482, 4294901760
        %2484 = vmatpush1.msra.mxu0 %v2483
        %2485 = vmatprep.subr.mxu0 0.0
        %2486 = vmatpush2.msra.mxu0 0.0
        %2487 = vmatprep.subr.mxu0 0.0
        %2488 = vmatpush2.msra.mxu0 0.0
        %2489 = vmatprep.subr.mxu0 0.0
        %2490 = vmatpush2.msra.mxu0 0.0
        %2491 = vmatprep.subr.mxu0 0.0
        %2492 = vmatpush2.msra.mxu0 0.0
        %2493 = vmatprep.subr.mxu0 0.0
        %2494 = vmatpush2.msra.mxu0 0.0
        %2495 = vmatprep.subr.mxu0 0.0
        %2496 = vmatpush2.msra.mxu0 0.0
        %2497 = vmatprep.subr.mxu0 0.0
        %2498 = vmatpush2.msra.mxu0 0.0
        %2499 = vmatprep.subr.mxu0 0.0
        %2500 = vmatpush2.msra.mxu0 0.0
        %2501 = vmatprep.subr.mxu0 0.0
        %2502 = vmatpush2.msra.mxu0 0.0
        %2503 = vmatprep.subr.mxu0 0.0
        %2504 = vmatpush2.msra.mxu0 0.0
        %2505 = vmatprep.subr.mxu0 0.0
        %2506 = vmatpush2.msra.mxu0 0.0
        %2507 = vmatprep.subr.mxu0 0.0
        %2508 = vmatpush2.msra.mxu0 0.0
        %2509 = vmatprep.subr.mxu0 0.0
        %2510 = vmatpush2.msra.mxu0 0.0
        %2511 = vmatprep.subr.mxu0 0.0
        %2512 = vmatpush2.msra.mxu0 0.0
        %2513 = vmatprep.subr.mxu0 0.0
        %2514 = vmatpush2.msra.mxu0 0.0
        %2515 = vmatprep.subr.mxu0 0.0
        %2516 = vmatpush2.msra.mxu0 0.0
        %2517 = vmatprep.mubr.f32.mxu0 0.0
        %v2518 = vand.u32 %v2285, 4294901760
        %2519 = vmatmul.mubr.f32.gmra.mxu0 %v2518
        %v2520 = vpop.f32.mrf.mxu0
        %v2521 = vadd.f32 %v2376, %v2520
        %v2522 = vpop.f32.mrf.mxu0
        %v2523 = vadd.f32 %v2378, %v2522
        %2524 = vmatprep.mubr.f32.mxu0 0.0
        %v2525 = vand.u32 %v2288, 4294901760
        %2526 = vmatmul.mubr.f32.gmra.mxu0 %v2525
        %v2527 = vpop.f32.mrf.mxu0
        %v2528 = vadd.f32 %v2387, %v2527
        %v2529 = vpop.f32.mrf.mxu0
        %v2530 = vadd.f32 %v2389, %v2529
        %2531 = vmatprep.mubr.f32.mxu0 0.0
        %v2532 = vand.u32 %v2291, 4294901760
        %2533 = vmatmul.mubr.f32.gmra.mxu0 %v2532
        %v2534 = vpop.f32.mrf.mxu0
        %v2535 = vadd.f32 %v2398, %v2534
        %v2536 = vpop.f32.mrf.mxu0
        %v2537 = vadd.f32 %v2400, %v2536
        %2538 = vmatprep.mubr.f32.mxu0 0.0
        %v2539 = vand.u32 %v2294, 4294901760
        %2540 = vmatmul.mubr.f32.gmra.mxu0 %v2539
        %v2541 = vpop.f32.mrf.mxu0
        %v2542 = vadd.f32 %v2409, %v2541
        %v2543 = vpop.f32.mrf.mxu0
        %v2544 = vadd.f32 %v2411, %v2543
        %2545 = vdwg.mxu0
        %2546 = vmatprep.subr.mxu0 0.0
        %2547 = vmatpush1.msra.mxu0 0.0
        %2548 = vmatprep.subr.mxu0 0.0
        %2549 = vmatpush1.msra.mxu0 0.0
        %2550 = vmatprep.subr.mxu0 0.0
        %2551 = vmatpush1.msra.mxu0 0.0
        %2552 = vmatprep.subr.mxu0 0.0
        %2553 = vmatpush1.msra.mxu0 0.0
        %2554 = vmatprep.subr.mxu0 0.0
        %2555 = vmatpush1.msra.mxu0 0.0
        %2556 = vmatprep.subr.mxu0 0.0
        %2557 = vmatpush1.msra.mxu0 0.0
        %2558 = vmatprep.subr.mxu0 0.0
        %2559 = vmatpush1.msra.mxu0 0.0
        %2560 = vmatprep.subr.mxu0 0.0
        %2561 = vmatpush1.msra.mxu0 0.0
        %2562 = vmatprep.subr.mxu0 0.0
        %2563 = vmatpush1.msra.mxu0 0.0
        %2564 = vmatprep.subr.mxu0 0.0
        %2565 = vmatpush1.msra.mxu0 0.0
        %2566 = vmatprep.subr.mxu0 0.0
        %2567 = vmatpush1.msra.mxu0 0.0
        %2568 = vmatprep.subr.mxu0 0.0
        %2569 = vmatpush1.msra.mxu0 0.0
        %v2570 = vand.u32 %v2278, 4294901760
        %v2571 = vsub.f32 %v2278, %v2570
        %2572 = vmatprep.subr.mxu0 %v2571
        %v2573 = vand.u32 %v2277, 4294901760
        %v2574 = vsub.f32 %v2277, %v2573
        %2575 = vmatpush1.msra.mxu0 %v2574
        %v2576 = vand.u32 %v2276, 4294901760
        %v2577 = vsub.f32 %v2276, %v2576
        %2578 = vmatprep.subr.mxu0 %v2577
        %v2579 = vand.u32 %v2275, 4294901760
        %v2580 = vsub.f32 %v2275, %v2579
        %2581 = vmatpush1.msra.mxu0 %v2580
        %v2582 = vand.u32 %v2274, 4294901760
        %v2583 = vsub.f32 %v2274, %v2582
        %2584 = vmatprep.subr.mxu0 %v2583
        %v2585 = vand.u32 %v2273, 4294901760
        %v2586 = vsub.f32 %v2273, %v2585
        %2587 = vmatpush1.msra.mxu0 %v2586
        %v2588 = vand.u32 %v2272, 4294901760
        %v2589 = vsub.f32 %v2272, %v2588
        %2590 = vmatprep.subr.mxu0 %v2589
        %v2591 = vand.u32 %v2271, 4294901760
        %v2592 = vsub.f32 %v2271, %v2591
        %2593 = vmatpush1.msra.mxu0 %v2592
        %2594 = vmatprep.subr.mxu0 0.0
        %2595 = vmatpush2.msra.mxu0 0.0
        %2596 = vmatprep.subr.mxu0 0.0
        %2597 = vmatpush2.msra.mxu0 0.0
        %2598 = vmatprep.subr.mxu0 0.0
        %2599 = vmatpush2.msra.mxu0 0.0
        %2600 = vmatprep.subr.mxu0 0.0
        %2601 = vmatpush2.msra.mxu0 0.0
        %2602 = vmatprep.subr.mxu0 0.0
        %2603 = vmatpush2.msra.mxu0 0.0
        %2604 = vmatprep.subr.mxu0 0.0
        %2605 = vmatpush2.msra.mxu0 0.0
        %2606 = vmatprep.subr.mxu0 0.0
        %2607 = vmatpush2.msra.mxu0 0.0
        %2608 = vmatprep.subr.mxu0 0.0
        %2609 = vmatpush2.msra.mxu0 0.0
        %2610 = vmatprep.subr.mxu0 0.0
        %2611 = vmatpush2.msra.mxu0 0.0
        %2612 = vmatprep.subr.mxu0 0.0
        %2613 = vmatpush2.msra.mxu0 0.0
        %2614 = vmatprep.subr.mxu0 0.0
        %2615 = vmatpush2.msra.mxu0 0.0
        %2616 = vmatprep.subr.mxu0 0.0
        %2617 = vmatpush2.msra.mxu0 0.0
        %2618 = vmatprep.subr.mxu0 0.0
        %2619 = vmatpush2.msra.mxu0 0.0
        %2620 = vmatprep.subr.mxu0 0.0
        %2621 = vmatpush2.msra.mxu0 0.0
        %2622 = vmatprep.subr.mxu0 0.0
        %2623 = vmatpush2.msra.mxu0 0.0
        %2624 = vmatprep.subr.mxu0 0.0
        %2625 = vmatpush2.msra.mxu0 0.0
        %2626 = vmatprep.mubr.f32.mxu0 0.0
        %v2627 = vand.u32 %v2285, 4294901760
        %v2628 = vsub.f32 %v2285, %v2627
        %2629 = vmatmul.mubr.f32.gmra.mxu0 %v2628
        %v2630 = vpop.f32.mrf.mxu0
        %v2631 = vadd.f32 %v2521, %v2630
        %v2632 = vpop.f32.mrf.mxu0
        %v2633 = vadd.f32 %v2523, %v2632
        %2634 = vmatprep.mubr.f32.mxu0 0.0
        %v2635 = vand.u32 %v2288, 4294901760
        %v2636 = vsub.f32 %v2288, %v2635
        %2637 = vmatmul.mubr.f32.gmra.mxu0 %v2636
        %v2638 = vpop.f32.mrf.mxu0
        %v2639 = vadd.f32 %v2528, %v2638
        %v2640 = vpop.f32.mrf.mxu0
        %v2641 = vadd.f32 %v2530, %v2640
        %2642 = vmatprep.mubr.f32.mxu0 0.0
        %v2643 = vand.u32 %v2291, 4294901760
        %v2644 = vsub.f32 %v2291, %v2643
        %2645 = vmatmul.mubr.f32.gmra.mxu0 %v2644
        %v2646 = vpop.f32.mrf.mxu0
        %v2647 = vadd.f32 %v2535, %v2646
        %v2648 = vpop.f32.mrf.mxu0
        %v2649 = vadd.f32 %v2537, %v2648
        %2650 = vmatprep.mubr.f32.mxu0 0.0
        %v2651 = vand.u32 %v2294, 4294901760
        %v2652 = vsub.f32 %v2294, %v2651
        %2653 = vmatmul.mubr.f32.gmra.mxu0 %v2652
        %v2654 = vpop.f32.mrf.mxu0
        %v2655 = vadd.f32 %v2542, %v2654
        %v2656 = vpop.f32.mrf.mxu0
        %v2657 = vadd.f32 %v2544, %v2656
        %2658 = vdwg.mxu0
        %2659 = vmatprep.subr.mxu0 0.0
        %2660 = vmatpush1.msra.mxu0 0.0
        %2661 = vmatprep.subr.mxu0 0.0
        %2662 = vmatpush1.msra.mxu0 0.0
        %2663 = vmatprep.subr.mxu0 0.0
        %2664 = vmatpush1.msra.mxu0 0.0
        %2665 = vmatprep.subr.mxu0 0.0
        %2666 = vmatpush1.msra.mxu0 0.0
        %2667 = vmatprep.subr.mxu0 0.0
        %2668 = vmatpush1.msra.mxu0 0.0
        %2669 = vmatprep.subr.mxu0 0.0
        %2670 = vmatpush1.msra.mxu0 0.0
        %2671 = vmatprep.subr.mxu0 0.0
        %2672 = vmatpush1.msra.mxu0 0.0
        %2673 = vmatprep.subr.mxu0 0.0
        %2674 = vmatpush1.msra.mxu0 0.0
        %2675 = vmatprep.subr.mxu0 0.0
        %2676 = vmatpush1.msra.mxu0 0.0
        %2677 = vmatprep.subr.mxu0 0.0
        %2678 = vmatpush1.msra.mxu0 0.0
        %2679 = vmatprep.subr.mxu0 0.0
        %2680 = vmatpush1.msra.mxu0 0.0
        %2681 = vmatprep.subr.mxu0 0.0
        %2682 = vmatpush1.msra.mxu0 0.0
        %v2683 = vand.u32 %v2278, 4294901760
        %2684 = vmatprep.subr.mxu0 %v2683
        %v2685 = vand.u32 %v2277, 4294901760
        %2686 = vmatpush1.msra.mxu0 %v2685
        %v2687 = vand.u32 %v2276, 4294901760
        %2688 = vmatprep.subr.mxu0 %v2687
        %v2689 = vand.u32 %v2275, 4294901760
        %2690 = vmatpush1.msra.mxu0 %v2689
        %v2691 = vand.u32 %v2274, 4294901760
        %2692 = vmatprep.subr.mxu0 %v2691
        %v2693 = vand.u32 %v2273, 4294901760
        %2694 = vmatpush1.msra.mxu0 %v2693
        %v2695 = vand.u32 %v2272, 4294901760
        %2696 = vmatprep.subr.mxu0 %v2695
        %v2697 = vand.u32 %v2271, 4294901760
        %2698 = vmatpush1.msra.mxu0 %v2697
        %2699 = vmatprep.subr.mxu0 0.0
        %2700 = vmatpush2.msra.mxu0 0.0
        %2701 = vmatprep.subr.mxu0 0.0
        %2702 = vmatpush2.msra.mxu0 0.0
        %2703 = vmatprep.subr.mxu0 0.0
        %2704 = vmatpush2.msra.mxu0 0.0
        %2705 = vmatprep.subr.mxu0 0.0
        %2706 = vmatpush2.msra.mxu0 0.0
        %2707 = vmatprep.subr.mxu0 0.0
        %2708 = vmatpush2.msra.mxu0 0.0
        %2709 = vmatprep.subr.mxu0 0.0
        %2710 = vmatpush2.msra.mxu0 0.0
        %2711 = vmatprep.subr.mxu0 0.0
        %2712 = vmatpush2.msra.mxu0 0.0
        %2713 = vmatprep.subr.mxu0 0.0
        %2714 = vmatpush2.msra.mxu0 0.0
        %2715 = vmatprep.subr.mxu0 0.0
        %2716 = vmatpush2.msra.mxu0 0.0
        %2717 = vmatprep.subr.mxu0 0.0
        %2718 = vmatpush2.msra.mxu0 0.0
        %2719 = vmatprep.subr.mxu0 0.0
        %2720 = vmatpush2.msra.mxu0 0.0
        %2721 = vmatprep.subr.mxu0 0.0
        %2722 = vmatpush2.msra.mxu0 0.0
        %2723 = vmatprep.subr.mxu0 0.0
        %2724 = vmatpush2.msra.mxu0 0.0
        %2725 = vmatprep.subr.mxu0 0.0
        %2726 = vmatpush2.msra.mxu0 0.0
        %2727 = vmatprep.subr.mxu0 0.0
        %2728 = vmatpush2.msra.mxu0 0.0
        %2729 = vmatprep.subr.mxu0 0.0
        %2730 = vmatpush2.msra.mxu0 0.0
        %2731 = vmatprep.mubr.f32.mxu0 0.0
        %v2732 = vand.u32 %v2285, 4294901760
        %v2733 = vsub.f32 %v2285, %v2732
        %v2734 = vand.u32 %v2733, 4294901760
        %2735 = vmatmul.mubr.f32.gmra.mxu0 %v2734
        %v2736 = vpop.f32.mrf.mxu0
        %v2737 = vadd.f32 %v2631, %v2736
        %v2738 = vpop.f32.mrf.mxu0
        %v2739 = vadd.f32 %v2633, %v2738
        %2740 = vmatprep.mubr.f32.mxu0 0.0
        %v2741 = vand.u32 %v2288, 4294901760
        %v2742 = vsub.f32 %v2288, %v2741
        %v2743 = vand.u32 %v2742, 4294901760
        %2744 = vmatmul.mubr.f32.gmra.mxu0 %v2743
        %v2745 = vpop.f32.mrf.mxu0
        %v2746 = vadd.f32 %v2639, %v2745
        %v2747 = vpop.f32.mrf.mxu0
        %v2748 = vadd.f32 %v2641, %v2747
        %2749 = vmatprep.mubr.f32.mxu0 0.0
        %v2750 = vand.u32 %v2291, 4294901760
        %v2751 = vsub.f32 %v2291, %v2750
        %v2752 = vand.u32 %v2751, 4294901760
        %2753 = vmatmul.mubr.f32.gmra.mxu0 %v2752
        %v2754 = vpop.f32.mrf.mxu0
        %v2755 = vadd.f32 %v2647, %v2754
        %v2756 = vpop.f32.mrf.mxu0
        %v2757 = vadd.f32 %v2649, %v2756
        %2758 = vmatprep.mubr.f32.mxu0 0.0
        %v2759 = vand.u32 %v2294, 4294901760
        %v2760 = vsub.f32 %v2294, %v2759
        %v2761 = vand.u32 %v2760, 4294901760
        %2762 = vmatmul.mubr.f32.gmra.mxu0 %v2761
        %v2763 = vpop.f32.mrf.mxu0
        %v2764 = vadd.f32 %v2655, %v2763
        %v2765 = vpop.f32.mrf.mxu0
        %v2766 = vadd.f32 %v2657, %v2765
        %2767 = vdwg.mxu0
        %2768 = vmatprep.subr.mxu0 0.0
        %2769 = vmatpush1.msra.mxu0 0.0
        %2770 = vmatprep.subr.mxu0 0.0
        %2771 = vmatpush1.msra.mxu0 0.0
        %2772 = vmatprep.subr.mxu0 0.0
        %2773 = vmatpush1.msra.mxu0 0.0
        %2774 = vmatprep.subr.mxu0 0.0
        %2775 = vmatpush1.msra.mxu0 0.0
        %2776 = vmatprep.subr.mxu0 0.0
        %2777 = vmatpush1.msra.mxu0 0.0
        %2778 = vmatprep.subr.mxu0 0.0
        %2779 = vmatpush1.msra.mxu0 0.0
        %2780 = vmatprep.subr.mxu0 0.0
        %2781 = vmatpush1.msra.mxu0 0.0
        %2782 = vmatprep.subr.mxu0 0.0
        %2783 = vmatpush1.msra.mxu0 0.0
        %2784 = vmatprep.subr.mxu0 0.0
        %2785 = vmatpush1.msra.mxu0 0.0
        %2786 = vmatprep.subr.mxu0 0.0
        %2787 = vmatpush1.msra.mxu0 0.0
        %2788 = vmatprep.subr.mxu0 0.0
        %2789 = vmatpush1.msra.mxu0 0.0
        %2790 = vmatprep.subr.mxu0 0.0
        %2791 = vmatpush1.msra.mxu0 0.0
        %v2792 = vand.u32 %v2278, 4294901760
        %v2793 = vsub.f32 %v2278, %v2792
        %v2794 = vand.u32 %v2793, 4294901760
        %2795 = vmatprep.subr.mxu0 %v2794
        %v2796 = vand.u32 %v2277, 4294901760
        %v2797 = vsub.f32 %v2277, %v2796
        %v2798 = vand.u32 %v2797, 4294901760
        %2799 = vmatpush1.msra.mxu0 %v2798
        %v2800 = vand.u32 %v2276, 4294901760
        %v2801 = vsub.f32 %v2276, %v2800
        %v2802 = vand.u32 %v2801, 4294901760
        %2803 = vmatprep.subr.mxu0 %v2802
        %v2804 = vand.u32 %v2275, 4294901760
        %v2805 = vsub.f32 %v2275, %v2804
        %v2806 = vand.u32 %v2805, 4294901760
        %2807 = vmatpush1.msra.mxu0 %v2806
        %v2808 = vand.u32 %v2274, 4294901760
        %v2809 = vsub.f32 %v2274, %v2808
        %v2810 = vand.u32 %v2809, 4294901760
        %2811 = vmatprep.subr.mxu0 %v2810
        %v2812 = vand.u32 %v2273, 4294901760
        %v2813 = vsub.f32 %v2273, %v2812
        %v2814 = vand.u32 %v2813, 4294901760
        %2815 = vmatpush1.msra.mxu0 %v2814
        %v2816 = vand.u32 %v2272, 4294901760
        %v2817 = vsub.f32 %v2272, %v2816
        %v2818 = vand.u32 %v2817, 4294901760
        %2819 = vmatprep.subr.mxu0 %v2818
        %v2820 = vand.u32 %v2271, 4294901760
        %v2821 = vsub.f32 %v2271, %v2820
        %v2822 = vand.u32 %v2821, 4294901760
        %2823 = vmatpush1.msra.mxu0 %v2822
        %2824 = vmatprep.subr.mxu0 0.0
        %2825 = vmatpush2.msra.mxu0 0.0
        %2826 = vmatprep.subr.mxu0 0.0
        %2827 = vmatpush2.msra.mxu0 0.0
        %2828 = vmatprep.subr.mxu0 0.0
        %2829 = vmatpush2.msra.mxu0 0.0
        %2830 = vmatprep.subr.mxu0 0.0
        %2831 = vmatpush2.msra.mxu0 0.0
        %2832 = vmatprep.subr.mxu0 0.0
        %2833 = vmatpush2.msra.mxu0 0.0
        %2834 = vmatprep.subr.mxu0 0.0
        %2835 = vmatpush2.msra.mxu0 0.0
        %2836 = vmatprep.subr.mxu0 0.0
        %2837 = vmatpush2.msra.mxu0 0.0
        %2838 = vmatprep.subr.mxu0 0.0
        %2839 = vmatpush2.msra.mxu0 0.0
        %2840 = vmatprep.subr.mxu0 0.0
        %2841 = vmatpush2.msra.mxu0 0.0
        %2842 = vmatprep.subr.mxu0 0.0
        %2843 = vmatpush2.msra.mxu0 0.0
        %2844 = vmatprep.subr.mxu0 0.0
        %2845 = vmatpush2.msra.mxu0 0.0
        %2846 = vmatprep.subr.mxu0 0.0
        %2847 = vmatpush2.msra.mxu0 0.0
        %2848 = vmatprep.subr.mxu0 0.0
        %2849 = vmatpush2.msra.mxu0 0.0
        %2850 = vmatprep.subr.mxu0 0.0
        %2851 = vmatpush2.msra.mxu0 0.0
        %2852 = vmatprep.subr.mxu0 0.0
        %2853 = vmatpush2.msra.mxu0 0.0
        %2854 = vmatprep.subr.mxu0 0.0
        %2855 = vmatpush2.msra.mxu0 0.0
        %2856 = vmatprep.mubr.f32.mxu0 0.0
        %v2857 = vand.u32 %v2285, 4294901760
        %2858 = vmatmul.mubr.f32.gmra.mxu0 %v2857
        %v2859 = vpop.f32.mrf.mxu0
        %v2860 = vadd.f32 %v2737, %v2859
        %v2861 = vpop.f32.mrf.mxu0
        %v2862 = vadd.f32 %v2739, %v2861
        %2863 = vmatprep.mubr.f32.mxu0 0.0
        %v2864 = vand.u32 %v2288, 4294901760
        %2865 = vmatmul.mubr.f32.gmra.mxu0 %v2864
        %v2866 = vpop.f32.mrf.mxu0
        %v2867 = vadd.f32 %v2746, %v2866
        %v2868 = vpop.f32.mrf.mxu0
        %v2869 = vadd.f32 %v2748, %v2868
        %2870 = vmatprep.mubr.f32.mxu0 0.0
        %v2871 = vand.u32 %v2291, 4294901760
        %2872 = vmatmul.mubr.f32.gmra.mxu0 %v2871
        %v2873 = vpop.f32.mrf.mxu0
        %v2874 = vadd.f32 %v2755, %v2873
        %v2875 = vpop.f32.mrf.mxu0
        %v2876 = vadd.f32 %v2757, %v2875
        %2877 = vmatprep.mubr.f32.mxu0 0.0
        %v2878 = vand.u32 %v2294, 4294901760
        %2879 = vmatmul.mubr.f32.gmra.mxu0 %v2878
        %v2880 = vpop.f32.mrf.mxu0
        %v2881 = vadd.f32 %v2764, %v2880
        %v2882 = vpop.f32.mrf.mxu0
        %v2883 = vadd.f32 %v2766, %v2882
        %2884 = vdwg.mxu0
        %2885 = vmatprep.subr.mxu0 0.0
        %2886 = vmatpush1.msra.mxu0 0.0
        %2887 = vmatprep.subr.mxu0 0.0
        %2888 = vmatpush1.msra.mxu0 0.0
        %2889 = vmatprep.subr.mxu0 0.0
        %2890 = vmatpush1.msra.mxu0 0.0
        %2891 = vmatprep.subr.mxu0 0.0
        %2892 = vmatpush1.msra.mxu0 0.0
        %2893 = vmatprep.subr.mxu0 0.0
        %2894 = vmatpush1.msra.mxu0 0.0
        %2895 = vmatprep.subr.mxu0 0.0
        %2896 = vmatpush1.msra.mxu0 0.0
        %2897 = vmatprep.subr.mxu0 0.0
        %2898 = vmatpush1.msra.mxu0 0.0
        %2899 = vmatprep.subr.mxu0 0.0
        %2900 = vmatpush1.msra.mxu0 0.0
        %2901 = vmatprep.subr.mxu0 0.0
        %2902 = vmatpush1.msra.mxu0 0.0
        %2903 = vmatprep.subr.mxu0 0.0
        %2904 = vmatpush1.msra.mxu0 0.0
        %2905 = vmatprep.subr.mxu0 0.0
        %2906 = vmatpush1.msra.mxu0 0.0
        %2907 = vmatprep.subr.mxu0 0.0
        %2908 = vmatpush1.msra.mxu0 0.0
        %v2909 = vand.u32 %v2278, 4294901760
        %2910 = vmatprep.subr.mxu0 %v2909
        %v2911 = vand.u32 %v2277, 4294901760
        %2912 = vmatpush1.msra.mxu0 %v2911
        %v2913 = vand.u32 %v2276, 4294901760
        %2914 = vmatprep.subr.mxu0 %v2913
        %v2915 = vand.u32 %v2275, 4294901760
        %2916 = vmatpush1.msra.mxu0 %v2915
        %v2917 = vand.u32 %v2274, 4294901760
        %2918 = vmatprep.subr.mxu0 %v2917
        %v2919 = vand.u32 %v2273, 4294901760
        %2920 = vmatpush1.msra.mxu0 %v2919
        %v2921 = vand.u32 %v2272, 4294901760
        %2922 = vmatprep.subr.mxu0 %v2921
        %v2923 = vand.u32 %v2271, 4294901760
        %2924 = vmatpush1.msra.mxu0 %v2923
        %2925 = vmatprep.subr.mxu0 0.0
        %2926 = vmatpush2.msra.mxu0 0.0
        %2927 = vmatprep.subr.mxu0 0.0
        %2928 = vmatpush2.msra.mxu0 0.0
        %2929 = vmatprep.subr.mxu0 0.0
        %2930 = vmatpush2.msra.mxu0 0.0
        %2931 = vmatprep.subr.mxu0 0.0
        %2932 = vmatpush2.msra.mxu0 0.0
        %2933 = vmatprep.subr.mxu0 0.0
        %2934 = vmatpush2.msra.mxu0 0.0
        %2935 = vmatprep.subr.mxu0 0.0
        %2936 = vmatpush2.msra.mxu0 0.0
        %2937 = vmatprep.subr.mxu0 0.0
        %2938 = vmatpush2.msra.mxu0 0.0
        %2939 = vmatprep.subr.mxu0 0.0
        %2940 = vmatpush2.msra.mxu0 0.0
        %2941 = vmatprep.subr.mxu0 0.0
        %2942 = vmatpush2.msra.mxu0 0.0
        %2943 = vmatprep.subr.mxu0 0.0
        %2944 = vmatpush2.msra.mxu0 0.0
        %2945 = vmatprep.subr.mxu0 0.0
        %2946 = vmatpush2.msra.mxu0 0.0
        %2947 = vmatprep.subr.mxu0 0.0
        %2948 = vmatpush2.msra.mxu0 0.0
        %2949 = vmatprep.subr.mxu0 0.0
        %2950 = vmatpush2.msra.mxu0 0.0
        %2951 = vmatprep.subr.mxu0 0.0
        %2952 = vmatpush2.msra.mxu0 0.0
        %2953 = vmatprep.subr.mxu0 0.0
        %2954 = vmatpush2.msra.mxu0 0.0
        %2955 = vmatprep.subr.mxu0 0.0
        %2956 = vmatpush2.msra.mxu0 0.0
        %2957 = vmatprep.mubr.f32.mxu0 0.0
        %v2958 = vand.u32 %v2285, 4294901760
        %2959 = vmatmul.mubr.f32.gmra.mxu0 %v2958
        %v2960 = vpop.f32.mrf.mxu0
        %v2961 = vadd.f32 %v2860, %v2960
        %v2962 = vpop.f32.mrf.mxu0
        %v2963 = vadd.f32 %v2862, %v2962
        %2964 = vmatprep.mubr.f32.mxu0 0.0
        %v2965 = vand.u32 %v2288, 4294901760
        %2966 = vmatmul.mubr.f32.gmra.mxu0 %v2965
        %v2967 = vpop.f32.mrf.mxu0
        %v2968 = vadd.f32 %v2867, %v2967
        %v2969 = vpop.f32.mrf.mxu0
        %v2970 = vadd.f32 %v2869, %v2969
        %2971 = vmatprep.mubr.f32.mxu0 0.0
        %v2972 = vand.u32 %v2291, 4294901760
        %2973 = vmatmul.mubr.f32.gmra.mxu0 %v2972
        %v2974 = vpop.f32.mrf.mxu0
        %v2975 = vadd.f32 %v2874, %v2974
        %v2976 = vpop.f32.mrf.mxu0
        %v2977 = vadd.f32 %v2876, %v2976
        %2978 = vmatprep.mubr.f32.mxu0 0.0
        %v2979 = vand.u32 %v2294, 4294901760
        %2980 = vmatmul.mubr.f32.gmra.mxu0 %v2979
        %v2981 = vpop.f32.mrf.mxu0
        %v2982 = vadd.f32 %v2881, %v2981
        %v2983 = vpop.f32.mrf.mxu0
        %v2984 = vadd.f32 %v2883, %v2983
        %2985 = vdwg.mxu0
        %v2986 = vmax.f32 %v2961, 0.0
        %v2987 = vmax.f32 %v2963, 0.0
        %v2988 = vmax.f32 %v2968, 0.0
        %v2989 = vmax.f32 %v2970, 0.0
        %v2990 = vmax.f32 %v2975, 0.0
        %v2991 = vmax.f32 %v2977, 0.0
        %v2992 = vmax.f32 %v2982, 0.0
        %v2993 = vmax.f32 %v2984, 0.0
        %s2994 = scalar_lea.vmem [#allocation3], 128
        %v2995 = vld [vmem:[%s2994] sm:$0xff]
        %v2996 = vld [vmem:[%s2994 + $0x8] sm:$0xff]
        %v2997 = vld [vmem:[%s2994 + $0x10] sm:$0xff]
        %v2998 = vld [vmem:[%s2994 + $0x18] sm:$0xff]
        %v3000 = vsel %vm853, %v2995, 0
        %v3003 = vsel %vm853, %v2996, 0
        %v3006 = vsel %vm853, %v2997, 0
        %v3009 = vsel %vm853, %v2998, 0
        %3011 = vmatprep.subr.mxu0 0.0
        %3012 = vmatpush1.msra.mxu0 0.0
        %3013 = vmatprep.subr.mxu0 0.0
        %3014 = vmatpush1.msra.mxu0 0.0
        %3015 = vmatprep.subr.mxu0 0.0
        %3016 = vmatpush1.msra.mxu0 0.0
        %3017 = vmatprep.subr.mxu0 0.0
        %3018 = vmatpush1.msra.mxu0 0.0
        %3019 = vmatprep.subr.mxu0 0.0
        %3020 = vmatpush1.msra.mxu0 0.0
        %3021 = vmatprep.subr.mxu0 0.0
        %3022 = vmatpush1.msra.mxu0 0.0
        %3023 = vmatprep.subr.mxu0 0.0
        %3024 = vmatpush1.msra.mxu0 0.0
        %3025 = vmatprep.subr.mxu0 0.0
        %3026 = vmatpush1.msra.mxu0 0.0
        %3027 = vmatprep.subr.mxu0 0.0
        %3028 = vmatpush1.msra.mxu0 0.0
        %3029 = vmatprep.subr.mxu0 0.0
        %3030 = vmatpush1.msra.mxu0 0.0
        %3031 = vmatprep.subr.mxu0 0.0
        %3032 = vmatpush1.msra.mxu0 0.0
        %3033 = vmatprep.subr.mxu0 0.0
        %3034 = vmatpush1.msra.mxu0 0.0
        %v3035 = vand.u32 %v2993, 4294901760
        %3036 = vmatprep.subr.mxu0 %v3035
        %v3037 = vand.u32 %v2992, 4294901760
        %3038 = vmatpush1.msra.mxu0 %v3037
        %v3039 = vand.u32 %v2991, 4294901760
        %3040 = vmatprep.subr.mxu0 %v3039
        %v3041 = vand.u32 %v2990, 4294901760
        %3042 = vmatpush1.msra.mxu0 %v3041
        %v3043 = vand.u32 %v2989, 4294901760
        %3044 = vmatprep.subr.mxu0 %v3043
        %v3045 = vand.u32 %v2988, 4294901760
        %3046 = vmatpush1.msra.mxu0 %v3045
        %v3047 = vand.u32 %v2987, 4294901760
        %3048 = vmatprep.subr.mxu0 %v3047
        %v3049 = vand.u32 %v2986, 4294901760
        %3050 = vmatpush1.msra.mxu0 %v3049
        %3051 = vmatprep.subr.mxu0 0.0
        %3052 = vmatpush2.msra.mxu0 0.0
        %3053 = vmatprep.subr.mxu0 0.0
        %3054 = vmatpush2.msra.mxu0 0.0
        %3055 = vmatprep.subr.mxu0 0.0
        %3056 = vmatpush2.msra.mxu0 0.0
        %3057 = vmatprep.subr.mxu0 0.0
        %3058 = vmatpush2.msra.mxu0 0.0
        %3059 = vmatprep.subr.mxu0 0.0
        %3060 = vmatpush2.msra.mxu0 0.0
        %3061 = vmatprep.subr.mxu0 0.0
        %3062 = vmatpush2.msra.mxu0 0.0
        %3063 = vmatprep.subr.mxu0 0.0
        %3064 = vmatpush2.msra.mxu0 0.0
        %3065 = vmatprep.subr.mxu0 0.0
        %3066 = vmatpush2.msra.mxu0 0.0
        %3067 = vmatprep.subr.mxu0 0.0
        %3068 = vmatpush2.msra.mxu0 0.0
        %3069 = vmatprep.subr.mxu0 0.0
        %3070 = vmatpush2.msra.mxu0 0.0
        %3071 = vmatprep.subr.mxu0 0.0
        %3072 = vmatpush2.msra.mxu0 0.0
        %3073 = vmatprep.subr.mxu0 0.0
        %3074 = vmatpush2.msra.mxu0 0.0
        %3075 = vmatprep.subr.mxu0 0.0
        %3076 = vmatpush2.msra.mxu0 0.0
        %3077 = vmatprep.subr.mxu0 0.0
        %3078 = vmatpush2.msra.mxu0 0.0
        %3079 = vmatprep.subr.mxu0 0.0
        %3080 = vmatpush2.msra.mxu0 0.0
        %3081 = vmatprep.subr.mxu0 0.0
        %3082 = vmatpush2.msra.mxu0 0.0
        %3083 = vmatprep.mubr.f32.mxu0 0.0
        %v3084 = vand.u32 %v3000, 4294901760
        %v3085 = vsub.f32 %v3000, %v3084
        %v3086 = vand.u32 %v3085, 4294901760
        %v3087 = vsub.f32 %v3085, %v3086
        %v3088 = vand.u32 %v3087, 4294901760
        %3089 = vmatmul.mubr.f32.gmra.mxu0 %v3088
        %v3090 = vpop.f32.mrf.mxu0
        %v3091 = vadd.f32 0.0, %v3090
        %v3092 = vpop.f32.mrf.mxu0
        %v3093 = vadd.f32 0.0, %v3092
        %3094 = vmatprep.mubr.f32.mxu0 0.0
        %v3095 = vand.u32 %v3003, 4294901760
        %v3096 = vsub.f32 %v3003, %v3095
        %v3097 = vand.u32 %v3096, 4294901760
        %v3098 = vsub.f32 %v3096, %v3097
        %v3099 = vand.u32 %v3098, 4294901760
        %3100 = vmatmul.mubr.f32.gmra.mxu0 %v3099
        %v3101 = vpop.f32.mrf.mxu0
        %v3102 = vadd.f32 0.0, %v3101
        %v3103 = vpop.f32.mrf.mxu0
        %v3104 = vadd.f32 0.0, %v3103
        %3105 = vmatprep.mubr.f32.mxu0 0.0
        %v3106 = vand.u32 %v3006, 4294901760
        %v3107 = vsub.f32 %v3006, %v3106
        %v3108 = vand.u32 %v3107, 4294901760
        %v3109 = vsub.f32 %v3107, %v3108
        %v3110 = vand.u32 %v3109, 4294901760
        %3111 = vmatmul.mubr.f32.gmra.mxu0 %v3110
        %v3112 = vpop.f32.mrf.mxu0
        %v3113 = vadd.f32 0.0, %v3112
        %v3114 = vpop.f32.mrf.mxu0
        %v3115 = vadd.f32 0.0, %v3114
        %3116 = vmatprep.mubr.f32.mxu0 0.0
        %v3117 = vand.u32 %v3009, 4294901760
        %v3118 = vsub.f32 %v3009, %v3117
        %v3119 = vand.u32 %v3118, 4294901760
        %v3120 = vsub.f32 %v3118, %v3119
        %v3121 = vand.u32 %v3120, 4294901760
        %3122 = vmatmul.mubr.f32.gmra.mxu0 %v3121
        %v3123 = vpop.f32.mrf.mxu0
        %v3124 = vadd.f32 0.0, %v3123
        %v3125 = vpop.f32.mrf.mxu0
        %v3126 = vadd.f32 0.0, %v3125
        %3127 = vdwg.mxu0
        %3128 = vmatprep.subr.mxu0 0.0
        %3129 = vmatpush1.msra.mxu0 0.0
        %3130 = vmatprep.subr.mxu0 0.0
        %3131 = vmatpush1.msra.mxu0 0.0
        %3132 = vmatprep.subr.mxu0 0.0
        %3133 = vmatpush1.msra.mxu0 0.0
        %3134 = vmatprep.subr.mxu0 0.0
        %3135 = vmatpush1.msra.mxu0 0.0
        %3136 = vmatprep.subr.mxu0 0.0
        %3137 = vmatpush1.msra.mxu0 0.0
        %3138 = vmatprep.subr.mxu0 0.0
        %3139 = vmatpush1.msra.mxu0 0.0
        %3140 = vmatprep.subr.mxu0 0.0
        %3141 = vmatpush1.msra.mxu0 0.0
        %3142 = vmatprep.subr.mxu0 0.0
        %3143 = vmatpush1.msra.mxu0 0.0
        %3144 = vmatprep.subr.mxu0 0.0
        %3145 = vmatpush1.msra.mxu0 0.0
        %3146 = vmatprep.subr.mxu0 0.0
        %3147 = vmatpush1.msra.mxu0 0.0
        %3148 = vmatprep.subr.mxu0 0.0
        %3149 = vmatpush1.msra.mxu0 0.0
        %3150 = vmatprep.subr.mxu0 0.0
        %3151 = vmatpush1.msra.mxu0 0.0
        %v3152 = vand.u32 %v2993, 4294901760
        %v3153 = vsub.f32 %v2993, %v3152
        %v3154 = vand.u32 %v3153, 4294901760
        %v3155 = vsub.f32 %v3153, %v3154
        %v3156 = vand.u32 %v3155, 4294901760
        %3157 = vmatprep.subr.mxu0 %v3156
        %v3158 = vand.u32 %v2992, 4294901760
        %v3159 = vsub.f32 %v2992, %v3158
        %v3160 = vand.u32 %v3159, 4294901760
        %v3161 = vsub.f32 %v3159, %v3160
        %v3162 = vand.u32 %v3161, 4294901760
        %3163 = vmatpush1.msra.mxu0 %v3162
        %v3164 = vand.u32 %v2991, 4294901760
        %v3165 = vsub.f32 %v2991, %v3164
        %v3166 = vand.u32 %v3165, 4294901760
        %v3167 = vsub.f32 %v3165, %v3166
        %v3168 = vand.u32 %v3167, 4294901760
        %3169 = vmatprep.subr.mxu0 %v3168
        %v3170 = vand.u32 %v2990, 4294901760
        %v3171 = vsub.f32 %v2990, %v3170
        %v3172 = vand.u32 %v3171, 4294901760
        %v3173 = vsub.f32 %v3171, %v3172
        %v3174 = vand.u32 %v3173, 4294901760
        %3175 = vmatpush1.msra.mxu0 %v3174
        %v3176 = vand.u32 %v2989, 4294901760
        %v3177 = vsub.f32 %v2989, %v3176
        %v3178 = vand.u32 %v3177, 4294901760
        %v3179 = vsub.f32 %v3177, %v3178
        %v3180 = vand.u32 %v3179, 4294901760
        %3181 = vmatprep.subr.mxu0 %v3180
        %v3182 = vand.u32 %v2988, 4294901760
        %v3183 = vsub.f32 %v2988, %v3182
        %v3184 = vand.u32 %v3183, 4294901760
        %v3185 = vsub.f32 %v3183, %v3184
        %v3186 = vand.u32 %v3185, 4294901760
        %3187 = vmatpush1.msra.mxu0 %v3186
        %v3188 = vand.u32 %v2987, 4294901760
        %v3189 = vsub.f32 %v2987, %v3188
        %v3190 = vand.u32 %v3189, 4294901760
        %v3191 = vsub.f32 %v3189, %v3190
        %v3192 = vand.u32 %v3191, 4294901760
        %3193 = vmatprep.subr.mxu0 %v3192
        %v3194 = vand.u32 %v2986, 4294901760
        %v3195 = vsub.f32 %v2986, %v3194
        %v3196 = vand.u32 %v3195, 4294901760
        %v3197 = vsub.f32 %v3195, %v3196
        %v3198 = vand.u32 %v3197, 4294901760
        %3199 = vmatpush1.msra.mxu0 %v3198
        %3200 = vmatprep.subr.mxu0 0.0
        %3201 = vmatpush2.msra.mxu0 0.0
        %3202 = vmatprep.subr.mxu0 0.0
        %3203 = vmatpush2.msra.mxu0 0.0
        %3204 = vmatprep.subr.mxu0 0.0
        %3205 = vmatpush2.msra.mxu0 0.0
        %3206 = vmatprep.subr.mxu0 0.0
        %3207 = vmatpush2.msra.mxu0 0.0
        %3208 = vmatprep.subr.mxu0 0.0
        %3209 = vmatpush2.msra.mxu0 0.0
        %3210 = vmatprep.subr.mxu0 0.0
        %3211 = vmatpush2.msra.mxu0 0.0
        %3212 = vmatprep.subr.mxu0 0.0
        %3213 = vmatpush2.msra.mxu0 0.0
        %3214 = vmatprep.subr.mxu0 0.0
        %3215 = vmatpush2.msra.mxu0 0.0
        %3216 = vmatprep.subr.mxu0 0.0
        %3217 = vmatpush2.msra.mxu0 0.0
        %3218 = vmatprep.subr.mxu0 0.0
        %3219 = vmatpush2.msra.mxu0 0.0
        %3220 = vmatprep.subr.mxu0 0.0
        %3221 = vmatpush2.msra.mxu0 0.0
        %3222 = vmatprep.subr.mxu0 0.0
        %3223 = vmatpush2.msra.mxu0 0.0
        %3224 = vmatprep.subr.mxu0 0.0
        %3225 = vmatpush2.msra.mxu0 0.0
        %3226 = vmatprep.subr.mxu0 0.0
        %3227 = vmatpush2.msra.mxu0 0.0
        %3228 = vmatprep.subr.mxu0 0.0
        %3229 = vmatpush2.msra.mxu0 0.0
        %3230 = vmatprep.subr.mxu0 0.0
        %3231 = vmatpush2.msra.mxu0 0.0
        %3232 = vmatprep.mubr.f32.mxu0 0.0
        %v3233 = vand.u32 %v3000, 4294901760
        %3234 = vmatmul.mubr.f32.gmra.mxu0 %v3233
        %v3235 = vpop.f32.mrf.mxu0
        %v3236 = vadd.f32 %v3091, %v3235
        %v3237 = vpop.f32.mrf.mxu0
        %v3238 = vadd.f32 %v3093, %v3237
        %3239 = vmatprep.mubr.f32.mxu0 0.0
        %v3240 = vand.u32 %v3003, 4294901760
        %3241 = vmatmul.mubr.f32.gmra.mxu0 %v3240
        %v3242 = vpop.f32.mrf.mxu0
        %v3243 = vadd.f32 %v3102, %v3242
        %v3244 = vpop.f32.mrf.mxu0
        %v3245 = vadd.f32 %v3104, %v3244
        %3246 = vmatprep.mubr.f32.mxu0 0.0
        %v3247 = vand.u32 %v3006, 4294901760
        %3248 = vmatmul.mubr.f32.gmra.mxu0 %v3247
        %v3249 = vpop.f32.mrf.mxu0
        %v3250 = vadd.f32 %v3113, %v3249
        %v3251 = vpop.f32.mrf.mxu0
        %v3252 = vadd.f32 %v3115, %v3251
        %3253 = vmatprep.mubr.f32.mxu0 0.0
        %v3254 = vand.u32 %v3009, 4294901760
        %3255 = vmatmul.mubr.f32.gmra.mxu0 %v3254
        %v3256 = vpop.f32.mrf.mxu0
        %v3257 = vadd.f32 %v3124, %v3256
        %v3258 = vpop.f32.mrf.mxu0
        %v3259 = vadd.f32 %v3126, %v3258
        %3260 = vdwg.mxu0
        %3261 = vmatprep.subr.mxu0 0.0
        %3262 = vmatpush1.msra.mxu0 0.0
        %3263 = vmatprep.subr.mxu0 0.0
        %3264 = vmatpush1.msra.mxu0 0.0
        %3265 = vmatprep.subr.mxu0 0.0
        %3266 = vmatpush1.msra.mxu0 0.0
        %3267 = vmatprep.subr.mxu0 0.0
        %3268 = vmatpush1.msra.mxu0 0.0
        %3269 = vmatprep.subr.mxu0 0.0
        %3270 = vmatpush1.msra.mxu0 0.0
        %3271 = vmatprep.subr.mxu0 0.0
        %3272 = vmatpush1.msra.mxu0 0.0
        %3273 = vmatprep.subr.mxu0 0.0
        %3274 = vmatpush1.msra.mxu0 0.0
        %3275 = vmatprep.subr.mxu0 0.0
        %3276 = vmatpush1.msra.mxu0 0.0
        %3277 = vmatprep.subr.mxu0 0.0
        %3278 = vmatpush1.msra.mxu0 0.0
        %3279 = vmatprep.subr.mxu0 0.0
        %3280 = vmatpush1.msra.mxu0 0.0
        %3281 = vmatprep.subr.mxu0 0.0
        %3282 = vmatpush1.msra.mxu0 0.0
        %3283 = vmatprep.subr.mxu0 0.0
        %3284 = vmatpush1.msra.mxu0 0.0
        %v3285 = vand.u32 %v2993, 4294901760
        %v3286 = vsub.f32 %v2993, %v3285
        %3287 = vmatprep.subr.mxu0 %v3286
        %v3288 = vand.u32 %v2992, 4294901760
        %v3289 = vsub.f32 %v2992, %v3288
        %3290 = vmatpush1.msra.mxu0 %v3289
        %v3291 = vand.u32 %v2991, 4294901760
        %v3292 = vsub.f32 %v2991, %v3291
        %3293 = vmatprep.subr.mxu0 %v3292
        %v3294 = vand.u32 %v2990, 4294901760
        %v3295 = vsub.f32 %v2990, %v3294
        %3296 = vmatpush1.msra.mxu0 %v3295
        %v3297 = vand.u32 %v2989, 4294901760
        %v3298 = vsub.f32 %v2989, %v3297
        %3299 = vmatprep.subr.mxu0 %v3298
        %v3300 = vand.u32 %v2988, 4294901760
        %v3301 = vsub.f32 %v2988, %v3300
        %3302 = vmatpush1.msra.mxu0 %v3301
        %v3303 = vand.u32 %v2987, 4294901760
        %v3304 = vsub.f32 %v2987, %v3303
        %3305 = vmatprep.subr.mxu0 %v3304
        %v3306 = vand.u32 %v2986, 4294901760
        %v3307 = vsub.f32 %v2986, %v3306
        %3308 = vmatpush1.msra.mxu0 %v3307
        %3309 = vmatprep.subr.mxu0 0.0
        %3310 = vmatpush2.msra.mxu0 0.0
        %3311 = vmatprep.subr.mxu0 0.0
        %3312 = vmatpush2.msra.mxu0 0.0
        %3313 = vmatprep.subr.mxu0 0.0
        %3314 = vmatpush2.msra.mxu0 0.0
        %3315 = vmatprep.subr.mxu0 0.0
        %3316 = vmatpush2.msra.mxu0 0.0
        %3317 = vmatprep.subr.mxu0 0.0
        %3318 = vmatpush2.msra.mxu0 0.0
        %3319 = vmatprep.subr.mxu0 0.0
        %3320 = vmatpush2.msra.mxu0 0.0
        %3321 = vmatprep.subr.mxu0 0.0
        %3322 = vmatpush2.msra.mxu0 0.0
        %3323 = vmatprep.subr.mxu0 0.0
        %3324 = vmatpush2.msra.mxu0 0.0
        %3325 = vmatprep.subr.mxu0 0.0
        %3326 = vmatpush2.msra.mxu0 0.0
        %3327 = vmatprep.subr.mxu0 0.0
        %3328 = vmatpush2.msra.mxu0 0.0
        %3329 = vmatprep.subr.mxu0 0.0
        %3330 = vmatpush2.msra.mxu0 0.0
        %3331 = vmatprep.subr.mxu0 0.0
        %3332 = vmatpush2.msra.mxu0 0.0
        %3333 = vmatprep.subr.mxu0 0.0
        %3334 = vmatpush2.msra.mxu0 0.0
        %3335 = vmatprep.subr.mxu0 0.0
        %3336 = vmatpush2.msra.mxu0 0.0
        %3337 = vmatprep.subr.mxu0 0.0
        %3338 = vmatpush2.msra.mxu0 0.0
        %3339 = vmatprep.subr.mxu0 0.0
        %3340 = vmatpush2.msra.mxu0 0.0
        %3341 = vmatprep.mubr.f32.mxu0 0.0
        %v3342 = vand.u32 %v3000, 4294901760
        %v3343 = vsub.f32 %v3000, %v3342
        %3344 = vmatmul.mubr.f32.gmra.mxu0 %v3343
        %v3345 = vpop.f32.mrf.mxu0
        %v3346 = vadd.f32 %v3236, %v3345
        %v3347 = vpop.f32.mrf.mxu0
        %v3348 = vadd.f32 %v3238, %v3347
        %3349 = vmatprep.mubr.f32.mxu0 0.0
        %v3350 = vand.u32 %v3003, 4294901760
        %v3351 = vsub.f32 %v3003, %v3350
        %3352 = vmatmul.mubr.f32.gmra.mxu0 %v3351
        %v3353 = vpop.f32.mrf.mxu0
        %v3354 = vadd.f32 %v3243, %v3353
        %v3355 = vpop.f32.mrf.mxu0
        %v3356 = vadd.f32 %v3245, %v3355
        %3357 = vmatprep.mubr.f32.mxu0 0.0
        %v3358 = vand.u32 %v3006, 4294901760
        %v3359 = vsub.f32 %v3006, %v3358
        %3360 = vmatmul.mubr.f32.gmra.mxu0 %v3359
        %v3361 = vpop.f32.mrf.mxu0
        %v3362 = vadd.f32 %v3250, %v3361
        %v3363 = vpop.f32.mrf.mxu0
        %v3364 = vadd.f32 %v3252, %v3363
        %3365 = vmatprep.mubr.f32.mxu0 0.0
        %v3366 = vand.u32 %v3009, 4294901760
        %v3367 = vsub.f32 %v3009, %v3366
        %3368 = vmatmul.mubr.f32.gmra.mxu0 %v3367
        %v3369 = vpop.f32.mrf.mxu0
        %v3370 = vadd.f32 %v3257, %v3369
        %v3371 = vpop.f32.mrf.mxu0
        %v3372 = vadd.f32 %v3259, %v3371
        %3373 = vdwg.mxu0
        %3374 = vmatprep.subr.mxu0 0.0
        %3375 = vmatpush1.msra.mxu0 0.0
        %3376 = vmatprep.subr.mxu0 0.0
        %3377 = vmatpush1.msra.mxu0 0.0
        %3378 = vmatprep.subr.mxu0 0.0
        %3379 = vmatpush1.msra.mxu0 0.0
        %3380 = vmatprep.subr.mxu0 0.0
        %3381 = vmatpush1.msra.mxu0 0.0
        %3382 = vmatprep.subr.mxu0 0.0
        %3383 = vmatpush1.msra.mxu0 0.0
        %3384 = vmatprep.subr.mxu0 0.0
        %3385 = vmatpush1.msra.mxu0 0.0
        %3386 = vmatprep.subr.mxu0 0.0
        %3387 = vmatpush1.msra.mxu0 0.0
        %3388 = vmatprep.subr.mxu0 0.0
        %3389 = vmatpush1.msra.mxu0 0.0
        %3390 = vmatprep.subr.mxu0 0.0
        %3391 = vmatpush1.msra.mxu0 0.0
        %3392 = vmatprep.subr.mxu0 0.0
        %3393 = vmatpush1.msra.mxu0 0.0
        %3394 = vmatprep.subr.mxu0 0.0
        %3395 = vmatpush1.msra.mxu0 0.0
        %3396 = vmatprep.subr.mxu0 0.0
        %3397 = vmatpush1.msra.mxu0 0.0
        %v3398 = vand.u32 %v2993, 4294901760
        %3399 = vmatprep.subr.mxu0 %v3398
        %v3400 = vand.u32 %v2992, 4294901760
        %3401 = vmatpush1.msra.mxu0 %v3400
        %v3402 = vand.u32 %v2991, 4294901760
        %3403 = vmatprep.subr.mxu0 %v3402
        %v3404 = vand.u32 %v2990, 4294901760
        %3405 = vmatpush1.msra.mxu0 %v3404
        %v3406 = vand.u32 %v2989, 4294901760
        %3407 = vmatprep.subr.mxu0 %v3406
        %v3408 = vand.u32 %v2988, 4294901760
        %3409 = vmatpush1.msra.mxu0 %v3408
        %v3410 = vand.u32 %v2987, 4294901760
        %3411 = vmatprep.subr.mxu0 %v3410
        %v3412 = vand.u32 %v2986, 4294901760
        %3413 = vmatpush1.msra.mxu0 %v3412
        %3414 = vmatprep.subr.mxu0 0.0
        %3415 = vmatpush2.msra.mxu0 0.0
        %3416 = vmatprep.subr.mxu0 0.0
        %3417 = vmatpush2.msra.mxu0 0.0
        %3418 = vmatprep.subr.mxu0 0.0
        %3419 = vmatpush2.msra.mxu0 0.0
        %3420 = vmatprep.subr.mxu0 0.0
        %3421 = vmatpush2.msra.mxu0 0.0
        %3422 = vmatprep.subr.mxu0 0.0
        %3423 = vmatpush2.msra.mxu0 0.0
        %3424 = vmatprep.subr.mxu0 0.0
        %3425 = vmatpush2.msra.mxu0 0.0
        %3426 = vmatprep.subr.mxu0 0.0
        %3427 = vmatpush2.msra.mxu0 0.0
        %3428 = vmatprep.subr.mxu0 0.0
        %3429 = vmatpush2.msra.mxu0 0.0
        %3430 = vmatprep.subr.mxu0 0.0
        %3431 = vmatpush2.msra.mxu0 0.0
        %3432 = vmatprep.subr.mxu0 0.0
        %3433 = vmatpush2.msra.mxu0 0.0
        %3434 = vmatprep.subr.mxu0 0.0
        %3435 = vmatpush2.msra.mxu0 0.0
        %3436 = vmatprep.subr.mxu0 0.0
        %3437 = vmatpush2.msra.mxu0 0.0
        %3438 = vmatprep.subr.mxu0 0.0
        %3439 = vmatpush2.msra.mxu0 0.0
        %3440 = vmatprep.subr.mxu0 0.0
        %3441 = vmatpush2.msra.mxu0 0.0
        %3442 = vmatprep.subr.mxu0 0.0
        %3443 = vmatpush2.msra.mxu0 0.0
        %3444 = vmatprep.subr.mxu0 0.0
        %3445 = vmatpush2.msra.mxu0 0.0
        %3446 = vmatprep.mubr.f32.mxu0 0.0
        %v3447 = vand.u32 %v3000, 4294901760
        %v3448 = vsub.f32 %v3000, %v3447
        %v3449 = vand.u32 %v3448, 4294901760
        %3450 = vmatmul.mubr.f32.gmra.mxu0 %v3449
        %v3451 = vpop.f32.mrf.mxu0
        %v3452 = vadd.f32 %v3346, %v3451
        %v3453 = vpop.f32.mrf.mxu0
        %v3454 = vadd.f32 %v3348, %v3453
        %3455 = vmatprep.mubr.f32.mxu0 0.0
        %v3456 = vand.u32 %v3003, 4294901760
        %v3457 = vsub.f32 %v3003, %v3456
        %v3458 = vand.u32 %v3457, 4294901760
        %3459 = vmatmul.mubr.f32.gmra.mxu0 %v3458
        %v3460 = vpop.f32.mrf.mxu0
        %v3461 = vadd.f32 %v3354, %v3460
        %v3462 = vpop.f32.mrf.mxu0
        %v3463 = vadd.f32 %v3356, %v3462
        %3464 = vmatprep.mubr.f32.mxu0 0.0
        %v3465 = vand.u32 %v3006, 4294901760
        %v3466 = vsub.f32 %v3006, %v3465
        %v3467 = vand.u32 %v3466, 4294901760
        %3468 = vmatmul.mubr.f32.gmra.mxu0 %v3467
        %v3469 = vpop.f32.mrf.mxu0
        %v3470 = vadd.f32 %v3362, %v3469
        %v3471 = vpop.f32.mrf.mxu0
        %v3472 = vadd.f32 %v3364, %v3471
        %3473 = vmatprep.mubr.f32.mxu0 0.0
        %v3474 = vand.u32 %v3009, 4294901760
        %v3475 = vsub.f32 %v3009, %v3474
        %v3476 = vand.u32 %v3475, 4294901760
        %3477 = vmatmul.mubr.f32.gmra.mxu0 %v3476
        %v3478 = vpop.f32.mrf.mxu0
        %v3479 = vadd.f32 %v3370, %v3478
        %v3480 = vpop.f32.mrf.mxu0
        %v3481 = vadd.f32 %v3372, %v3480
        %3482 = vdwg.mxu0
        %3483 = vmatprep.subr.mxu0 0.0
        %3484 = vmatpush1.msra.mxu0 0.0
        %3485 = vmatprep.subr.mxu0 0.0
        %3486 = vmatpush1.msra.mxu0 0.0
        %3487 = vmatprep.subr.mxu0 0.0
        %3488 = vmatpush1.msra.mxu0 0.0
        %3489 = vmatprep.subr.mxu0 0.0
        %3490 = vmatpush1.msra.mxu0 0.0
        %3491 = vmatprep.subr.mxu0 0.0
        %3492 = vmatpush1.msra.mxu0 0.0
        %3493 = vmatprep.subr.mxu0 0.0
        %3494 = vmatpush1.msra.mxu0 0.0
        %3495 = vmatprep.subr.mxu0 0.0
        %3496 = vmatpush1.msra.mxu0 0.0
        %3497 = vmatprep.subr.mxu0 0.0
        %3498 = vmatpush1.msra.mxu0 0.0
        %3499 = vmatprep.subr.mxu0 0.0
        %3500 = vmatpush1.msra.mxu0 0.0
        %3501 = vmatprep.subr.mxu0 0.0
        %3502 = vmatpush1.msra.mxu0 0.0
        %3503 = vmatprep.subr.mxu0 0.0
        %3504 = vmatpush1.msra.mxu0 0.0
        %3505 = vmatprep.subr.mxu0 0.0
        %3506 = vmatpush1.msra.mxu0 0.0
        %v3507 = vand.u32 %v2993, 4294901760
        %v3508 = vsub.f32 %v2993, %v3507
        %v3509 = vand.u32 %v3508, 4294901760
        %3510 = vmatprep.subr.mxu0 %v3509
        %v3511 = vand.u32 %v2992, 4294901760
        %v3512 = vsub.f32 %v2992, %v3511
        %v3513 = vand.u32 %v3512, 4294901760
        %3514 = vmatpush1.msra.mxu0 %v3513
        %v3515 = vand.u32 %v2991, 4294901760
        %v3516 = vsub.f32 %v2991, %v3515
        %v3517 = vand.u32 %v3516, 4294901760
        %3518 = vmatprep.subr.mxu0 %v3517
        %v3519 = vand.u32 %v2990, 4294901760
        %v3520 = vsub.f32 %v2990, %v3519
        %v3521 = vand.u32 %v3520, 4294901760
        %3522 = vmatpush1.msra.mxu0 %v3521
        %v3523 = vand.u32 %v2989, 4294901760
        %v3524 = vsub.f32 %v2989, %v3523
        %v3525 = vand.u32 %v3524, 4294901760
        %3526 = vmatprep.subr.mxu0 %v3525
        %v3527 = vand.u32 %v2988, 4294901760
        %v3528 = vsub.f32 %v2988, %v3527
        %v3529 = vand.u32 %v3528, 4294901760
        %3530 = vmatpush1.msra.mxu0 %v3529
        %v3531 = vand.u32 %v2987, 4294901760
        %v3532 = vsub.f32 %v2987, %v3531
        %v3533 = vand.u32 %v3532, 4294901760
        %3534 = vmatprep.subr.mxu0 %v3533
        %v3535 = vand.u32 %v2986, 4294901760
        %v3536 = vsub.f32 %v2986, %v3535
        %v3537 = vand.u32 %v3536, 4294901760
        %3538 = vmatpush1.msra.mxu0 %v3537
        %3539 = vmatprep.subr.mxu0 0.0
        %3540 = vmatpush2.msra.mxu0 0.0
        %3541 = vmatprep.subr.mxu0 0.0
        %3542 = vmatpush2.msra.mxu0 0.0
        %3543 = vmatprep.subr.mxu0 0.0
        %3544 = vmatpush2.msra.mxu0 0.0
        %3545 = vmatprep.subr.mxu0 0.0
        %3546 = vmatpush2.msra.mxu0 0.0
        %3547 = vmatprep.subr.mxu0 0.0
        %3548 = vmatpush2.msra.mxu0 0.0
        %3549 = vmatprep.subr.mxu0 0.0
        %3550 = vmatpush2.msra.mxu0 0.0
        %3551 = vmatprep.subr.mxu0 0.0
        %3552 = vmatpush2.msra.mxu0 0.0
        %3553 = vmatprep.subr.mxu0 0.0
        %3554 = vmatpush2.msra.mxu0 0.0
        %3555 = vmatprep.subr.mxu0 0.0
        %3556 = vmatpush2.msra.mxu0 0.0
        %3557 = vmatprep.subr.mxu0 0.0
        %3558 = vmatpush2.msra.mxu0 0.0
        %3559 = vmatprep.subr.mxu0 0.0
        %3560 = vmatpush2.msra.mxu0 0.0
        %3561 = vmatprep.subr.mxu0 0.0
        %3562 = vmatpush2.msra.mxu0 0.0
        %3563 = vmatprep.subr.mxu0 0.0
        %3564 = vmatpush2.msra.mxu0 0.0
        %3565 = vmatprep.subr.mxu0 0.0
        %3566 = vmatpush2.msra.mxu0 0.0
        %3567 = vmatprep.subr.mxu0 0.0
        %3568 = vmatpush2.msra.mxu0 0.0
        %3569 = vmatprep.subr.mxu0 0.0
        %3570 = vmatpush2.msra.mxu0 0.0
        %3571 = vmatprep.mubr.f32.mxu0 0.0
        %v3572 = vand.u32 %v3000, 4294901760
        %3573 = vmatmul.mubr.f32.gmra.mxu0 %v3572
        %v3574 = vpop.f32.mrf.mxu0
        %v3575 = vadd.f32 %v3452, %v3574
        %v3576 = vpop.f32.mrf.mxu0
        %v3577 = vadd.f32 %v3454, %v3576
        %3578 = vmatprep.mubr.f32.mxu0 0.0
        %v3579 = vand.u32 %v3003, 4294901760
        %3580 = vmatmul.mubr.f32.gmra.mxu0 %v3579
        %v3581 = vpop.f32.mrf.mxu0
        %v3582 = vadd.f32 %v3461, %v3581
        %v3583 = vpop.f32.mrf.mxu0
        %v3584 = vadd.f32 %v3463, %v3583
        %3585 = vmatprep.mubr.f32.mxu0 0.0
        %v3586 = vand.u32 %v3006, 4294901760
        %3587 = vmatmul.mubr.f32.gmra.mxu0 %v3586
        %v3588 = vpop.f32.mrf.mxu0
        %v3589 = vadd.f32 %v3470, %v3588
        %v3590 = vpop.f32.mrf.mxu0
        %v3591 = vadd.f32 %v3472, %v3590
        %3592 = vmatprep.mubr.f32.mxu0 0.0
        %v3593 = vand.u32 %v3009, 4294901760
        %3594 = vmatmul.mubr.f32.gmra.mxu0 %v3593
        %v3595 = vpop.f32.mrf.mxu0
        %v3596 = vadd.f32 %v3479, %v3595
        %v3597 = vpop.f32.mrf.mxu0
        %v3598 = vadd.f32 %v3481, %v3597
        %3599 = vdwg.mxu0
        %3600 = vmatprep.subr.mxu0 0.0
        %3601 = vmatpush1.msra.mxu0 0.0
        %3602 = vmatprep.subr.mxu0 0.0
        %3603 = vmatpush1.msra.mxu0 0.0
        %3604 = vmatprep.subr.mxu0 0.0
        %3605 = vmatpush1.msra.mxu0 0.0
        %3606 = vmatprep.subr.mxu0 0.0
        %3607 = vmatpush1.msra.mxu0 0.0
        %3608 = vmatprep.subr.mxu0 0.0
        %3609 = vmatpush1.msra.mxu0 0.0
        %3610 = vmatprep.subr.mxu0 0.0
        %3611 = vmatpush1.msra.mxu0 0.0
        %3612 = vmatprep.subr.mxu0 0.0
        %3613 = vmatpush1.msra.mxu0 0.0
        %3614 = vmatprep.subr.mxu0 0.0
        %3615 = vmatpush1.msra.mxu0 0.0
        %3616 = vmatprep.subr.mxu0 0.0
        %3617 = vmatpush1.msra.mxu0 0.0
        %3618 = vmatprep.subr.mxu0 0.0
        %3619 = vmatpush1.msra.mxu0 0.0
        %3620 = vmatprep.subr.mxu0 0.0
        %3621 = vmatpush1.msra.mxu0 0.0
        %3622 = vmatprep.subr.mxu0 0.0
        %3623 = vmatpush1.msra.mxu0 0.0
        %v3624 = vand.u32 %v2993, 4294901760
        %3625 = vmatprep.subr.mxu0 %v3624
        %v3626 = vand.u32 %v2992, 4294901760
        %3627 = vmatpush1.msra.mxu0 %v3626
        %v3628 = vand.u32 %v2991, 4294901760
        %3629 = vmatprep.subr.mxu0 %v3628
        %v3630 = vand.u32 %v2990, 4294901760
        %3631 = vmatpush1.msra.mxu0 %v3630
        %v3632 = vand.u32 %v2989, 4294901760
        %3633 = vmatprep.subr.mxu0 %v3632
        %v3634 = vand.u32 %v2988, 4294901760
        %3635 = vmatpush1.msra.mxu0 %v3634
        %v3636 = vand.u32 %v2987, 4294901760
        %3637 = vmatprep.subr.mxu0 %v3636
        %v3638 = vand.u32 %v2986, 4294901760
        %3639 = vmatpush1.msra.mxu0 %v3638
        %3640 = vmatprep.subr.mxu0 0.0
        %3641 = vmatpush2.msra.mxu0 0.0
        %3642 = vmatprep.subr.mxu0 0.0
        %3643 = vmatpush2.msra.mxu0 0.0
        %3644 = vmatprep.subr.mxu0 0.0
        %3645 = vmatpush2.msra.mxu0 0.0
        %3646 = vmatprep.subr.mxu0 0.0
        %3647 = vmatpush2.msra.mxu0 0.0
        %3648 = vmatprep.subr.mxu0 0.0
        %3649 = vmatpush2.msra.mxu0 0.0
        %3650 = vmatprep.subr.mxu0 0.0
        %3651 = vmatpush2.msra.mxu0 0.0
        %3652 = vmatprep.subr.mxu0 0.0
        %3653 = vmatpush2.msra.mxu0 0.0
        %3654 = vmatprep.subr.mxu0 0.0
        %3655 = vmatpush2.msra.mxu0 0.0
        %3656 = vmatprep.subr.mxu0 0.0
        %3657 = vmatpush2.msra.mxu0 0.0
        %3658 = vmatprep.subr.mxu0 0.0
        %3659 = vmatpush2.msra.mxu0 0.0
        %3660 = vmatprep.subr.mxu0 0.0
        %3661 = vmatpush2.msra.mxu0 0.0
        %3662 = vmatprep.subr.mxu0 0.0
        %3663 = vmatpush2.msra.mxu0 0.0
        %3664 = vmatprep.subr.mxu0 0.0
        %3665 = vmatpush2.msra.mxu0 0.0
        %3666 = vmatprep.subr.mxu0 0.0
        %3667 = vmatpush2.msra.mxu0 0.0
        %3668 = vmatprep.subr.mxu0 0.0
        %3669 = vmatpush2.msra.mxu0 0.0
        %3670 = vmatprep.subr.mxu0 0.0
        %3671 = vmatpush2.msra.mxu0 0.0
        %3672 = vmatprep.mubr.f32.mxu0 0.0
        %v3673 = vand.u32 %v3000, 4294901760
        %3674 = vmatmul.mubr.f32.gmra.mxu0 %v3673
        %v3675 = vpop.f32.mrf.mxu0
        %v3676 = vadd.f32 %v3575, %v3675
        %v3677 = vpop.f32.mrf.mxu0
        %v3678 = vadd.f32 %v3577, %v3677
        %3679 = vmatprep.mubr.f32.mxu0 0.0
        %v3680 = vand.u32 %v3003, 4294901760
        %3681 = vmatmul.mubr.f32.gmra.mxu0 %v3680
        %v3682 = vpop.f32.mrf.mxu0
        %v3683 = vadd.f32 %v3582, %v3682
        %v3684 = vpop.f32.mrf.mxu0
        %v3685 = vadd.f32 %v3584, %v3684
        %3686 = vmatprep.mubr.f32.mxu0 0.0
        %v3687 = vand.u32 %v3006, 4294901760
        %3688 = vmatmul.mubr.f32.gmra.mxu0 %v3687
        %v3689 = vpop.f32.mrf.mxu0
        %v3690 = vadd.f32 %v3589, %v3689
        %v3691 = vpop.f32.mrf.mxu0
        %v3692 = vadd.f32 %v3591, %v3691
        %3693 = vmatprep.mubr.f32.mxu0 0.0
        %v3694 = vand.u32 %v3009, 4294901760
        %3695 = vmatmul.mubr.f32.gmra.mxu0 %v3694
        %v3696 = vpop.f32.mrf.mxu0
        %v3697 = vadd.f32 %v3596, %v3696
        %v3698 = vpop.f32.mrf.mxu0
        %v3699 = vadd.f32 %v3598, %v3698
        %3700 = vdwg.mxu0
        %v3701 = vmax.f32 %v3676, 0.0
        %v3702 = vmax.f32 %v3678, 0.0
        %v3703 = vmax.f32 %v3683, 0.0
        %v3704 = vmax.f32 %v3685, 0.0
        %v3705 = vmax.f32 %v3690, 0.0
        %v3706 = vmax.f32 %v3692, 0.0
        %v3707 = vmax.f32 %v3697, 0.0
        %v3708 = vmax.f32 %v3699, 0.0
        %s3709 = scalar_lea.vmem [#allocation3], 160
        %v3710 = vld [vmem:[%s3709] sm:$0xff]
        %v3711 = vld [vmem:[%s3709 + $0x8] sm:$0xff]
        %v3712 = vld [vmem:[%s3709 + $0x10] sm:$0xff]
        %v3713 = vld [vmem:[%s3709 + $0x18] sm:$0xff]
        %v3715 = vsel %vm853, %v3710, 0
        %v3718 = vsel %vm853, %v3711, 0
        %v3721 = vsel %vm853, %v3712, 0
        %v3724 = vsel %vm853, %v3713, 0
        %3726 = vmatprep.subr.mxu0 0.0
        %3727 = vmatpush1.msra.mxu0 0.0
        %3728 = vmatprep.subr.mxu0 0.0
        %3729 = vmatpush1.msra.mxu0 0.0
        %3730 = vmatprep.subr.mxu0 0.0
        %3731 = vmatpush1.msra.mxu0 0.0
        %3732 = vmatprep.subr.mxu0 0.0
        %3733 = vmatpush1.msra.mxu0 0.0
        %3734 = vmatprep.subr.mxu0 0.0
        %3735 = vmatpush1.msra.mxu0 0.0
        %3736 = vmatprep.subr.mxu0 0.0
        %3737 = vmatpush1.msra.mxu0 0.0
        %3738 = vmatprep.subr.mxu0 0.0
        %3739 = vmatpush1.msra.mxu0 0.0
        %3740 = vmatprep.subr.mxu0 0.0
        %3741 = vmatpush1.msra.mxu0 0.0
        %3742 = vmatprep.subr.mxu0 0.0
        %3743 = vmatpush1.msra.mxu0 0.0
        %3744 = vmatprep.subr.mxu0 0.0
        %3745 = vmatpush1.msra.mxu0 0.0
        %3746 = vmatprep.subr.mxu0 0.0
        %3747 = vmatpush1.msra.mxu0 0.0
        %3748 = vmatprep.subr.mxu0 0.0
        %3749 = vmatpush1.msra.mxu0 0.0
        %v3750 = vand.u32 %v3708, 4294901760
        %3751 = vmatprep.subr.mxu0 %v3750
        %v3752 = vand.u32 %v3707, 4294901760
        %3753 = vmatpush1.msra.mxu0 %v3752
        %v3754 = vand.u32 %v3706, 4294901760
        %3755 = vmatprep.subr.mxu0 %v3754
        %v3756 = vand.u32 %v3705, 4294901760
        %3757 = vmatpush1.msra.mxu0 %v3756
        %v3758 = vand.u32 %v3704, 4294901760
        %3759 = vmatprep.subr.mxu0 %v3758
        %v3760 = vand.u32 %v3703, 4294901760
        %3761 = vmatpush1.msra.mxu0 %v3760
        %v3762 = vand.u32 %v3702, 4294901760
        %3763 = vmatprep.subr.mxu0 %v3762
        %v3764 = vand.u32 %v3701, 4294901760
        %3765 = vmatpush1.msra.mxu0 %v3764
        %3766 = vmatprep.subr.mxu0 0.0
        %3767 = vmatpush2.msra.mxu0 0.0
        %3768 = vmatprep.subr.mxu0 0.0
        %3769 = vmatpush2.msra.mxu0 0.0
        %3770 = vmatprep.subr.mxu0 0.0
        %3771 = vmatpush2.msra.mxu0 0.0
        %3772 = vmatprep.subr.mxu0 0.0
        %3773 = vmatpush2.msra.mxu0 0.0
        %3774 = vmatprep.subr.mxu0 0.0
        %3775 = vmatpush2.msra.mxu0 0.0
        %3776 = vmatprep.subr.mxu0 0.0
        %3777 = vmatpush2.msra.mxu0 0.0
        %3778 = vmatprep.subr.mxu0 0.0
        %3779 = vmatpush2.msra.mxu0 0.0
        %3780 = vmatprep.subr.mxu0 0.0
        %3781 = vmatpush2.msra.mxu0 0.0
        %3782 = vmatprep.subr.mxu0 0.0
        %3783 = vmatpush2.msra.mxu0 0.0
        %3784 = vmatprep.subr.mxu0 0.0
        %3785 = vmatpush2.msra.mxu0 0.0
        %3786 = vmatprep.subr.mxu0 0.0
        %3787 = vmatpush2.msra.mxu0 0.0
        %3788 = vmatprep.subr.mxu0 0.0
        %3789 = vmatpush2.msra.mxu0 0.0
        %3790 = vmatprep.subr.mxu0 0.0
        %3791 = vmatpush2.msra.mxu0 0.0
        %3792 = vmatprep.subr.mxu0 0.0
        %3793 = vmatpush2.msra.mxu0 0.0
        %3794 = vmatprep.subr.mxu0 0.0
        %3795 = vmatpush2.msra.mxu0 0.0
        %3796 = vmatprep.subr.mxu0 0.0
        %3797 = vmatpush2.msra.mxu0 0.0
        %3798 = vmatprep.mubr.f32.mxu0 0.0
        %v3799 = vand.u32 %v3715, 4294901760
        %v3800 = vsub.f32 %v3715, %v3799
        %v3801 = vand.u32 %v3800, 4294901760
        %v3802 = vsub.f32 %v3800, %v3801
        %v3803 = vand.u32 %v3802, 4294901760
        %3804 = vmatmul.mubr.f32.gmra.mxu0 %v3803
        %v3805 = vpop.f32.mrf.mxu0
        %v3806 = vadd.f32 0.0, %v3805
        %v3807 = vpop.f32.mrf.mxu0
        %v3808 = vadd.f32 0.0, %v3807
        %3809 = vmatprep.mubr.f32.mxu0 0.0
        %v3810 = vand.u32 %v3718, 4294901760
        %v3811 = vsub.f32 %v3718, %v3810
        %v3812 = vand.u32 %v3811, 4294901760
        %v3813 = vsub.f32 %v3811, %v3812
        %v3814 = vand.u32 %v3813, 4294901760
        %3815 = vmatmul.mubr.f32.gmra.mxu0 %v3814
        %v3816 = vpop.f32.mrf.mxu0
        %v3817 = vadd.f32 0.0, %v3816
        %v3818 = vpop.f32.mrf.mxu0
        %v3819 = vadd.f32 0.0, %v3818
        %3820 = vmatprep.mubr.f32.mxu0 0.0
        %v3821 = vand.u32 %v3721, 4294901760
        %v3822 = vsub.f32 %v3721, %v3821
        %v3823 = vand.u32 %v3822, 4294901760
        %v3824 = vsub.f32 %v3822, %v3823
        %v3825 = vand.u32 %v3824, 4294901760
        %3826 = vmatmul.mubr.f32.gmra.mxu0 %v3825
        %v3827 = vpop.f32.mrf.mxu0
        %v3828 = vpop.f32.mrf.mxu0
        %3829 = vmatprep.mubr.f32.mxu0 0.0
        %v3830 = vand.u32 %v3724, 4294901760
        %v3831 = vsub.f32 %v3724, %v3830
        %v3832 = vand.u32 %v3831, 4294901760
        %v3833 = vsub.f32 %v3831, %v3832
        %v3834 = vand.u32 %v3833, 4294901760
        %3835 = vmatmul.mubr.f32.gmra.mxu0 %v3834
        %v3836 = vpop.f32.mrf.mxu0
        %v3837 = vpop.f32.mrf.mxu0
        %3838 = vdwg.mxu0
        %3839 = vmatprep.subr.mxu0 0.0
        %3840 = vmatpush1.msra.mxu0 0.0
        %3841 = vmatprep.subr.mxu0 0.0
        %3842 = vmatpush1.msra.mxu0 0.0
        %3843 = vmatprep.subr.mxu0 0.0
        %3844 = vmatpush1.msra.mxu0 0.0
        %3845 = vmatprep.subr.mxu0 0.0
        %3846 = vmatpush1.msra.mxu0 0.0
        %3847 = vmatprep.subr.mxu0 0.0
        %3848 = vmatpush1.msra.mxu0 0.0
        %3849 = vmatprep.subr.mxu0 0.0
        %3850 = vmatpush1.msra.mxu0 0.0
        %3851 = vmatprep.subr.mxu0 0.0
        %3852 = vmatpush1.msra.mxu0 0.0
        %3853 = vmatprep.subr.mxu0 0.0
        %3854 = vmatpush1.msra.mxu0 0.0
        %3855 = vmatprep.subr.mxu0 0.0
        %3856 = vmatpush1.msra.mxu0 0.0
        %3857 = vmatprep.subr.mxu0 0.0
        %3858 = vmatpush1.msra.mxu0 0.0
        %3859 = vmatprep.subr.mxu0 0.0
        %3860 = vmatpush1.msra.mxu0 0.0
        %3861 = vmatprep.subr.mxu0 0.0
        %3862 = vmatpush1.msra.mxu0 0.0
        %v3863 = vand.u32 %v3708, 4294901760
        %v3864 = vsub.f32 %v3708, %v3863
        %v3865 = vand.u32 %v3864, 4294901760
        %v3866 = vsub.f32 %v3864, %v3865
        %v3867 = vand.u32 %v3866, 4294901760
        %3868 = vmatprep.subr.mxu0 %v3867
        %v3869 = vand.u32 %v3707, 4294901760
        %v3870 = vsub.f32 %v3707, %v3869
        %v3871 = vand.u32 %v3870, 4294901760
        %v3872 = vsub.f32 %v3870, %v3871
        %v3873 = vand.u32 %v3872, 4294901760
        %3874 = vmatpush1.msra.mxu0 %v3873
        %v3875 = vand.u32 %v3706, 4294901760
        %v3876 = vsub.f32 %v3706, %v3875
        %v3877 = vand.u32 %v3876, 4294901760
        %v3878 = vsub.f32 %v3876, %v3877
        %v3879 = vand.u32 %v3878, 4294901760
        %3880 = vmatprep.subr.mxu0 %v3879
        %v3881 = vand.u32 %v3705, 4294901760
        %v3882 = vsub.f32 %v3705, %v3881
        %v3883 = vand.u32 %v3882, 4294901760
        %v3884 = vsub.f32 %v3882, %v3883
        %v3885 = vand.u32 %v3884, 4294901760
        %3886 = vmatpush1.msra.mxu0 %v3885
        %v3887 = vand.u32 %v3704, 4294901760
        %v3888 = vsub.f32 %v3704, %v3887
        %v3889 = vand.u32 %v3888, 4294901760
        %v3890 = vsub.f32 %v3888, %v3889
        %v3891 = vand.u32 %v3890, 4294901760
        %3892 = vmatprep.subr.mxu0 %v3891
        %v3893 = vand.u32 %v3703, 4294901760
        %v3894 = vsub.f32 %v3703, %v3893
        %v3895 = vand.u32 %v3894, 4294901760
        %v3896 = vsub.f32 %v3894, %v3895
        %v3897 = vand.u32 %v3896, 4294901760
        %3898 = vmatpush1.msra.mxu0 %v3897
        %v3899 = vand.u32 %v3702, 4294901760
        %v3900 = vsub.f32 %v3702, %v3899
        %v3901 = vand.u32 %v3900, 4294901760
        %v3902 = vsub.f32 %v3900, %v3901
        %v3903 = vand.u32 %v3902, 4294901760
        %3904 = vmatprep.subr.mxu0 %v3903
        %v3905 = vand.u32 %v3701, 4294901760
        %v3906 = vsub.f32 %v3701, %v3905
        %v3907 = vand.u32 %v3906, 4294901760
        %v3908 = vsub.f32 %v3906, %v3907
        %v3909 = vand.u32 %v3908, 4294901760
        %3910 = vmatpush1.msra.mxu0 %v3909
        %3911 = vmatprep.subr.mxu0 0.0
        %3912 = vmatpush2.msra.mxu0 0.0
        %3913 = vmatprep.subr.mxu0 0.0
        %3914 = vmatpush2.msra.mxu0 0.0
        %3915 = vmatprep.subr.mxu0 0.0
        %3916 = vmatpush2.msra.mxu0 0.0
        %3917 = vmatprep.subr.mxu0 0.0
        %3918 = vmatpush2.msra.mxu0 0.0
        %3919 = vmatprep.subr.mxu0 0.0
        %3920 = vmatpush2.msra.mxu0 0.0
        %3921 = vmatprep.subr.mxu0 0.0
        %3922 = vmatpush2.msra.mxu0 0.0
        %3923 = vmatprep.subr.mxu0 0.0
        %3924 = vmatpush2.msra.mxu0 0.0
        %3925 = vmatprep.subr.mxu0 0.0
        %3926 = vmatpush2.msra.mxu0 0.0
        %3927 = vmatprep.subr.mxu0 0.0
        %3928 = vmatpush2.msra.mxu0 0.0
        %3929 = vmatprep.subr.mxu0 0.0
        %3930 = vmatpush2.msra.mxu0 0.0
        %3931 = vmatprep.subr.mxu0 0.0
        %3932 = vmatpush2.msra.mxu0 0.0
        %3933 = vmatprep.subr.mxu0 0.0
        %3934 = vmatpush2.msra.mxu0 0.0
        %3935 = vmatprep.subr.mxu0 0.0
        %3936 = vmatpush2.msra.mxu0 0.0
        %3937 = vmatprep.subr.mxu0 0.0
        %3938 = vmatpush2.msra.mxu0 0.0
        %3939 = vmatprep.subr.mxu0 0.0
        %3940 = vmatpush2.msra.mxu0 0.0
        %3941 = vmatprep.subr.mxu0 0.0
        %3942 = vmatpush2.msra.mxu0 0.0
        %3943 = vmatprep.mubr.f32.mxu0 0.0
        %v3944 = vand.u32 %v3715, 4294901760
        %3945 = vmatmul.mubr.f32.gmra.mxu0 %v3944
        %v3946 = vpop.f32.mrf.mxu0
        %v3947 = vadd.f32 %v3806, %v3946
        %v3948 = vpop.f32.mrf.mxu0
        %v3949 = vadd.f32 %v3808, %v3948
        %3950 = vmatprep.mubr.f32.mxu0 0.0
        %v3951 = vand.u32 %v3718, 4294901760
        %3952 = vmatmul.mubr.f32.gmra.mxu0 %v3951
        %v3953 = vpop.f32.mrf.mxu0
        %v3954 = vadd.f32 %v3817, %v3953
        %v3955 = vpop.f32.mrf.mxu0
        %v3956 = vadd.f32 %v3819, %v3955
        %3957 = vmatprep.mubr.f32.mxu0 0.0
        %v3958 = vand.u32 %v3721, 4294901760
        %3959 = vmatmul.mubr.f32.gmra.mxu0 %v3958
        %v3960 = vpop.f32.mrf.mxu0
        %v3961 = vpop.f32.mrf.mxu0
        %3962 = vmatprep.mubr.f32.mxu0 0.0
        %v3963 = vand.u32 %v3724, 4294901760
        %3964 = vmatmul.mubr.f32.gmra.mxu0 %v3963
        %v3965 = vpop.f32.mrf.mxu0
        %v3966 = vpop.f32.mrf.mxu0
        %3967 = vdwg.mxu0
        %3968 = vmatprep.subr.mxu0 0.0
        %3969 = vmatpush1.msra.mxu0 0.0
        %3970 = vmatprep.subr.mxu0 0.0
        %3971 = vmatpush1.msra.mxu0 0.0
        %3972 = vmatprep.subr.mxu0 0.0
        %3973 = vmatpush1.msra.mxu0 0.0
        %3974 = vmatprep.subr.mxu0 0.0
        %3975 = vmatpush1.msra.mxu0 0.0
        %3976 = vmatprep.subr.mxu0 0.0
        %3977 = vmatpush1.msra.mxu0 0.0
        %3978 = vmatprep.subr.mxu0 0.0
        %3979 = vmatpush1.msra.mxu0 0.0
        %3980 = vmatprep.subr.mxu0 0.0
        %3981 = vmatpush1.msra.mxu0 0.0
        %3982 = vmatprep.subr.mxu0 0.0
        %3983 = vmatpush1.msra.mxu0 0.0
        %3984 = vmatprep.subr.mxu0 0.0
        %3985 = vmatpush1.msra.mxu0 0.0
        %3986 = vmatprep.subr.mxu0 0.0
        %3987 = vmatpush1.msra.mxu0 0.0
        %3988 = vmatprep.subr.mxu0 0.0
        %3989 = vmatpush1.msra.mxu0 0.0
        %3990 = vmatprep.subr.mxu0 0.0
        %3991 = vmatpush1.msra.mxu0 0.0
        %v3992 = vand.u32 %v3708, 4294901760
        %v3993 = vsub.f32 %v3708, %v3992
        %3994 = vmatprep.subr.mxu0 %v3993
        %v3995 = vand.u32 %v3707, 4294901760
        %v3996 = vsub.f32 %v3707, %v3995
        %3997 = vmatpush1.msra.mxu0 %v3996
        %v3998 = vand.u32 %v3706, 4294901760
        %v3999 = vsub.f32 %v3706, %v3998
        %4000 = vmatprep.subr.mxu0 %v3999
        %v4001 = vand.u32 %v3705, 4294901760
        %v4002 = vsub.f32 %v3705, %v4001
        %4003 = vmatpush1.msra.mxu0 %v4002
        %v4004 = vand.u32 %v3704, 4294901760
        %v4005 = vsub.f32 %v3704, %v4004
        %4006 = vmatprep.subr.mxu0 %v4005
        %v4007 = vand.u32 %v3703, 4294901760
        %v4008 = vsub.f32 %v3703, %v4007
        %4009 = vmatpush1.msra.mxu0 %v4008
        %v4010 = vand.u32 %v3702, 4294901760
        %v4011 = vsub.f32 %v3702, %v4010
        %4012 = vmatprep.subr.mxu0 %v4011
        %v4013 = vand.u32 %v3701, 4294901760
        %v4014 = vsub.f32 %v3701, %v4013
        %4015 = vmatpush1.msra.mxu0 %v4014
        %4016 = vmatprep.subr.mxu0 0.0
        %4017 = vmatpush2.msra.mxu0 0.0
        %4018 = vmatprep.subr.mxu0 0.0
        %4019 = vmatpush2.msra.mxu0 0.0
        %4020 = vmatprep.subr.mxu0 0.0
        %4021 = vmatpush2.msra.mxu0 0.0
        %4022 = vmatprep.subr.mxu0 0.0
        %4023 = vmatpush2.msra.mxu0 0.0
        %4024 = vmatprep.subr.mxu0 0.0
        %4025 = vmatpush2.msra.mxu0 0.0
        %4026 = vmatprep.subr.mxu0 0.0
        %4027 = vmatpush2.msra.mxu0 0.0
        %4028 = vmatprep.subr.mxu0 0.0
        %4029 = vmatpush2.msra.mxu0 0.0
        %4030 = vmatprep.subr.mxu0 0.0
        %4031 = vmatpush2.msra.mxu0 0.0
        %4032 = vmatprep.subr.mxu0 0.0
        %4033 = vmatpush2.msra.mxu0 0.0
        %4034 = vmatprep.subr.mxu0 0.0
        %4035 = vmatpush2.msra.mxu0 0.0
        %4036 = vmatprep.subr.mxu0 0.0
        %4037 = vmatpush2.msra.mxu0 0.0
        %4038 = vmatprep.subr.mxu0 0.0
        %4039 = vmatpush2.msra.mxu0 0.0
        %4040 = vmatprep.subr.mxu0 0.0
        %4041 = vmatpush2.msra.mxu0 0.0
        %4042 = vmatprep.subr.mxu0 0.0
        %4043 = vmatpush2.msra.mxu0 0.0
        %4044 = vmatprep.subr.mxu0 0.0
        %4045 = vmatpush2.msra.mxu0 0.0
        %4046 = vmatprep.subr.mxu0 0.0
        %4047 = vmatpush2.msra.mxu0 0.0
        %4048 = vmatprep.mubr.f32.mxu0 0.0
        %v4049 = vand.u32 %v3715, 4294901760
        %v4050 = vsub.f32 %v3715, %v4049
        %4051 = vmatmul.mubr.f32.gmra.mxu0 %v4050
        %v4052 = vpop.f32.mrf.mxu0
        %v4053 = vadd.f32 %v3947, %v4052
        %v4054 = vpop.f32.mrf.mxu0
        %v4055 = vadd.f32 %v3949, %v4054
        %4056 = vmatprep.mubr.f32.mxu0 0.0
        %v4057 = vand.u32 %v3718, 4294901760
        %v4058 = vsub.f32 %v3718, %v4057
        %4059 = vmatmul.mubr.f32.gmra.mxu0 %v4058
        %v4060 = vpop.f32.mrf.mxu0
        %v4061 = vadd.f32 %v3954, %v4060
        %v4062 = vpop.f32.mrf.mxu0
        %v4063 = vadd.f32 %v3956, %v4062
        %4064 = vmatprep.mubr.f32.mxu0 0.0
        %v4065 = vand.u32 %v3721, 4294901760
        %v4066 = vsub.f32 %v3721, %v4065
        %4067 = vmatmul.mubr.f32.gmra.mxu0 %v4066
        %v4068 = vpop.f32.mrf.mxu0
        %v4069 = vpop.f32.mrf.mxu0
        %4070 = vmatprep.mubr.f32.mxu0 0.0
        %v4071 = vand.u32 %v3724, 4294901760
        %v4072 = vsub.f32 %v3724, %v4071
        %4073 = vmatmul.mubr.f32.gmra.mxu0 %v4072
        %v4074 = vpop.f32.mrf.mxu0
        %v4075 = vpop.f32.mrf.mxu0
        %4076 = vdwg.mxu0
        %4077 = vmatprep.subr.mxu0 0.0
        %4078 = vmatpush1.msra.mxu0 0.0
        %4079 = vmatprep.subr.mxu0 0.0
        %4080 = vmatpush1.msra.mxu0 0.0
        %4081 = vmatprep.subr.mxu0 0.0
        %4082 = vmatpush1.msra.mxu0 0.0
        %4083 = vmatprep.subr.mxu0 0.0
        %4084 = vmatpush1.msra.mxu0 0.0
        %4085 = vmatprep.subr.mxu0 0.0
        %4086 = vmatpush1.msra.mxu0 0.0
        %4087 = vmatprep.subr.mxu0 0.0
        %4088 = vmatpush1.msra.mxu0 0.0
        %4089 = vmatprep.subr.mxu0 0.0
        %4090 = vmatpush1.msra.mxu0 0.0
        %4091 = vmatprep.subr.mxu0 0.0
        %4092 = vmatpush1.msra.mxu0 0.0
        %4093 = vmatprep.subr.mxu0 0.0
        %4094 = vmatpush1.msra.mxu0 0.0
        %4095 = vmatprep.subr.mxu0 0.0
        %4096 = vmatpush1.msra.mxu0 0.0
        %4097 = vmatprep.subr.mxu0 0.0
        %4098 = vmatpush1.msra.mxu0 0.0
        %4099 = vmatprep.subr.mxu0 0.0
        %4100 = vmatpush1.msra.mxu0 0.0
        %v4101 = vand.u32 %v3708, 4294901760
        %4102 = vmatprep.subr.mxu0 %v4101
        %v4103 = vand.u32 %v3707, 4294901760
        %4104 = vmatpush1.msra.mxu0 %v4103
        %v4105 = vand.u32 %v3706, 4294901760
        %4106 = vmatprep.subr.mxu0 %v4105
        %v4107 = vand.u32 %v3705, 4294901760
        %4108 = vmatpush1.msra.mxu0 %v4107
        %v4109 = vand.u32 %v3704, 4294901760
        %4110 = vmatprep.subr.mxu0 %v4109
        %v4111 = vand.u32 %v3703, 4294901760
        %4112 = vmatpush1.msra.mxu0 %v4111
        %v4113 = vand.u32 %v3702, 4294901760
        %4114 = vmatprep.subr.mxu0 %v4113
        %v4115 = vand.u32 %v3701, 4294901760
        %4116 = vmatpush1.msra.mxu0 %v4115
        %4117 = vmatprep.subr.mxu0 0.0
        %4118 = vmatpush2.msra.mxu0 0.0
        %4119 = vmatprep.subr.mxu0 0.0
        %4120 = vmatpush2.msra.mxu0 0.0
        %4121 = vmatprep.subr.mxu0 0.0
        %4122 = vmatpush2.msra.mxu0 0.0
        %4123 = vmatprep.subr.mxu0 0.0
        %4124 = vmatpush2.msra.mxu0 0.0
        %4125 = vmatprep.subr.mxu0 0.0
        %4126 = vmatpush2.msra.mxu0 0.0
        %4127 = vmatprep.subr.mxu0 0.0
        %4128 = vmatpush2.msra.mxu0 0.0
        %4129 = vmatprep.subr.mxu0 0.0
        %4130 = vmatpush2.msra.mxu0 0.0
        %4131 = vmatprep.subr.mxu0 0.0
        %4132 = vmatpush2.msra.mxu0 0.0
        %4133 = vmatprep.subr.mxu0 0.0
        %4134 = vmatpush2.msra.mxu0 0.0
        %4135 = vmatprep.subr.mxu0 0.0
        %4136 = vmatpush2.msra.mxu0 0.0
        %4137 = vmatprep.subr.mxu0 0.0
        %4138 = vmatpush2.msra.mxu0 0.0
        %4139 = vmatprep.subr.mxu0 0.0
        %4140 = vmatpush2.msra.mxu0 0.0
        %4141 = vmatprep.subr.mxu0 0.0
        %4142 = vmatpush2.msra.mxu0 0.0
        %4143 = vmatprep.subr.mxu0 0.0
        %4144 = vmatpush2.msra.mxu0 0.0
        %4145 = vmatprep.subr.mxu0 0.0
        %4146 = vmatpush2.msra.mxu0 0.0
        %4147 = vmatprep.subr.mxu0 0.0
        %4148 = vmatpush2.msra.mxu0 0.0
        %4149 = vmatprep.mubr.f32.mxu0 0.0
        %v4150 = vand.u32 %v3715, 4294901760
        %v4151 = vsub.f32 %v3715, %v4150
        %v4152 = vand.u32 %v4151, 4294901760
        %4153 = vmatmul.mubr.f32.gmra.mxu0 %v4152
        %v4154 = vpop.f32.mrf.mxu0
        %v4155 = vadd.f32 %v4053, %v4154
        %v4156 = vpop.f32.mrf.mxu0
        %v4157 = vadd.f32 %v4055, %v4156
        %4158 = vmatprep.mubr.f32.mxu0 0.0
        %v4159 = vand.u32 %v3718, 4294901760
        %v4160 = vsub.f32 %v3718, %v4159
        %v4161 = vand.u32 %v4160, 4294901760
        %4162 = vmatmul.mubr.f32.gmra.mxu0 %v4161
        %v4163 = vpop.f32.mrf.mxu0
        %v4164 = vadd.f32 %v4061, %v4163
        %v4165 = vpop.f32.mrf.mxu0
        %v4166 = vadd.f32 %v4063, %v4165
        %4167 = vmatprep.mubr.f32.mxu0 0.0
        %v4168 = vand.u32 %v3721, 4294901760
        %v4169 = vsub.f32 %v3721, %v4168
        %v4170 = vand.u32 %v4169, 4294901760
        %4171 = vmatmul.mubr.f32.gmra.mxu0 %v4170
        %v4172 = vpop.f32.mrf.mxu0
        %v4173 = vpop.f32.mrf.mxu0
        %4174 = vmatprep.mubr.f32.mxu0 0.0
        %v4175 = vand.u32 %v3724, 4294901760
        %v4176 = vsub.f32 %v3724, %v4175
        %v4177 = vand.u32 %v4176, 4294901760
        %4178 = vmatmul.mubr.f32.gmra.mxu0 %v4177
        %v4179 = vpop.f32.mrf.mxu0
        %v4180 = vpop.f32.mrf.mxu0
        %4181 = vdwg.mxu0
        %4182 = vmatprep.subr.mxu0 0.0
        %4183 = vmatpush1.msra.mxu0 0.0
        %4184 = vmatprep.subr.mxu0 0.0
        %4185 = vmatpush1.msra.mxu0 0.0
        %4186 = vmatprep.subr.mxu0 0.0
        %4187 = vmatpush1.msra.mxu0 0.0
        %4188 = vmatprep.subr.mxu0 0.0
        %4189 = vmatpush1.msra.mxu0 0.0
        %4190 = vmatprep.subr.mxu0 0.0
        %4191 = vmatpush1.msra.mxu0 0.0
        %4192 = vmatprep.subr.mxu0 0.0
        %4193 = vmatpush1.msra.mxu0 0.0
        %4194 = vmatprep.subr.mxu0 0.0
        %4195 = vmatpush1.msra.mxu0 0.0
        %4196 = vmatprep.subr.mxu0 0.0
        %4197 = vmatpush1.msra.mxu0 0.0
        %4198 = vmatprep.subr.mxu0 0.0
        %4199 = vmatpush1.msra.mxu0 0.0
        %4200 = vmatprep.subr.mxu0 0.0
        %4201 = vmatpush1.msra.mxu0 0.0
        %4202 = vmatprep.subr.mxu0 0.0
        %4203 = vmatpush1.msra.mxu0 0.0
        %4204 = vmatprep.subr.mxu0 0.0
        %4205 = vmatpush1.msra.mxu0 0.0
        %v4206 = vand.u32 %v3708, 4294901760
        %v4207 = vsub.f32 %v3708, %v4206
        %v4208 = vand.u32 %v4207, 4294901760
        %4209 = vmatprep.subr.mxu0 %v4208
        %v4210 = vand.u32 %v3707, 4294901760
        %v4211 = vsub.f32 %v3707, %v4210
        %v4212 = vand.u32 %v4211, 4294901760
        %4213 = vmatpush1.msra.mxu0 %v4212
        %v4214 = vand.u32 %v3706, 4294901760
        %v4215 = vsub.f32 %v3706, %v4214
        %v4216 = vand.u32 %v4215, 4294901760
        %4217 = vmatprep.subr.mxu0 %v4216
        %v4218 = vand.u32 %v3705, 4294901760
        %v4219 = vsub.f32 %v3705, %v4218
        %v4220 = vand.u32 %v4219, 4294901760
        %4221 = vmatpush1.msra.mxu0 %v4220
        %v4222 = vand.u32 %v3704, 4294901760
        %v4223 = vsub.f32 %v3704, %v4222
        %v4224 = vand.u32 %v4223, 4294901760
        %4225 = vmatprep.subr.mxu0 %v4224
        %v4226 = vand.u32 %v3703, 4294901760
        %v4227 = vsub.f32 %v3703, %v4226
        %v4228 = vand.u32 %v4227, 4294901760
        %4229 = vmatpush1.msra.mxu0 %v4228
        %v4230 = vand.u32 %v3702, 4294901760
        %v4231 = vsub.f32 %v3702, %v4230
        %v4232 = vand.u32 %v4231, 4294901760
        %4233 = vmatprep.subr.mxu0 %v4232
        %v4234 = vand.u32 %v3701, 4294901760
        %v4235 = vsub.f32 %v3701, %v4234
        %v4236 = vand.u32 %v4235, 4294901760
        %4237 = vmatpush1.msra.mxu0 %v4236
        %4238 = vmatprep.subr.mxu0 0.0
        %4239 = vmatpush2.msra.mxu0 0.0
        %4240 = vmatprep.subr.mxu0 0.0
        %4241 = vmatpush2.msra.mxu0 0.0
        %4242 = vmatprep.subr.mxu0 0.0
        %4243 = vmatpush2.msra.mxu0 0.0
        %4244 = vmatprep.subr.mxu0 0.0
        %4245 = vmatpush2.msra.mxu0 0.0
        %4246 = vmatprep.subr.mxu0 0.0
        %4247 = vmatpush2.msra.mxu0 0.0
        %4248 = vmatprep.subr.mxu0 0.0
        %4249 = vmatpush2.msra.mxu0 0.0
        %4250 = vmatprep.subr.mxu0 0.0
        %4251 = vmatpush2.msra.mxu0 0.0
        %4252 = vmatprep.subr.mxu0 0.0
        %4253 = vmatpush2.msra.mxu0 0.0
        %4254 = vmatprep.subr.mxu0 0.0
        %4255 = vmatpush2.msra.mxu0 0.0
        %4256 = vmatprep.subr.mxu0 0.0
        %4257 = vmatpush2.msra.mxu0 0.0
        %4258 = vmatprep.subr.mxu0 0.0
        %4259 = vmatpush2.msra.mxu0 0.0
        %4260 = vmatprep.subr.mxu0 0.0
        %4261 = vmatpush2.msra.mxu0 0.0
        %4262 = vmatprep.subr.mxu0 0.0
        %4263 = vmatpush2.msra.mxu0 0.0
        %4264 = vmatprep.subr.mxu0 0.0
        %4265 = vmatpush2.msra.mxu0 0.0
        %4266 = vmatprep.subr.mxu0 0.0
        %4267 = vmatpush2.msra.mxu0 0.0
        %4268 = vmatprep.subr.mxu0 0.0
        %4269 = vmatpush2.msra.mxu0 0.0
        %4270 = vmatprep.mubr.f32.mxu0 0.0
        %v4271 = vand.u32 %v3715, 4294901760
        %4272 = vmatmul.mubr.f32.gmra.mxu0 %v4271
        %v4273 = vpop.f32.mrf.mxu0
        %v4274 = vadd.f32 %v4155, %v4273
        %v4275 = vpop.f32.mrf.mxu0
        %v4276 = vadd.f32 %v4157, %v4275
        %4277 = vmatprep.mubr.f32.mxu0 0.0
        %v4278 = vand.u32 %v3718, 4294901760
        %4279 = vmatmul.mubr.f32.gmra.mxu0 %v4278
        %v4280 = vpop.f32.mrf.mxu0
        %v4281 = vadd.f32 %v4164, %v4280
        %v4282 = vpop.f32.mrf.mxu0
        %v4283 = vadd.f32 %v4166, %v4282
        %4284 = vmatprep.mubr.f32.mxu0 0.0
        %v4285 = vand.u32 %v3721, 4294901760
        %4286 = vmatmul.mubr.f32.gmra.mxu0 %v4285
        %v4287 = vpop.f32.mrf.mxu0
        %v4288 = vpop.f32.mrf.mxu0
        %4289 = vmatprep.mubr.f32.mxu0 0.0
        %v4290 = vand.u32 %v3724, 4294901760
        %4291 = vmatmul.mubr.f32.gmra.mxu0 %v4290
        %v4292 = vpop.f32.mrf.mxu0
        %v4293 = vpop.f32.mrf.mxu0
        %4294 = vdwg.mxu0
        %4295 = vmatprep.subr.mxu0 0.0
        %4296 = vmatpush1.msra.mxu0 0.0
        %4297 = vmatprep.subr.mxu0 0.0
        %4298 = vmatpush1.msra.mxu0 0.0
        %4299 = vmatprep.subr.mxu0 0.0
        %4300 = vmatpush1.msra.mxu0 0.0
        %4301 = vmatprep.subr.mxu0 0.0
        %4302 = vmatpush1.msra.mxu0 0.0
        %4303 = vmatprep.subr.mxu0 0.0
        %4304 = vmatpush1.msra.mxu0 0.0
        %4305 = vmatprep.subr.mxu0 0.0
        %4306 = vmatpush1.msra.mxu0 0.0
        %4307 = vmatprep.subr.mxu0 0.0
        %4308 = vmatpush1.msra.mxu0 0.0
        %4309 = vmatprep.subr.mxu0 0.0
        %4310 = vmatpush1.msra.mxu0 0.0
        %4311 = vmatprep.subr.mxu0 0.0
        %4312 = vmatpush1.msra.mxu0 0.0
        %4313 = vmatprep.subr.mxu0 0.0
        %4314 = vmatpush1.msra.mxu0 0.0
        %4315 = vmatprep.subr.mxu0 0.0
        %4316 = vmatpush1.msra.mxu0 0.0
        %4317 = vmatprep.subr.mxu0 0.0
        %4318 = vmatpush1.msra.mxu0 0.0
        %v4319 = vand.u32 %v3708, 4294901760
        %4320 = vmatprep.subr.mxu0 %v4319
        %v4321 = vand.u32 %v3707, 4294901760
        %4322 = vmatpush1.msra.mxu0 %v4321
        %v4323 = vand.u32 %v3706, 4294901760
        %4324 = vmatprep.subr.mxu0 %v4323
        %v4325 = vand.u32 %v3705, 4294901760
        %4326 = vmatpush1.msra.mxu0 %v4325
        %v4327 = vand.u32 %v3704, 4294901760
        %4328 = vmatprep.subr.mxu0 %v4327
        %v4329 = vand.u32 %v3703, 4294901760
        %4330 = vmatpush1.msra.mxu0 %v4329
        %v4331 = vand.u32 %v3702, 4294901760
        %4332 = vmatprep.subr.mxu0 %v4331
        %v4333 = vand.u32 %v3701, 4294901760
        %4334 = vmatpush1.msra.mxu0 %v4333
        %4335 = vmatprep.subr.mxu0 0.0
        %4336 = vmatpush2.msra.mxu0 0.0
        %4337 = vmatprep.subr.mxu0 0.0
        %4338 = vmatpush2.msra.mxu0 0.0
        %4339 = vmatprep.subr.mxu0 0.0
        %4340 = vmatpush2.msra.mxu0 0.0
        %4341 = vmatprep.subr.mxu0 0.0
        %4342 = vmatpush2.msra.mxu0 0.0
        %4343 = vmatprep.subr.mxu0 0.0
        %4344 = vmatpush2.msra.mxu0 0.0
        %4345 = vmatprep.subr.mxu0 0.0
        %4346 = vmatpush2.msra.mxu0 0.0
        %4347 = vmatprep.subr.mxu0 0.0
        %4348 = vmatpush2.msra.mxu0 0.0
        %4349 = vmatprep.subr.mxu0 0.0
        %4350 = vmatpush2.msra.mxu0 0.0
        %4351 = vmatprep.subr.mxu0 0.0
        %4352 = vmatpush2.msra.mxu0 0.0
        %4353 = vmatprep.subr.mxu0 0.0
        %4354 = vmatpush2.msra.mxu0 0.0
        %4355 = vmatprep.subr.mxu0 0.0
        %4356 = vmatpush2.msra.mxu0 0.0
        %4357 = vmatprep.subr.mxu0 0.0
        %4358 = vmatpush2.msra.mxu0 0.0
        %4359 = vmatprep.subr.mxu0 0.0
        %4360 = vmatpush2.msra.mxu0 0.0
        %4361 = vmatprep.subr.mxu0 0.0
        %4362 = vmatpush2.msra.mxu0 0.0
        %4363 = vmatprep.subr.mxu0 0.0
        %4364 = vmatpush2.msra.mxu0 0.0
        %4365 = vmatprep.subr.mxu0 0.0
        %4366 = vmatpush2.msra.mxu0 0.0
        %4367 = vmatprep.mubr.f32.mxu0 0.0
        %v4368 = vand.u32 %v3715, 4294901760
        %4369 = vmatmul.mubr.f32.gmra.mxu0 %v4368
        %v4370 = vpop.f32.mrf.mxu0
        %v4371 = vadd.f32 %v4274, %v4370
        %v4372 = vpop.f32.mrf.mxu0
        %v4373 = vadd.f32 %v4276, %v4372
        %4374 = vmatprep.mubr.f32.mxu0 0.0
        %v4375 = vand.u32 %v3718, 4294901760
        %4376 = vmatmul.mubr.f32.gmra.mxu0 %v4375
        %v4377 = vpop.f32.mrf.mxu0
        %v4378 = vadd.f32 %v4281, %v4377
        %v4379 = vpop.f32.mrf.mxu0
        %v4380 = vadd.f32 %v4283, %v4379
        %4381 = vmatprep.mubr.f32.mxu0 0.0
        %v4382 = vand.u32 %v3721, 4294901760
        %4383 = vmatmul.mubr.f32.gmra.mxu0 %v4382
        %v4384 = vpop.f32.mrf.mxu0
        %v4385 = vpop.f32.mrf.mxu0
        %4386 = vmatprep.mubr.f32.mxu0 0.0
        %v4387 = vand.u32 %v3724, 4294901760
        %4388 = vmatmul.mubr.f32.gmra.mxu0 %v4387
        %v4389 = vpop.f32.mrf.mxu0
        %v4390 = vpop.f32.mrf.mxu0
        %4391 = vdwg.mxu0
        %v4392 = vmax.f32 %v4371, 0.0
        %v4393 = vmax.f32 %v4373, 0.0
        %v4394 = vmax.f32 %v4378, 0.0
        %v4395 = vmax.f32 %v4380, 0.0
        %4396 = vst [vmem:[%s178] sm:$0xff] %v4392
        %4397 = vst [vmem:[%s178 + $0x8] sm:$0xff] %v4393
        %4398 = vst [vmem:[%s178 + $0x10] sm:$0xff] %v4394
        %4399 = vst [vmem:[%s178 + $0x18] sm:$0xff] %v4395
        %s4400 = sand.u32 %s69, 1
        %s4401 = sand.u32 %s69, 1
        %s4402 = smul.addr %s4401, 32
        %s4403 = scalar_lea.vmem [#allocation5], %s4402
        // Predicated region
        $region56: #{dummy_model_forward.1} parent=46 // pred_check
          %p4404 = pneg %p79
        $region57: #{dummy_model_forward.1} parent=46 // pred_check_branch
          %4406 = sbr.rel (%p4404) target = $region59
        $region58: #{dummy_model_forward.1} parent=46 // pred_region
          %s4407 = smul.u32 2, %s14
          %s4408 = smul.addr %s4407, 8
          %s4409 = scalar_lea.vmem %s2, %s4408
          // Predicated region
          $region60: #{dummy_model_forward.1} parent=58 // pred_check
            _
          $region61: #{dummy_model_forward.1} parent=58 // pred_check_branch
            %4411 = sbr.rel (0) target = $region63
          $region62: #{dummy_model_forward.1} parent=58 // pred_region
            // Predicated region
            $region64: #{dummy_model_forward.1} parent=62 // pred_check
              _
            $region65: #{dummy_model_forward.1} parent=62 // pred_check_branch
              %4413 = sbr.rel (0) target = $region67
            $region66: #{dummy_model_forward.1} parent=62 // pred_region
              loop: start=0, step=1, limit=1
              $region68: #{dummy_model_forward.1} parent=66 // loop_pre_header
                _
              $region69: #{dummy_model_forward.1} parent=66 // loop_header
                %s4415 = sphi 0, %s4419
                %p4416 = scmp.ge.s32.totalorder %s4415, 1
                %s4420 = sphi %s4403, %s4403
                %s4421 = sphi %s4409, %s4409
              $region70: #{dummy_model_forward.1} parent=66 // loop_header_branch
                %4418 = sbr.rel (%p4416) target = $region74
              $region71: #{dummy_model_forward.1} parent=66 // loop_body
                %v4422 = vld [vmem:[%s4420] sm:$0xff]
                %4423 = vst [vmem:[%s4421] sm:$0xff] %v4422
                %v4424 = vld [vmem:[%s4420 + $0x8] sm:$0xff]
                %4425 = vst [vmem:[%s4421 + $0x8] sm:$0xff] %v4424
                %v4426 = vld [vmem:[%s4420 + $0x10] sm:$0xff]
                %4427 = vst [vmem:[%s4421 + $0x20] sm:$0xff] %v4426
                %v4428 = vld [vmem:[%s4420 + $0x18] sm:$0xff]
                %4429 = vst [vmem:[%s4421 + $0x28] sm:$0xff] %v4428
              $region72: #{dummy_model_forward.1} parent=66 // loop_footer
                %s4419 = sadd.s32 1, %s4415
              $region73: #{dummy_model_forward.1} parent=66 // loop_footer_branch
                %4414 = sbr.rel target = $region69
              $region74: #{dummy_model_forward.1} parent=66 // loop_exit
                _
            $region67: #{dummy_model_forward.1} parent=62 // pred_fallthru
              _
            // Predicated region
            $region75: #{dummy_model_forward.1} parent=62 // pred_check
              _
            $region76: #{dummy_model_forward.1} parent=62 // pred_check_branch
              %4431 = sbr.rel target = $region78
            $region77: #{dummy_model_forward.1} parent=62 // pred_region
              _
            $region78: #{dummy_model_forward.1} parent=62 // pred_fallthru
              _
          $region63: #{dummy_model_forward.1} parent=58 // pred_fallthru
            _
          %4432 = vnop
        $region59: #{dummy_model_forward.1} parent=46 // pred_fallthru
          _
      $region47: #{dummy_model_forward.1} parent=5 // pred_fallthru
        _
      %p4433 = scmp.le.s32.totalorder 2, %s9
      // Predicated region
      $region79: #{dummy_model_forward.1} parent=5 // pred_check
        %p4434 = pneg %p4433
      $region80: #{dummy_model_forward.1} parent=5 // pred_check_branch
        %4436 = sbr.rel (%p4434) target = $region82
      $region81: #{dummy_model_forward.1} parent=5 // pred_region
        %s4437 = ssub.s32 %s9, 2
        // Predicated region
        $region83: #{dummy_model_forward.1} parent=81 // pred_check
          %p4438 = pneg %p85
        $region84: #{dummy_model_forward.1} parent=81 // pred_check_branch
          %4440 = sbr.rel (%p4438) target = $region86
        $region85: #{dummy_model_forward.1} parent=81 // pred_region
          %s4441 = sand.u32 %s70, 1
          %s4442 = sand.u32 %s70, 1
          %s4443 = smul.addr %s4442, 32
          %s4444 = scalar_lea.vmem [#allocation5], %s4443
        $region86: #{dummy_model_forward.1} parent=81 // pred_fallthru
          _
      $region82: #{dummy_model_forward.1} parent=5 // pred_fallthru
        _
    $region6: #{dummy_model_forward.1} parent=1 // loop_footer
      %s13 = sadd.s32 1, %s9
    $region7: #{dummy_model_forward.1} parent=1 // loop_footer_branch
      %8 = sbr.rel target = $region3
    $region8: #{dummy_model_forward.1} parent=1 // loop_exit
      _
    %4445 = vsyncpa [#allocation4], 1
    %s4446 = scalar_lea.sflag [#allocation4], 1
    %4447 = vsyncpa %s4446, 1

</llo_original>
